<compile_context>
chip_gen: v5e
topology: v5e:2x2
jax: 0.10.0
libtpu: 0.0.40
codegen_flags: <defaults>
</compile_context>

<pallas_src>
import jax
import jax.numpy as jnp
import numpy as np
from jax.experimental import pallas as pl
from jax.experimental.pallas import tpu as pltpu

N_NODES = 12      # fixed by the reference module (attention is 12x12, nodevec1 is 12x10)
LANE_SEG = 128    # lane stride of one packed conv-weight segment


def _xavier(key, shape, fan_in, fan_out):
    a = (6.0 / (fan_in + fan_out)) ** 0.5
    return jax.random.uniform(key, shape, jnp.float32, -a, a)


def _full_spec(shape):
    nd = len(shape)
    return pl.BlockSpec(shape, lambda i: (0,) * nd)


# ---------------------------------------------------------------------------
# Fused imputation kernel: 12 x (full TCN + masked merge + carry row update)
# in a single pallas_call, batch folded into the matmul M dimension.
# ---------------------------------------------------------------------------
def make_imputation_forward(B, T, F, num_channels, K):
    # T = TCN time length after the raw .view (== N_NODES); F = nfeat = in/out channels.
    dils = [2 ** i for i in range(len(num_channels))]
    blocks = []
    c_prev = F
    for i, c_out in enumerate(num_channels):
        blocks.append((c_prev, c_out, dils[i]))
        c_prev = c_out
    assert blocks[-1][1] == F, "TCN output channels must equal nfeat"

    # per-conv metadata: two convs per block, one packed lane segment / bias row each.
    convs = []
    for bi, (ci, co, d) in enumerate(blocks):
        convs.append(dict(ci=ci, co=co, d=d, ds=(ci != co),
                          off=(2 * bi) * LANE_SEG, brow=2 * bi))
        convs.append(dict(ci=co, co=co, d=d, ds=False,
                          off=(2 * bi + 1) * LANE_SEG, brow=2 * bi + 1))
    for cv in convs:
        assert cv['co'] * (2 if cv['ds'] else 1) <= LANE_SEG
        assert K * cv['ci'] <= LANE_SEG

    # distinct delay amounts needed by the rolled taps
    shifts = sorted({(K - 1 - k) * cv['d'] for cv in convs for k in range(K - 1)})
    col = {s: j for j, s in enumerate(shifts)}
    R = B * T

    def kernel(x_ref, m_ref, w_ref, b_ref, tm_ref, um_ref, o_ref):
        x = x_ref[...]                 # [R, F] time-major, batch folded into rows
        m = m_ref[...]
        xm = x * m                     # masked input == initial mid carry
        om = 1.0 - m

        def conv(h, cv):
            # causal dilated conv as ONE matmul: [R, K*ci] @ [K*ci, co(+co_ds)]
            ci, co = cv['ci'], cv['co']
            width = co * (2 if cv['ds'] else 1)
            taps = []
            for k in range(K - 1):
                s = (K - 1 - k) * cv['d']
                mask_col = tm_ref[:, col[s]:col[s] + 1]        # [R, 1] zero-pad/batch mask
                taps.append(pltpu.roll(h, shift=s, axis=0) * mask_col)
            stacked = jnp.concatenate(taps + [h], axis=-1) if taps else h
            w = w_ref[0:K * ci, cv['off']:cv['off'] + width]
            b = b_ref[cv['brow']:cv['brow'] + 1, 0:width]
            return jnp.dot(stacked, w, preferred_element_type=jnp.float32) + b

        def tcn(h):
            for bi, (ci, co, d) in enumerate(blocks):
                full1 = conv(h, convs[2 * bi])                 # conv1 + folded 1x1 downsample cols
                y = jnp.maximum(full1[:, :co], 0.0)            # chomp -> relu (dropout = identity)
                res = full1[:, co:] if ci != co else h         # residual branch
                y = jnp.maximum(conv(y, convs[2 * bi + 1]), 0.0)
                h = jnp.maximum(y + res, 0.0)
            return h

        mid = xm                                               # carry stays in vregs
        for i in range(T):                                     # imputation loop (unrolled)
            merged = xm + tcn(mid) * om                        # x*mask + tcn*(1-mask), flat layout
            u = um_ref[i]                                      # row-i-of-[N,F]-view update mask
            mid = jnp.where(u > 0.5, merged, mid)
        o_ref[...] = mid                                       # == imputation_x

    def forward(x_tm, m_tm, wpack, bpack, tmask, umask):
        args = (x_tm, m_tm, wpack, bpack, tmask, umask)
        return pl.pallas_call(
            kernel,
            out_shape=jax.ShapeDtypeStruct((R, F), jnp.float32),
            grid_spec=pltpu.PrefetchScalarGridSpec(
                num_scalar_prefetch=0,
                grid=(1,),
                in_specs=[_full_spec(a.shape) for a in args],
                out_specs=pl.BlockSpec((R, F), lambda i: (0, 0)),
            ),
            compiler_params=pltpu.CompilerParams(
                dimension_semantics=("arbitrary",)),
        )(*args)

    return blocks, convs, shifts, forward


def init_tcn_packed(key, convs, K):
    """Pack all stacked conv weights / biases into one weight slab + one bias slab."""
    n = len(convs)
    max_rows = ((max(K * cv['ci'] for cv in convs) + 7) // 8) * 8
    wpack = np.zeros((max_rows, LANE_SEG * n), np.float32)
    bpack = np.zeros((max(8, ((n + 7) // 8) * 8), LANE_SEG), np.float32)
    for cv in convs:
        ci, co, off = cv['ci'], cv['co'], cv['off']
        key, kw, kb, kdw, kdb = jax.random.split(key, 5)
        # PyTorch Conv1d weight layout [C_out, C_in, K]; per-tap transposed so the
        # kernel computes (lane-stacked taps) @ W directly.
        w = np.asarray(_xavier(kw, (co, ci, K), ci * K, co * K))
        bnd = 1.0 / (ci * K) ** 0.5                       # torch Conv1d default bias init
        bias = np.asarray(jax.random.uniform(kb, (co,), jnp.float32, -bnd, bnd))
        for k in range(K):                                # tap k has delay (K-1-k)*dilation
            wpack[k * ci:(k + 1) * ci, off:off + co] = w[:, :, k].T
        bpack[cv['brow'], 0:co] = bias
        if cv['ds']:                                      # fold 1x1 downsample into conv1 cols
            wd = np.asarray(_xavier(kdw, (co, ci), ci, co))
            dbnd = 1.0 / ci ** 0.5
            dbias = np.asarray(jax.random.uniform(kdb, (co,), jnp.float32, -dbnd, dbnd))
            wpack[(K - 1) * ci:K * ci, off + co:off + 2 * co] = wd.T   # undelayed-tap rows only
            bpack[cv['brow'], co:2 * co] = dbias
    return jnp.asarray(wpack), jnp.asarray(bpack)


def build_aux_masks(B, T, F, shifts):
    """Host-precomputed masks: per-shift causal/batch-boundary masks + per-step row-update masks."""
    R = B * T
    t = np.arange(R) % T
    sh = np.asarray(shifts if shifts else [0])
    tmask = (t[:, None] >= sh[None, :]).astype(np.float32)                 # [R, n_shift]
    flat_p = np.arange(F)[None, :] * T + t[:, None]                        # flat idx of (t, c)
    umask = np.stack([((flat_p >= i * F) & (flat_p < (i + 1) * F)).astype(np.float32)
                      for i in range(T)], axis=0)                          # [T, R, F]
    return jnp.asarray(tmask), jnp.asarray(umask)


# ---------------------------------------------------------------------------
# GCN: fused 4-layer graph-convolution stack + final masked merge (batch folded
# into M via block-diagonal fused adjacency).
# ---------------------------------------------------------------------------
def make_gcn_forward(B, N, nlayers, P):
    R = B * N

    def kernel(h_ref, x_ref, m_ref, a_ref, w_ref, b_ref, o_ref):
        h = h_ref[...]                                     # [R, P]
        for l in range(nlayers):
            # GraphConvolution: (att*adj) @ (H @ W) + b, then F.relu (incl. last layer,
            # matching the reference GCN.forward; dropout = identity).
            support = jnp.dot(h, w_ref[l], preferred_element_type=jnp.float32)
            out = jnp.dot(a_ref[l], support, preferred_element_type=jnp.float32) \
                + b_ref[l:l + 1, :]
            h = jnp.maximum(out, 0.0)
        m = m_ref[...]
        o_ref[...] = x_ref[...] * m + h * (1.0 - m)        # final masked merge fused in

    def forward(imput, x_nf, m_nf, a_pack, gw_pack, gb_pack):
        args = (imput, x_nf, m_nf, a_pack, gw_pack, gb_pack)
        return pl.pallas_call(
            kernel,
            out_shape=jax.ShapeDtypeStruct((R, P), jnp.float32),
            grid_spec=pltpu.PrefetchScalarGridSpec(
                num_scalar_prefetch=0,
                grid=(1,),
                in_specs=[_full_spec(a.shape) for a in args],
                out_specs=pl.BlockSpec((R, P), lambda i: (0, 0)),
            ),
            compiler_params=pltpu.CompilerParams(
                dimension_semantics=("arbitrary",)),
        )(*args)

    return forward


def init_gcn_params(key, N, dims, P):
    nl = len(dims)
    gw = np.zeros((nl, P, P), np.float32)     # zero-padded to uniform width -> no in-kernel slicing
    gb = np.zeros((nl, P), np.float32)        # GraphConvolution bias: zeros (reference init)
    atts = []
    for l, (fi, fo) in enumerate(dims):
        key, kw, ka = jax.random.split(key, 3)
        gw[l, :fi, :fo] = np.asarray(_xavier(kw, (fi, fo), fi, fo))
        atts.append(_xavier(ka, (N, N), N, N))
    key, k1, k2 = jax.random.split(key, 3)
    nodevec1 = jax.random.normal(k1, (N, 10), jnp.float32)
    nodevec2 = jax.random.normal(k2, (10, N), jnp.float32)
    return jnp.asarray(gw), jnp.asarray(gb), atts, nodevec1, nodevec2


# ---------------------------------------------------------------------------
# GCNTCN forward
# ---------------------------------------------------------------------------
def make_gcntcn(B, N, nfeat, nhid1, nhid2, nhid3, nclass,
                tcn_num_channels, tcn_kernel_size, key):
    assert tcn_num_channels[-1] == nfeat, "TCN output channels must equal nfeat"
    assert nclass == nfeat, "GCN nclass must equal nfeat for the final masked merge"
    T = N                       # TCN time length after the raw .view equals the node axis
    P = nfeat                   # uniform padded GCN width
    dims = [(nfeat, nhid1), (nhid1, nhid2), (nhid2, nhid3), (nhid3, nclass)]
    assert max(max(d) for d in dims) <= P

    blocks, convs, shifts, imput_fwd = make_imputation_forward(
        B, T, nfeat, tcn_num_channels, tcn_kernel_size)
    gcn_fwd = make_gcn_forward(B, N, len(dims), P)

    k_tcn, k_gcn = jax.random.split(key)
    wpack, bpack = init_tcn_packed(k_tcn, convs, tcn_kernel_size)
    tmask, umask = build_aux_masks(B, T, nfeat, shifts)
    gw_pack, gb_pack, gcn_att, nodevec1, nodevec2 = init_gcn_params(k_gcn, N, dims, P)

    def forward(x, x_mask, adj):
        # x, x_mask: [B, N, nfeat]; adj: [N, N]
        # Raw row-major .view [B,N,F] -> [B,F,N] (reinterpretation, as in the reference),
        # then one transpose to the kernel's batch-folded time-major [B*T, C] layout.
        x_tm = jnp.transpose(jnp.reshape(x, (B, nfeat, N)), (0, 2, 1)).reshape(B * T, nfeat)
        m_tm = jnp.transpose(jnp.reshape(x_mask, (B, nfeat, N)), (0, 2, 1)).reshape(B * T, nfeat)

        mid_tm = imput_fwd(x_tm, m_tm, wpack, bpack, tmask, umask)    # [B*T, F] time-major
        # time-major -> raw flat buffer -> [N, F] view (batch-folded) for the GCN
        imput = jnp.transpose(mid_tm.reshape(B, T, nfeat), (0, 2, 1)).reshape(B * N, nfeat)

        # adaptive adjacency (12x10 @ 10x12) + per-layer block-diag (attention * adj),
        # hoisted out of the kernel (tiny, batch-invariant work).
        adp = jax.nn.softmax(jax.nn.relu(nodevec1 @ nodevec2), axis=1)
        adj_eff = adj.astype(jnp.float32) + adp
        eye_b = jnp.eye(B, dtype=jnp.float32)
        a_pack = jnp.stack([jnp.kron(eye_b, att * adj_eff) for att in gcn_att], axis=0)

        out = gcn_fwd(imput, x.reshape(B * N, nfeat), x_mask.reshape(B * N, nfeat),
                      a_pack, gw_pack, gb_pack)                        # [B*N, nclass]
        return out.reshape(B, N, nclass)

    return forward


if __name__ == "__main__":
    B = 2
    N = N_NODES                 # 12, fixed by the module
    nfeat = 40                  # gcn_nfeat == gcn_class == tcn_num_inputs == tcn channels[-1]
    nhid1, nhid2, nhid3 = 32, 32, 32
    nclass = 40
    tcn_num_channels = [48, 40]
    tcn_kernel_size = 2

    key = jax.random.PRNGKey(0)
    kx, km, ka, kp = jax.random.split(key, 4)
    x = jax.random.normal(kx, (B, N, nfeat), jnp.float32)
    x_mask = (jax.random.uniform(km, (B, N, nfeat)) > 0.3).astype(jnp.float32)
    adj = jax.random.uniform(ka, (N, N), jnp.float32)

    fwd = make_gcntcn(B, N, nfeat, nhid1, nhid2, nhid3, nclass,
                      tcn_num_channels, tcn_kernel_size, kp)
    out = jax.jit(fwd)(x, x_mask, adj)
    out = jax.block_until_ready(out)

    assert out.shape == (B, N, nclass), out.shape
    assert out.dtype == jnp.float32
    assert bool(jnp.all(jnp.isfinite(out)))
    print("KERNEL_OK")
</pallas_src>

<mosaic_0001>
module attributes {stable_mosaic.version = 11 : i64} {
  func.func @kernel(%arg0: i32, %arg1: memref<24x40xf32, #tpu.memory_space<vmem>>, %arg2: memref<24x40xf32, #tpu.memory_space<vmem>>, %arg3: memref<24x40xf32, #tpu.memory_space<vmem>>, %arg4: memref<4x24x24xf32, #tpu.memory_space<vmem>>, %arg5: memref<4x40x40xf32, #tpu.memory_space<vmem>>, %arg6: memref<4x40xf32, #tpu.memory_space<vmem>>, %arg7: memref<24x40xf32, #tpu.memory_space<vmem>>) attributes {dimension_semantics = [#tpu.dimension_semantics<arbitrary>], iteration_bounds = array<i64: 1>, scalar_prefetch = 0 : i64, scratch_operands = 0 : i64, tpu.core_type = #tpu.core_type<tc>, window_params = [{pipeline_mode = #tpu.pipeline_mode<synchronous>, transform_indices = @transform_0, window_bounds = array<i64: 24, 40>}, {pipeline_mode = #tpu.pipeline_mode<synchronous>, transform_indices = @transform_1, window_bounds = array<i64: 24, 40>}, {pipeline_mode = #tpu.pipeline_mode<synchronous>, transform_indices = @transform_2, window_bounds = array<i64: 24, 40>}, {pipeline_mode = #tpu.pipeline_mode<synchronous>, transform_indices = @transform_3, window_bounds = array<i64: 4, 24, 24>}, {pipeline_mode = #tpu.pipeline_mode<synchronous>, transform_indices = @transform_4, window_bounds = array<i64: 4, 40, 40>}, {pipeline_mode = #tpu.pipeline_mode<synchronous>, transform_indices = @transform_5, window_bounds = array<i64: 4, 40>}, {pipeline_mode = #tpu.pipeline_mode<synchronous>, transform_indices = @transform_6, window_bounds = array<i64: 24, 40>}]} {
    %c0 = arith.constant 0 : index
    %c0_0 = arith.constant 0 : index
    %0 = vector.load %arg1[%c0, %c0_0] : memref<24x40xf32, #tpu.memory_space<vmem>>, vector<24x40xf32>
    %c0_1 = arith.constant 0 : index
    %c0_2 = arith.constant 0 : index
    %c0_3 = arith.constant 0 : index
    %1 = vector.load %arg5[%c0_1, %c0_2, %c0_3] : memref<4x40x40xf32, #tpu.memory_space<vmem>>, vector<1x40x40xf32>
    %2 = vector.shape_cast %1 : vector<1x40x40xf32> to vector<40x40xf32>
    %cst = arith.constant dense<0.000000e+00> : vector<24x40xf32>
    %3 = tpu.matmul %0, %2, %cst {dimension_numbers = #tpu.dot_dimension_numbers<[1], [0], [0], [1], [0, 0, 1, 1], [], []>} : vector<24x40xf32>, vector<40x40xf32>, vector<24x40xf32> -> vector<24x40xf32>
    %c0_4 = arith.constant 0 : index
    %c0_5 = arith.constant 0 : index
    %c0_6 = arith.constant 0 : index
    %4 = vector.load %arg4[%c0_4, %c0_5, %c0_6] : memref<4x24x24xf32, #tpu.memory_space<vmem>>, vector<1x24x24xf32>
    %5 = vector.shape_cast %4 : vector<1x24x24xf32> to vector<24x24xf32>
    %cst_7 = arith.constant dense<0.000000e+00> : vector<24x40xf32>
    %6 = tpu.matmul %5, %3, %cst_7 {dimension_numbers = #tpu.dot_dimension_numbers<[1], [0], [0], [1], [0, 0, 1, 1], [], []>} : vector<24x24xf32>, vector<24x40xf32>, vector<24x40xf32> -> vector<24x40xf32>
    %c0_8 = arith.constant 0 : index
    %c0_9 = arith.constant 0 : index
    %7 = vector.load %arg6[%c0_8, %c0_9] : memref<4x40xf32, #tpu.memory_space<vmem>>, vector<1x40xf32>
    %8 = vector.broadcast %7 : vector<1x40xf32> to vector<24x40xf32>
    %9 = arith.addf %6, %8 : vector<24x40xf32>
    %cst_10 = arith.constant 0.000000e+00 : f32
    %10 = vector.broadcast %cst_10 : f32 to vector<24x40xf32>
    %11 = arith.maximumf %9, %10 : vector<24x40xf32>
    %c1 = arith.constant 1 : index
    %c0_11 = arith.constant 0 : index
    %c0_12 = arith.constant 0 : index
    %12 = vector.load %arg5[%c1, %c0_11, %c0_12] : memref<4x40x40xf32, #tpu.memory_space<vmem>>, vector<1x40x40xf32>
    %13 = vector.shape_cast %12 : vector<1x40x40xf32> to vector<40x40xf32>
    %cst_13 = arith.constant dense<0.000000e+00> : vector<24x40xf32>
    %14 = tpu.matmul %11, %13, %cst_13 {dimension_numbers = #tpu.dot_dimension_numbers<[1], [0], [0], [1], [0, 0, 1, 1], [], []>} : vector<24x40xf32>, vector<40x40xf32>, vector<24x40xf32> -> vector<24x40xf32>
    %c1_14 = arith.constant 1 : index
    %c0_15 = arith.constant 0 : index
    %c0_16 = arith.constant 0 : index
    %15 = vector.load %arg4[%c1_14, %c0_15, %c0_16] : memref<4x24x24xf32, #tpu.memory_space<vmem>>, vector<1x24x24xf32>
    %16 = vector.shape_cast %15 : vector<1x24x24xf32> to vector<24x24xf32>
    %cst_17 = arith.constant dense<0.000000e+00> : vector<24x40xf32>
    %17 = tpu.matmul %16, %14, %cst_17 {dimension_numbers = #tpu.dot_dimension_numbers<[1], [0], [0], [1], [0, 0, 1, 1], [], []>} : vector<24x24xf32>, vector<24x40xf32>, vector<24x40xf32> -> vector<24x40xf32>
    %c1_18 = arith.constant 1 : index
    %c0_19 = arith.constant 0 : index
    %18 = vector.load %arg6[%c1_18, %c0_19] : memref<4x40xf32, #tpu.memory_space<vmem>>, vector<1x40xf32>
    %19 = vector.broadcast %18 : vector<1x40xf32> to vector<24x40xf32>
    %20 = arith.addf %17, %19 : vector<24x40xf32>
    %cst_20 = arith.constant 0.000000e+00 : f32
    %21 = vector.broadcast %cst_20 : f32 to vector<24x40xf32>
    %22 = arith.maximumf %20, %21 : vector<24x40xf32>
    %c2 = arith.constant 2 : index
    %c0_21 = arith.constant 0 : index
    %c0_22 = arith.constant 0 : index
    %23 = vector.load %arg5[%c2, %c0_21, %c0_22] : memref<4x40x40xf32, #tpu.memory_space<vmem>>, vector<1x40x40xf32>
    %24 = vector.shape_cast %23 : vector<1x40x40xf32> to vector<40x40xf32>
    %cst_23 = arith.constant dense<0.000000e+00> : vector<24x40xf32>
    %25 = tpu.matmul %22, %24, %cst_23 {dimension_numbers = #tpu.dot_dimension_numbers<[1], [0], [0], [1], [0, 0, 1, 1], [], []>} : vector<24x40xf32>, vector<40x40xf32>, vector<24x40xf32> -> vector<24x40xf32>
    %c2_24 = arith.constant 2 : index
    %c0_25 = arith.constant 0 : index
    %c0_26 = arith.constant 0 : index
    %26 = vector.load %arg4[%c2_24, %c0_25, %c0_26] : memref<4x24x24xf32, #tpu.memory_space<vmem>>, vector<1x24x24xf32>
    %27 = vector.shape_cast %26 : vector<1x24x24xf32> to vector<24x24xf32>
    %cst_27 = arith.constant dense<0.000000e+00> : vector<24x40xf32>
    %28 = tpu.matmul %27, %25, %cst_27 {dimension_numbers = #tpu.dot_dimension_numbers<[1], [0], [0], [1], [0, 0, 1, 1], [], []>} : vector<24x24xf32>, vector<24x40xf32>, vector<24x40xf32> -> vector<24x40xf32>
    %c2_28 = arith.constant 2 : index
    %c0_29 = arith.constant 0 : index
    %29 = vector.load %arg6[%c2_28, %c0_29] : memref<4x40xf32, #tpu.memory_space<vmem>>, vector<1x40xf32>
    %30 = vector.broadcast %29 : vector<1x40xf32> to vector<24x40xf32>
    %31 = arith.addf %28, %30 : vector<24x40xf32>
    %cst_30 = arith.constant 0.000000e+00 : f32
    %32 = vector.broadcast %cst_30 : f32 to vector<24x40xf32>
    %33 = arith.maximumf %31, %32 : vector<24x40xf32>
    %c3 = arith.constant 3 : index
    %c0_31 = arith.constant 0 : index
    %c0_32 = arith.constant 0 : index
    %34 = vector.load %arg5[%c3, %c0_31, %c0_32] : memref<4x40x40xf32, #tpu.memory_space<vmem>>, vector<1x40x40xf32>
    %35 = vector.shape_cast %34 : vector<1x40x40xf32> to vector<40x40xf32>
    %cst_33 = arith.constant dense<0.000000e+00> : vector<24x40xf32>
    %36 = tpu.matmul %33, %35, %cst_33 {dimension_numbers = #tpu.dot_dimension_numbers<[1], [0], [0], [1], [0, 0, 1, 1], [], []>} : vector<24x40xf32>, vector<40x40xf32>, vector<24x40xf32> -> vector<24x40xf32>
    %c3_34 = arith.constant 3 : index
    %c0_35 = arith.constant 0 : index
    %c0_36 = arith.constant 0 : index
    %37 = vector.load %arg4[%c3_34, %c0_35, %c0_36] : memref<4x24x24xf32, #tpu.memory_space<vmem>>, vector<1x24x24xf32>
    %38 = vector.shape_cast %37 : vector<1x24x24xf32> to vector<24x24xf32>
    %cst_37 = arith.constant dense<0.000000e+00> : vector<24x40xf32>
    %39 = tpu.matmul %38, %36, %cst_37 {dimension_numbers = #tpu.dot_dimension_numbers<[1], [0], [0], [1], [0, 0, 1, 1], [], []>} : vector<24x24xf32>, vector<24x40xf32>, vector<24x40xf32> -> vector<24x40xf32>
    %c3_38 = arith.constant 3 : index
    %c0_39 = arith.constant 0 : index
    %40 = vector.load %arg6[%c3_38, %c0_39] : memref<4x40xf32, #tpu.memory_space<vmem>>, vector<1x40xf32>
    %41 = vector.broadcast %40 : vector<1x40xf32> to vector<24x40xf32>
    %42 = arith.addf %39, %41 : vector<24x40xf32>
    %cst_40 = arith.constant 0.000000e+00 : f32
    %43 = vector.broadcast %cst_40 : f32 to vector<24x40xf32>
    %44 = arith.maximumf %42, %43 : vector<24x40xf32>
    %c0_41 = arith.constant 0 : index
    %c0_42 = arith.constant 0 : index
    %45 = vector.load %arg3[%c0_41, %c0_42] : memref<24x40xf32, #tpu.memory_space<vmem>>, vector<24x40xf32>
    %c0_43 = arith.constant 0 : index
    %c0_44 = arith.constant 0 : index
    %46 = vector.load %arg2[%c0_43, %c0_44] : memref<24x40xf32, #tpu.memory_space<vmem>>, vector<24x40xf32>
    %47 = arith.mulf %46, %45 : vector<24x40xf32>
    %cst_45 = arith.constant 1.000000e+00 : f32
    %48 = vector.broadcast %cst_45 : f32 to vector<24x40xf32>
    %49 = arith.subf %48, %45 : vector<24x40xf32>
    %50 = arith.mulf %44, %49 : vector<24x40xf32>
    %51 = arith.addf %47, %50 : vector<24x40xf32>
    %c0_46 = arith.constant 0 : index
    %c0_47 = arith.constant 0 : index
    %52 = vector.load %arg7[%c0_46, %c0_47] : memref<24x40xf32, #tpu.memory_space<vmem>>, vector<24x40xf32>
    tpu.vector_store %arg7[%c0_46, %c0_47], %51 {strides = array<i32>} : memref<24x40xf32, #tpu.memory_space<vmem>>, vector<24x40xf32>,
    return
  }
  func.func @transform_0(%arg0: i32) -> (i32, i32) {
    %c0_i32 = arith.constant 0 : i32
    %c0_i32_0 = arith.constant 0 : i32
    %c0_i32_1 = arith.constant 0 : i32
    return %c0_i32, %c0_i32_0 : i32, i32
  }
  func.func @transform_1(%arg0: i32) -> (i32, i32) {
    %c0_i32 = arith.constant 0 : i32
    %c0_i32_0 = arith.constant 0 : i32
    %c0_i32_1 = arith.constant 0 : i32
    return %c0_i32, %c0_i32_0 : i32, i32
  }
  func.func @transform_2(%arg0: i32) -> (i32, i32) {
    %c0_i32 = arith.constant 0 : i32
    %c0_i32_0 = arith.constant 0 : i32
    %c0_i32_1 = arith.constant 0 : i32
    return %c0_i32, %c0_i32_0 : i32, i32
  }
  func.func @transform_3(%arg0: i32) -> (i32, i32, i32) {
    %c0_i32 = arith.constant 0 : i32
    %c0_i32_0 = arith.constant 0 : i32
    %c0_i32_1 = arith.constant 0 : i32
    %c0_i32_2 = arith.constant 0 : i32
    return %c0_i32, %c0_i32_0, %c0_i32_1 : i32, i32, i32
  }
  func.func @transform_4(%arg0: i32) -> (i32, i32, i32) {
    %c0_i32 = arith.constant 0 : i32
    %c0_i32_0 = arith.constant 0 : i32
    %c0_i32_1 = arith.constant 0 : i32
    %c0_i32_2 = arith.constant 0 : i32
    return %c0_i32, %c0_i32_0, %c0_i32_1 : i32, i32, i32
  }
  func.func @transform_5(%arg0: i32) -> (i32, i32) {
    %c0_i32 = arith.constant 0 : i32
    %c0_i32_0 = arith.constant 0 : i32
    %c0_i32_1 = arith.constant 0 : i32
    return %c0_i32, %c0_i32_0 : i32, i32
  }
  func.func @transform_6(%arg0: i32) -> (i32, i32) {
    %c0_i32 = arith.constant 0 : i32
    %c0_i32_0 = arith.constant 0 : i32
    %c0_i32_1 = arith.constant 0 : i32
    return %c0_i32, %c0_i32_0 : i32, i32
  }
}

module attributes {stable_mosaic.version = 11 : i64} {
  func.func @kernel(%arg0: i32, %arg1: memref<24x40xf32, #tpu.memory_space<vmem>>, %arg2: memref<24x40xf32, #tpu.memory_space<vmem>>, %arg3: memref<96x512xf32, #tpu.memory_space<vmem>>, %arg4: memref<8x128xf32, #tpu.memory_space<vmem>>, %arg5: memref<24x2xf32, #tpu.memory_space<vmem>>, %arg6: memref<12x24x40xf32, #tpu.memory_space<vmem>>, %arg7: memref<24x40xf32, #tpu.memory_space<vmem>>) attributes {dimension_semantics = [#tpu.dimension_semantics<arbitrary>], iteration_bounds = array<i64: 1>, scalar_prefetch = 0 : i64, scratch_operands = 0 : i64, tpu.core_type = #tpu.core_type<tc>, window_params = [{pipeline_mode = #tpu.pipeline_mode<synchronous>, transform_indices = @transform_0, window_bounds = array<i64: 24, 40>}, {pipeline_mode = #tpu.pipeline_mode<synchronous>, transform_indices = @transform_1, window_bounds = array<i64: 24, 40>}, {pipeline_mode = #tpu.pipeline_mode<synchronous>, transform_indices = @transform_2, window_bounds = array<i64: 96, 512>}, {pipeline_mode = #tpu.pipeline_mode<synchronous>, transform_indices = @transform_3, window_bounds = array<i64: 8, 128>}, {pipeline_mode = #tpu.pipeline_mode<synchronous>, transform_indices = @transform_4, window_bounds = array<i64: 24, 2>}, {pipeline_mode = #tpu.pipeline_mode<synchronous>, transform_indices = @transform_5, window_bounds = array<i64: 12, 24, 40>}, {pipeline_mode = #tpu.pipeline_mode<synchronous>, transform_indices = @transform_6, window_bounds = array<i64: 24, 40>}]} {
    %c0 = arith.constant 0 : index
    %c0_0 = arith.constant 0 : index
    %0 = vector.load %arg1[%c0, %c0_0] : memref<24x40xf32, #tpu.memory_space<vmem>>, vector<24x40xf32>
    %c0_1 = arith.constant 0 : index
    %c0_2 = arith.constant 0 : index
    %1 = vector.load %arg2[%c0_1, %c0_2] : memref<24x40xf32, #tpu.memory_space<vmem>>, vector<24x40xf32>
    %2 = arith.mulf %0, %1 : vector<24x40xf32>
    %cst = arith.constant 1.000000e+00 : f32
    %3 = vector.broadcast %cst : f32 to vector<24x40xf32>
    %4 = arith.subf %3, %1 : vector<24x40xf32>
    %c0_3 = arith.constant 0 : index
    %c0_4 = arith.constant 0 : index
    %5 = vector.load %arg5[%c0_3, %c0_4] : memref<24x2xf32, #tpu.memory_space<vmem>>, vector<24x1xf32>
    %c1_i32 = arith.constant 1 : i32
    %6 = tpu.dynamic_rotate %2 by %c1_i32 dim 0 : vector<24x40xf32>, i32 -> vector<24x40xf32>
    %7 = vector.broadcast %5 : vector<24x1xf32> to vector<24x40xf32>
    %8 = arith.mulf %6, %7 : vector<24x40xf32>
    %9 = tpu.concatenate %8, %2 in 1 : vector<24x40xf32>, vector<24x40xf32> -> vector<24x80xf32>
    %c0_5 = arith.constant 0 : index
    %c0_6 = arith.constant 0 : index
    %10 = vector.load %arg3[%c0_5, %c0_6] : memref<96x512xf32, #tpu.memory_space<vmem>>, vector<80x96xf32>
    %c0_7 = arith.constant 0 : index
    %c0_8 = arith.constant 0 : index
    %11 = vector.load %arg4[%c0_7, %c0_8] : memref<8x128xf32, #tpu.memory_space<vmem>>, vector<1x96xf32>
    %cst_9 = arith.constant dense<0.000000e+00> : vector<24x96xf32>
    %12 = tpu.matmul %9, %10, %cst_9 {dimension_numbers = #tpu.dot_dimension_numbers<[1], [0], [0], [1], [0, 0, 1, 1], [], []>} : vector<24x80xf32>, vector<80x96xf32>, vector<24x96xf32> -> vector<24x96xf32>
    %13 = vector.broadcast %11 : vector<1x96xf32> to vector<24x96xf32>
    %14 = arith.addf %12, %13 : vector<24x96xf32>
    %15 = vector.extract_strided_slice %14 {offsets = [0, 0], sizes = [24, 48], strides = [1, 1]} : vector<24x96xf32> to vector<24x48xf32>
    %cst_10 = arith.constant 0.000000e+00 : f32
    %16 = vector.broadcast %cst_10 : f32 to vector<24x48xf32>
    %17 = arith.maximumf %15, %16 : vector<24x48xf32>
    %18 = vector.extract_strided_slice %14 {offsets = [0, 48], sizes = [24, 48], strides = [1, 1]} : vector<24x96xf32> to vector<24x48xf32>
    %c0_11 = arith.constant 0 : index
    %c0_12 = arith.constant 0 : index
    %19 = vector.load %arg5[%c0_11, %c0_12] : memref<24x2xf32, #tpu.memory_space<vmem>>, vector<24x1xf32>
    %c1_i32_13 = arith.constant 1 : i32
    %20 = tpu.dynamic_rotate %17 by %c1_i32_13 dim 0 : vector<24x48xf32>, i32 -> vector<24x48xf32>
    %21 = vector.broadcast %19 : vector<24x1xf32> to vector<24x48xf32>
    %22 = arith.mulf %20, %21 : vector<24x48xf32>
    %23 = tpu.concatenate %22, %17 in 1 : vector<24x48xf32>, vector<24x48xf32> -> vector<24x96xf32>
    %c0_14 = arith.constant 0 : index
    %c128 = arith.constant 128 : index
    %24 = vector.load %arg3[%c0_14, %c128] : memref<96x512xf32, #tpu.memory_space<vmem>>, vector<96x48xf32>
    %c1 = arith.constant 1 : index
    %c0_15 = arith.constant 0 : index
    %25 = vector.load %arg4[%c1, %c0_15] : memref<8x128xf32, #tpu.memory_space<vmem>>, vector<1x48xf32>
    %cst_16 = arith.constant dense<0.000000e+00> : vector<24x48xf32>
    %26 = tpu.matmul %23, %24, %cst_16 {dimension_numbers = #tpu.dot_dimension_numbers<[1], [0], [0], [1], [0, 0, 1, 1], [], []>} : vector<24x96xf32>, vector<96x48xf32>, vector<24x48xf32> -> vector<24x48xf32>
    %27 = vector.broadcast %25 : vector<1x48xf32> to vector<24x48xf32>
    %28 = arith.addf %26, %27 : vector<24x48xf32>
    %cst_17 = arith.constant 0.000000e+00 : f32
    %29 = vector.broadcast %cst_17 : f32 to vector<24x48xf32>
    %30 = arith.maximumf %28, %29 : vector<24x48xf32>
    %31 = arith.addf %30, %18 : vector<24x48xf32>
    %cst_18 = arith.constant 0.000000e+00 : f32
    %32 = vector.broadcast %cst_18 : f32 to vector<24x48xf32>
    %33 = arith.maximumf %31, %32 : vector<24x48xf32>
    %c0_19 = arith.constant 0 : index
    %c1_20 = arith.constant 1 : index
    %34 = vector.load %arg5[%c0_19, %c1_20] : memref<24x2xf32, #tpu.memory_space<vmem>>, vector<24x1xf32>
    %c2_i32 = arith.constant 2 : i32
    %35 = tpu.dynamic_rotate %33 by %c2_i32 dim 0 : vector<24x48xf32>, i32 -> vector<24x48xf32>
    %36 = vector.broadcast %34 : vector<24x1xf32> to vector<24x48xf32>
    %37 = arith.mulf %35, %36 : vector<24x48xf32>
    %38 = tpu.concatenate %37, %33 in 1 : vector<24x48xf32>, vector<24x48xf32> -> vector<24x96xf32>
    %c0_21 = arith.constant 0 : index
    %c256 = arith.constant 256 : index
    %39 = vector.load %arg3[%c0_21, %c256] : memref<96x512xf32, #tpu.memory_space<vmem>>, vector<96x80xf32>
    %c2 = arith.constant 2 : index
    %c0_22 = arith.constant 0 : index
    %40 = vector.load %arg4[%c2, %c0_22] : memref<8x128xf32, #tpu.memory_space<vmem>>, vector<1x80xf32>
    %cst_23 = arith.constant dense<0.000000e+00> : vector<24x80xf32>
    %41 = tpu.matmul %38, %39, %cst_23 {dimension_numbers = #tpu.dot_dimension_numbers<[1], [0], [0], [1], [0, 0, 1, 1], [], []>} : vector<24x96xf32>, vector<96x80xf32>, vector<24x80xf32> -> vector<24x80xf32>
    %42 = vector.broadcast %40 : vector<1x80xf32> to vector<24x80xf32>
    %43 = arith.addf %41, %42 : vector<24x80xf32>
    %44 = vector.extract_strided_slice %43 {offsets = [0, 0], sizes = [24, 40], strides = [1, 1]} : vector<24x80xf32> to vector<24x40xf32>
    %cst_24 = arith.constant 0.000000e+00 : f32
    %45 = vector.broadcast %cst_24 : f32 to vector<24x40xf32>
    %46 = arith.maximumf %44, %45 : vector<24x40xf32>
    %47 = vector.extract_strided_slice %43 {offsets = [0, 40], sizes = [24, 40], strides = [1, 1]} : vector<24x80xf32> to vector<24x40xf32>
    %c0_25 = arith.constant 0 : index
    %c1_26 = arith.constant 1 : index
    %48 = vector.load %arg5[%c0_25, %c1_26] : memref<24x2xf32, #tpu.memory_space<vmem>>, vector<24x1xf32>
    %c2_i32_27 = arith.constant 2 : i32
    %49 = tpu.dynamic_rotate %46 by %c2_i32_27 dim 0 : vector<24x40xf32>, i32 -> vector<24x40xf32>
    %50 = vector.broadcast %48 : vector<24x1xf32> to vector<24x40xf32>
    %51 = arith.mulf %49, %50 : vector<24x40xf32>
    %52 = tpu.concatenate %51, %46 in 1 : vector<24x40xf32>, vector<24x40xf32> -> vector<24x80xf32>
    %c0_28 = arith.constant 0 : index
    %c384 = arith.constant 384 : index
    %53 = vector.load %arg3[%c0_28, %c384] : memref<96x512xf32, #tpu.memory_space<vmem>>, vector<80x40xf32>
    %c3 = arith.constant 3 : index
    %c0_29 = arith.constant 0 : index
    %54 = vector.load %arg4[%c3, %c0_29] : memref<8x128xf32, #tpu.memory_space<vmem>>, vector<1x40xf32>
    %cst_30 = arith.constant dense<0.000000e+00> : vector<24x40xf32>
    %55 = tpu.matmul %52, %53, %cst_30 {dimension_numbers = #tpu.dot_dimension_numbers<[1], [0], [0], [1], [0, 0, 1, 1], [], []>} : vector<24x80xf32>, vector<80x40xf32>, vector<24x40xf32> -> vector<24x40xf32>
    %56 = vector.broadcast %54 : vector<1x40xf32> to vector<24x40xf32>
    %57 = arith.addf %55, %56 : vector<24x40xf32>
    %cst_31 = arith.constant 0.000000e+00 : f32
    %58 = vector.broadcast %cst_31 : f32 to vector<24x40xf32>
    %59 = arith.maximumf %57, %58 : vector<24x40xf32>
    %60 = arith.addf %59, %47 : vector<24x40xf32>
    %cst_32 = arith.constant 0.000000e+00 : f32
    %61 = vector.broadcast %cst_32 : f32 to vector<24x40xf32>
    %62 = arith.maximumf %60, %61 : vector<24x40xf32>
    %63 = arith.mulf %62, %4 : vector<24x40xf32>
    %64 = arith.addf %2, %63 : vector<24x40xf32>
    %c0_33 = arith.constant 0 : index
    %c0_34 = arith.constant 0 : index
    %c0_35 = arith.constant 0 : index
    %65 = vector.load %arg6[%c0_33, %c0_34, %c0_35] : memref<12x24x40xf32, #tpu.memory_space<vmem>>, vector<1x24x40xf32>
    %66 = vector.shape_cast %65 : vector<1x24x40xf32> to vector<24x40xf32>
    %cst_36 = arith.constant 5.000000e-01 : f32
    %67 = vector.broadcast %cst_36 : f32 to vector<24x40xf32>
    %68 = arith.cmpf ogt, %66, %67 : vector<24x40xf32>
    %69 = arith.select %68, %64, %2 : vector<24x40xi1>, vector<24x40xf32>
    %c0_37 = arith.constant 0 : index
    %c0_38 = arith.constant 0 : index
    %70 = vector.load %arg5[%c0_37, %c0_38] : memref<24x2xf32, #tpu.memory_space<vmem>>, vector<24x1xf32>
    %c1_i32_39 = arith.constant 1 : i32
    %71 = tpu.dynamic_rotate %69 by %c1_i32_39 dim 0 : vector<24x40xf32>, i32 -> vector<24x40xf32>
    %72 = vector.broadcast %70 : vector<24x1xf32> to vector<24x40xf32>
    %73 = arith.mulf %71, %72 : vector<24x40xf32>
    %74 = tpu.concatenate %73, %69 in 1 : vector<24x40xf32>, vector<24x40xf32> -> vector<24x80xf32>
    %c0_40 = arith.constant 0 : index
    %c0_41 = arith.constant 0 : index
    %75 = vector.load %arg3[%c0_40, %c0_41] : memref<96x512xf32, #tpu.memory_space<vmem>>, vector<80x96xf32>
    %c0_42 = arith.constant 0 : index
    %c0_43 = arith.constant 0 : index
    %76 = vector.load %arg4[%c0_42, %c0_43] : memref<8x128xf32, #tpu.memory_space<vmem>>, vector<1x96xf32>
    %cst_44 = arith.constant dense<0.000000e+00> : vector<24x96xf32>
    %77 = tpu.matmul %74, %75, %cst_44 {dimension_numbers = #tpu.dot_dimension_numbers<[1], [0], [0], [1], [0, 0, 1, 1], [], []>} : vector<24x80xf32>, vector<80x96xf32>, vector<24x96xf32> -> vector<24x96xf32>
    %78 = vector.broadcast %76 : vector<1x96xf32> to vector<24x96xf32>
    %79 = arith.addf %77, %78 : vector<24x96xf32>
    %80 = vector.extract_strided_slice %79 {offsets = [0, 0], sizes = [24, 48], strides = [1, 1]} : vector<24x96xf32> to vector<24x48xf32>
    %cst_45 = arith.constant 0.000000e+00 : f32
    %81 = vector.broadcast %cst_45 : f32 to vector<24x48xf32>
    %82 = arith.maximumf %80, %81 : vector<24x48xf32>
    %83 = vector.extract_strided_slice %79 {offsets = [0, 48], sizes = [24, 48], strides = [1, 1]} : vector<24x96xf32> to vector<24x48xf32>
    %c0_46 = arith.constant 0 : index
    %c0_47 = arith.constant 0 : index
    %84 = vector.load %arg5[%c0_46, %c0_47] : memref<24x2xf32, #tpu.memory_space<vmem>>, vector<24x1xf32>
    %c1_i32_48 = arith.constant 1 : i32
    %85 = tpu.dynamic_rotate %82 by %c1_i32_48 dim 0 : vector<24x48xf32>, i32 -> vector<24x48xf32>
    %86 = vector.broadcast %84 : vector<24x1xf32> to vector<24x48xf32>
    %87 = arith.mulf %85, %86 : vector<24x48xf32>
    %88 = tpu.concatenate %87, %82 in 1 : vector<24x48xf32>, vector<24x48xf32> -> vector<24x96xf32>
    %c0_49 = arith.constant 0 : index
    %c128_50 = arith.constant 128 : index
    %89 = vector.load %arg3[%c0_49, %c128_50] : memref<96x512xf32, #tpu.memory_space<vmem>>, vector<96x48xf32>
    %c1_51 = arith.constant 1 : index
    %c0_52 = arith.constant 0 : index
    %90 = vector.load %arg4[%c1_51, %c0_52] : memref<8x128xf32, #tpu.memory_space<vmem>>, vector<1x48xf32>
    %cst_53 = arith.constant dense<0.000000e+00> : vector<24x48xf32>
    %91 = tpu.matmul %88, %89, %cst_53 {dimension_numbers = #tpu.dot_dimension_numbers<[1], [0], [0], [1], [0, 0, 1, 1], [], []>} : vector<24x96xf32>, vector<96x48xf32>, vector<24x48xf32> -> vector<24x48xf32>
    %92 = vector.broadcast %90 : vector<1x48xf32> to vector<24x48xf32>
    %93 = arith.addf %91, %92 : vector<24x48xf32>
    %cst_54 = arith.constant 0.000000e+00 : f32
    %94 = vector.broadcast %cst_54 : f32 to vector<24x48xf32>
    %95 = arith.maximumf %93, %94 : vector<24x48xf32>
    %96 = arith.addf %95, %83 : vector<24x48xf32>
    %cst_55 = arith.constant 0.000000e+00 : f32
    %97 = vector.broadcast %cst_55 : f32 to vector<24x48xf32>
    %98 = arith.maximumf %96, %97 : vector<24x48xf32>
    %c0_56 = arith.constant 0 : index
    %c1_57 = arith.constant 1 : index
    %99 = vector.load %arg5[%c0_56, %c1_57] : memref<24x2xf32, #tpu.memory_space<vmem>>, vector<24x1xf32>
    %c2_i32_58 = arith.constant 2 : i32
    %100 = tpu.dynamic_rotate %98 by %c2_i32_58 dim 0 : vector<24x48xf32>, i32 -> vector<24x48xf32>
    %101 = vector.broadcast %99 : vector<24x1xf32> to vector<24x48xf32>
    %102 = arith.mulf %100, %101 : vector<24x48xf32>
    %103 = tpu.concatenate %102, %98 in 1 : vector<24x48xf32>, vector<24x48xf32> -> vector<24x96xf32>
    %c0_59 = arith.constant 0 : index
    %c256_60 = arith.constant 256 : index
    %104 = vector.load %arg3[%c0_59, %c256_60] : memref<96x512xf32, #tpu.memory_space<vmem>>, vector<96x80xf32>
    %c2_61 = arith.constant 2 : index
    %c0_62 = arith.constant 0 : index
    %105 = vector.load %arg4[%c2_61, %c0_62] : memref<8x128xf32, #tpu.memory_space<vmem>>, vector<1x80xf32>
    %cst_63 = arith.constant dense<0.000000e+00> : vector<24x80xf32>
    %106 = tpu.matmul %103, %104, %cst_63 {dimension_numbers = #tpu.dot_dimension_numbers<[1], [0], [0], [1], [0, 0, 1, 1], [], []>} : vector<24x96xf32>, vector<96x80xf32>, vector<24x80xf32> -> vector<24x80xf32>
    %107 = vector.broadcast %105 : vector<1x80xf32> to vector<24x80xf32>
    %108 = arith.addf %106, %107 : vector<24x80xf32>
    %109 = vector.extract_strided_slice %108 {offsets = [0, 0], sizes = [24, 40], strides = [1, 1]} : vector<24x80xf32> to vector<24x40xf32>
    %cst_64 = arith.constant 0.000000e+00 : f32
    %110 = vector.broadcast %cst_64 : f32 to vector<24x40xf32>
    %111 = arith.maximumf %109, %110 : vector<24x40xf32>
    %112 = vector.extract_strided_slice %108 {offsets = [0, 40], sizes = [24, 40], strides = [1, 1]} : vector<24x80xf32> to vector<24x40xf32>
    %c0_65 = arith.constant 0 : index
    %c1_66 = arith.constant 1 : index
    %113 = vector.load %arg5[%c0_65, %c1_66] : memref<24x2xf32, #tpu.memory_space<vmem>>, vector<24x1xf32>
    %c2_i32_67 = arith.constant 2 : i32
    %114 = tpu.dynamic_rotate %111 by %c2_i32_67 dim 0 : vector<24x40xf32>, i32 -> vector<24x40xf32>
    %115 = vector.broadcast %113 : vector<24x1xf32> to vector<24x40xf32>
    %116 = arith.mulf %114, %115 : vector<24x40xf32>
    %117 = tpu.concatenate %116, %111 in 1 : vector<24x40xf32>, vector<24x40xf32> -> vector<24x80xf32>
    %c0_68 = arith.constant 0 : index
    %c384_69 = arith.constant 384 : index
    %118 = vector.load %arg3[%c0_68, %c384_69] : memref<96x512xf32, #tpu.memory_space<vmem>>, vector<80x40xf32>
    %c3_70 = arith.constant 3 : index
    %c0_71 = arith.constant 0 : index
    %119 = vector.load %arg4[%c3_70, %c0_71] : memref<8x128xf32, #tpu.memory_space<vmem>>, vector<1x40xf32>
    %cst_72 = arith.constant dense<0.000000e+00> : vector<24x40xf32>
    %120 = tpu.matmul %117, %118, %cst_72 {dimension_numbers = #tpu.dot_dimension_numbers<[1], [0], [0], [1], [0, 0, 1, 1], [], []>} : vector<24x80xf32>, vector<80x40xf32>, vector<24x40xf32> -> vector<24x40xf32>
    %121 = vector.broadcast %119 : vector<1x40xf32> to vector<24x40xf32>
    %122 = arith.addf %120, %121 : vector<24x40xf32>
    %cst_73 = arith.constant 0.000000e+00 : f32
    %123 = vector.broadcast %cst_73 : f32 to vector<24x40xf32>
    %124 = arith.maximumf %122, %123 : vector<24x40xf32>
    %125 = arith.addf %124, %112 : vector<24x40xf32>
    %cst_74 = arith.constant 0.000000e+00 : f32
    %126 = vector.broadcast %cst_74 : f32 to vector<24x40xf32>
    %127 = arith.maximumf %125, %126 : vector<24x40xf32>
    %128 = arith.mulf %127, %4 : vector<24x40xf32>
    %129 = arith.addf %2, %128 : vector<24x40xf32>
    %c1_75 = arith.constant 1 : index
    %c0_76 = arith.constant 0 : index
    %c0_77 = arith.constant 0 : index
    %130 = vector.load %arg6[%c1_75, %c0_76, %c0_77] : memref<12x24x40xf32, #tpu.memory_space<vmem>>, vector<1x24x40xf32>
    %131 = vector.shape_cast %130 : vector<1x24x40xf32> to vector<24x40xf32>
    %cst_78 = arith.constant 5.000000e-01 : f32
    %132 = vector.broadcast %cst_78 : f32 to vector<24x40xf32>
    %133 = arith.cmpf ogt, %131, %132 : vector<24x40xf32>
    %134 = arith.select %133, %129, %69 : vector<24x40xi1>, vector<24x40xf32>
    %c0_79 = arith.constant 0 : index
    %c0_80 = arith.constant 0 : index
    %135 = vector.load %arg5[%c0_79, %c0_80] : memref<24x2xf32, #tpu.memory_space<vmem>>, vector<24x1xf32>
    %c1_i32_81 = arith.constant 1 : i32
    %136 = tpu.dynamic_rotate %134 by %c1_i32_81 dim 0 : vector<24x40xf32>, i32 -> vector<24x40xf32>
    %137 = vector.broadcast %135 : vector<24x1xf32> to vector<24x40xf32>
    %138 = arith.mulf %136, %137 : vector<24x40xf32>
    %139 = tpu.concatenate %138, %134 in 1 : vector<24x40xf32>, vector<24x40xf32> -> vector<24x80xf32>
    %c0_82 = arith.constant 0 : index
    %c0_83 = arith.constant 0 : index
    %140 = vector.load %arg3[%c0_82, %c0_83] : memref<96x512xf32, #tpu.memory_space<vmem>>, vector<80x96xf32>
    %c0_84 = arith.constant 0 : index
    %c0_85 = arith.constant 0 : index
    %141 = vector.load %arg4[%c0_84, %c0_85] : memref<8x128xf32, #tpu.memory_space<vmem>>, vector<1x96xf32>
    %cst_86 = arith.constant dense<0.000000e+00> : vector<24x96xf32>
    %142 = tpu.matmul %139, %140, %cst_86 {dimension_numbers = #tpu.dot_dimension_numbers<[1], [0], [0], [1], [0, 0, 1, 1], [], []>} : vector<24x80xf32>, vector<80x96xf32>, vector<24x96xf32> -> vector<24x96xf32>
    %143 = vector.broadcast %141 : vector<1x96xf32> to vector<24x96xf32>
    %144 = arith.addf %142, %143 : vector<24x96xf32>
    %145 = vector.extract_strided_slice %144 {offsets = [0, 0], sizes = [24, 48], strides = [1, 1]} : vector<24x96xf32> to vector<24x48xf32>
    %cst_87 = arith.constant 0.000000e+00 : f32
    %146 = vector.broadcast %cst_87 : f32 to vector<24x48xf32>
    %147 = arith.maximumf %145, %146 : vector<24x48xf32>
    %148 = vector.extract_strided_slice %144 {offsets = [0, 48], sizes = [24, 48], strides = [1, 1]} : vector<24x96xf32> to vector<24x48xf32>
    %c0_88 = arith.constant 0 : index
    %c0_89 = arith.constant 0 : index
    %149 = vector.load %arg5[%c0_88, %c0_89] : memref<24x2xf32, #tpu.memory_space<vmem>>, vector<24x1xf32>
    %c1_i32_90 = arith.constant 1 : i32
    %150 = tpu.dynamic_rotate %147 by %c1_i32_90 dim 0 : vector<24x48xf32>, i32 -> vector<24x48xf32>
    %151 = vector.broadcast %149 : vector<24x1xf32> to vector<24x48xf32>
    %152 = arith.mulf %150, %151 : vector<24x48xf32>
    %153 = tpu.concatenate %152, %147 in 1 : vector<24x48xf32>, vector<24x48xf32> -> vector<24x96xf32>
    %c0_91 = arith.constant 0 : index
    %c128_92 = arith.constant 128 : index
    %154 = vector.load %arg3[%c0_91, %c128_92] : memref<96x512xf32, #tpu.memory_space<vmem>>, vector<96x48xf32>
    %c1_93 = arith.constant 1 : index
    %c0_94 = arith.constant 0 : index
    %155 = vector.load %arg4[%c1_93, %c0_94] : memref<8x128xf32, #tpu.memory_space<vmem>>, vector<1x48xf32>
    %cst_95 = arith.constant dense<0.000000e+00> : vector<24x48xf32>
    %156 = tpu.matmul %153, %154, %cst_95 {dimension_numbers = #tpu.dot_dimension_numbers<[1], [0], [0], [1], [0, 0, 1, 1], [], []>} : vector<24x96xf32>, vector<96x48xf32>, vector<24x48xf32> -> vector<24x48xf32>
    %157 = vector.broadcast %155 : vector<1x48xf32> to vector<24x48xf32>
    %158 = arith.addf %156, %157 : vector<24x48xf32>
    %cst_96 = arith.constant 0.000000e+00 : f32
    %159 = vector.broadcast %cst_96 : f32 to vector<24x48xf32>
    %160 = arith.maximumf %158, %159 : vector<24x48xf32>
    %161 = arith.addf %160, %148 : vector<24x48xf32>
    %cst_97 = arith.constant 0.000000e+00 : f32
    %162 = vector.broadcast %cst_97 : f32 to vector<24x48xf32>
    %163 = arith.maximumf %161, %162 : vector<24x48xf32>
    %c0_98 = arith.constant 0 : index
    %c1_99 = arith.constant 1 : index
    %164 = vector.load %arg5[%c0_98, %c1_99] : memref<24x2xf32, #tpu.memory_space<vmem>>, vector<24x1xf32>
    %c2_i32_100 = arith.constant 2 : i32
    %165 = tpu.dynamic_rotate %163 by %c2_i32_100 dim 0 : vector<24x48xf32>, i32 -> vector<24x48xf32>
    %166 = vector.broadcast %164 : vector<24x1xf32> to vector<24x48xf32>
    %167 = arith.mulf %165, %166 : vector<24x48xf32>
    %168 = tpu.concatenate %167, %163 in 1 : vector<24x48xf32>, vector<24x48xf32> -> vector<24x96xf32>
    %c0_101 = arith.constant 0 : index
    %c256_102 = arith.constant 256 : index
    %169 = vector.load %arg3[%c0_101, %c256_102] : memref<96x512xf32, #tpu.memory_space<vmem>>, vector<96x80xf32>
    %c2_103 = arith.constant 2 : index
    %c0_104 = arith.constant 0 : index
    %170 = vector.load %arg4[%c2_103, %c0_104] : memref<8x128xf32, #tpu.memory_space<vmem>>, vector<1x80xf32>
    %cst_105 = arith.constant dense<0.000000e+00> : vector<24x80xf32>
    %171 = tpu.matmul %168, %169, %cst_105 {dimension_numbers = #tpu.dot_dimension_numbers<[1], [0], [0], [1], [0, 0, 1, 1], [], []>} : vector<24x96xf32>, vector<96x80xf32>, vector<24x80xf32> -> vector<24x80xf32>
    %172 = vector.broadcast %170 : vector<1x80xf32> to vector<24x80xf32>
    %173 = arith.addf %171, %172 : vector<24x80xf32>
    %174 = vector.extract_strided_slice %173 {offsets = [0, 0], sizes = [24, 40], strides = [1, 1]} : vector<24x80xf32> to vector<24x40xf32>
    %cst_106 = arith.constant 0.000000e+00 : f32
    %175 = vector.broadcast %cst_106 : f32 to vector<24x40xf32>
    %176 = arith.maximumf %174, %175 : vector<24x40xf32>
    %177 = vector.extract_strided_slice %173 {offsets = [0, 40], sizes = [24, 40], strides = [1, 1]} : vector<24x80xf32> to vector<24x40xf32>
    %c0_107 = arith.constant 0 : index
    %c1_108 = arith.constant 1 : index
    %178 = vector.load %arg5[%c0_107, %c1_108] : memref<24x2xf32, #tpu.memory_space<vmem>>, vector<24x1xf32>
    %c2_i32_109 = arith.constant 2 : i32
    %179 = tpu.dynamic_rotate %176 by %c2_i32_109 dim 0 : vector<24x40xf32>, i32 -> vector<24x40xf32>
    %180 = vector.broadcast %178 : vector<24x1xf32> to vector<24x40xf32>
    %181 = arith.mulf %179, %180 : vector<24x40xf32>
    %182 = tpu.concatenate %181, %176 in 1 : vector<24x40xf32>, vector<24x40xf32> -> vector<24x80xf32>
    %c0_110 = arith.constant 0 : index
    %c384_111 = arith.constant 384 : index
    %183 = vector.load %arg3[%c0_110, %c384_111] : memref<96x512xf32, #tpu.memory_space<vmem>>, vector<80x40xf32>
    %c3_112 = arith.constant 3 : index
    %c0_113 = arith.constant 0 : index
    %184 = vector.load %arg4[%c3_112, %c0_113] : memref<8x128xf32, #tpu.memory_space<vmem>>, vector<1x40xf32>
    %cst_114 = arith.constant dense<0.000000e+00> : vector<24x40xf32>
    %185 = tpu.matmul %182, %183, %cst_114 {dimension_numbers = #tpu.dot_dimension_numbers<[1], [0], [0], [1], [0, 0, 1, 1], [], []>} : vector<24x80xf32>, vector<80x40xf32>, vector<24x40xf32> -> vector<24x40xf32>
    %186 = vector.broadcast %184 : vector<1x40xf32> to vector<24x40xf32>
    %187 = arith.addf %185, %186 : vector<24x40xf32>
    %cst_115 = arith.constant 0.000000e+00 : f32
    %188 = vector.broadcast %cst_115 : f32 to vector<24x40xf32>
    %189 = arith.maximumf %187, %188 : vector<24x40xf32>
    %190 = arith.addf %189, %177 : vector<24x40xf32>
    %cst_116 = arith.constant 0.000000e+00 : f32
    %191 = vector.broadcast %cst_116 : f32 to vector<24x40xf32>
    %192 = arith.maximumf %190, %191 : vector<24x40xf32>
    %193 = arith.mulf %192, %4 : vector<24x40xf32>
    %194 = arith.addf %2, %193 : vector<24x40xf32>
    %c2_117 = arith.constant 2 : index
    %c0_118 = arith.constant 0 : index
    %c0_119 = arith.constant 0 : index
    %195 = vector.load %arg6[%c2_117, %c0_118, %c0_119] : memref<12x24x40xf32, #tpu.memory_space<vmem>>, vector<1x24x40xf32>
    %196 = vector.shape_cast %195 : vector<1x24x40xf32> to vector<24x40xf32>
    %cst_120 = arith.constant 5.000000e-01 : f32
    %197 = vector.broadcast %cst_120 : f32 to vector<24x40xf32>
    %198 = arith.cmpf ogt, %196, %197 : vector<24x40xf32>
    %199 = arith.select %198, %194, %134 : vector<24x40xi1>, vector<24x40xf32>
    %c0_121 = arith.constant 0 : index
    %c0_122 = arith.constant 0 : index
    %200 = vector.load %arg5[%c0_121, %c0_122] : memref<24x2xf32, #tpu.memory_space<vmem>>, vector<24x1xf32>
    %c1_i32_123 = arith.constant 1 : i32
    %201 = tpu.dynamic_rotate %199 by %c1_i32_123 dim 0 : vector<24x40xf32>, i32 -> vector<24x40xf32>
    %202 = vector.broadcast %200 : vector<24x1xf32> to vector<24x40xf32>
    %203 = arith.mulf %201, %202 : vector<24x40xf32>
    %204 = tpu.concatenate %203, %199 in 1 : vector<24x40xf32>, vector<24x40xf32> -> vector<24x80xf32>
    %c0_124 = arith.constant 0 : index
    %c0_125 = arith.constant 0 : index
    %205 = vector.load %arg3[%c0_124, %c0_125] : memref<96x512xf32, #tpu.memory_space<vmem>>, vector<80x96xf32>
    %c0_126 = arith.constant 0 : index
    %c0_127 = arith.constant 0 : index
    %206 = vector.load %arg4[%c0_126, %c0_127] : memref<8x128xf32, #tpu.memory_space<vmem>>, vector<1x96xf32>
    %cst_128 = arith.constant dense<0.000000e+00> : vector<24x96xf32>
    %207 = tpu.matmul %204, %205, %cst_128 {dimension_numbers = #tpu.dot_dimension_numbers<[1], [0], [0], [1], [0, 0, 1, 1], [], []>} : vector<24x80xf32>, vector<80x96xf32>, vector<24x96xf32> -> vector<24x96xf32>
    %208 = vector.broadcast %206 : vector<1x96xf32> to vector<24x96xf32>
    %209 = arith.addf %207, %208 : vector<24x96xf32>
    %210 = vector.extract_strided_slice %209 {offsets = [0, 0], sizes = [24, 48], strides = [1, 1]} : vector<24x96xf32> to vector<24x48xf32>
    %cst_129 = arith.constant 0.000000e+00 : f32
    %211 = vector.broadcast %cst_129 : f32 to vector<24x48xf32>
    %212 = arith.maximumf %210, %211 : vector<24x48xf32>
    %213 = vector.extract_strided_slice %209 {offsets = [0, 48], sizes = [24, 48], strides = [1, 1]} : vector<24x96xf32> to vector<24x48xf32>
    %c0_130 = arith.constant 0 : index
    %c0_131 = arith.constant 0 : index
    %214 = vector.load %arg5[%c0_130, %c0_131] : memref<24x2xf32, #tpu.memory_space<vmem>>, vector<24x1xf32>
    %c1_i32_132 = arith.constant 1 : i32
    %215 = tpu.dynamic_rotate %212 by %c1_i32_132 dim 0 : vector<24x48xf32>, i32 -> vector<24x48xf32>
    %216 = vector.broadcast %214 : vector<24x1xf32> to vector<24x48xf32>
    %217 = arith.mulf %215, %216 : vector<24x48xf32>
    %218 = tpu.concatenate %217, %212 in 1 : vector<24x48xf32>, vector<24x48xf32> -> vector<24x96xf32>
    %c0_133 = arith.constant 0 : index
    %c128_134 = arith.constant 128 : index
    %219 = vector.load %arg3[%c0_133, %c128_134] : memref<96x512xf32, #tpu.memory_space<vmem>>, vector<96x48xf32>
    %c1_135 = arith.constant 1 : index
    %c0_136 = arith.constant 0 : index
    %220 = vector.load %arg4[%c1_135, %c0_136] : memref<8x128xf32, #tpu.memory_space<vmem>>, vector<1x48xf32>
    %cst_137 = arith.constant dense<0.000000e+00> : vector<24x48xf32>
    %221 = tpu.matmul %218, %219, %cst_137 {dimension_numbers = #tpu.dot_dimension_numbers<[1], [0], [0], [1], [0, 0, 1, 1], [], []>} : vector<24x96xf32>, vector<96x48xf32>, vector<24x48xf32> -> vector<24x48xf32>
    %222 = vector.broadcast %220 : vector<1x48xf32> to vector<24x48xf32>
    %223 = arith.addf %221, %222 : vector<24x48xf32>
    %cst_138 = arith.constant 0.000000e+00 : f32
    %224 = vector.broadcast %cst_138 : f32 to vector<24x48xf32>
    %225 = arith.maximumf %223, %224 : vector<24x48xf32>
    %226 = arith.addf %225, %213 : vector<24x48xf32>
    %cst_139 = arith.constant 0.000000e+00 : f32
    %227 = vector.broadcast %cst_139 : f32 to vector<24x48xf32>
    %228 = arith.maximumf %226, %227 : vector<24x48xf32>
    %c0_140 = arith.constant 0 : index
    %c1_141 = arith.constant 1 : index
    %229 = vector.load %arg5[%c0_140, %c1_141] : memref<24x2xf32, #tpu.memory_space<vmem>>, vector<24x1xf32>
    %c2_i32_142 = arith.constant 2 : i32
    %230 = tpu.dynamic_rotate %228 by %c2_i32_142 dim 0 : vector<24x48xf32>, i32 -> vector<24x48xf32>
    %231 = vector.broadcast %229 : vector<24x1xf32> to vector<24x48xf32>
    %232 = arith.mulf %230, %231 : vector<24x48xf32>
    %233 = tpu.concatenate %232, %228 in 1 : vector<24x48xf32>, vector<24x48xf32> -> vector<24x96xf32>
    %c0_143 = arith.constant 0 : index
    %c256_144 = arith.constant 256 : index
    %234 = vector.load %arg3[%c0_143, %c256_144] : memref<96x512xf32, #tpu.memory_space<vmem>>, vector<96x80xf32>
    %c2_145 = arith.constant 2 : index
    %c0_146 = arith.constant 0 : index
    %235 = vector.load %arg4[%c2_145, %c0_146] : memref<8x128xf32, #tpu.memory_space<vmem>>, vector<1x80xf32>
    %cst_147 = arith.constant dense<0.000000e+00> : vector<24x80xf32>
    %236 = tpu.matmul %233, %234, %cst_147 {dimension_numbers = #tpu.dot_dimension_numbers<[1], [0], [0], [1], [0, 0, 1, 1], [], []>} : vector<24x96xf32>, vector<96x80xf32>, vector<24x80xf32> -> vector<24x80xf32>
    %237 = vector.broadcast %235 : vector<1x80xf32> to vector<24x80xf32>
    %238 = arith.addf %236, %237 : vector<24x80xf32>
    %239 = vector.extract_strided_slice %238 {offsets = [0, 0], sizes = [24, 40], strides = [1, 1]} : vector<24x80xf32> to vector<24x40xf32>
    %cst_148 = arith.constant 0.000000e+00 : f32
    %240 = vector.broadcast %cst_148 : f32 to vector<24x40xf32>
    %241 = arith.maximumf %239, %240 : vector<24x40xf32>
    %242 = vector.extract_strided_slice %238 {offsets = [0, 40], sizes = [24, 40], strides = [1, 1]} : vector<24x80xf32> to vector<24x40xf32>
    %c0_149 = arith.constant 0 : index
    %c1_150 = arith.constant 1 : index
    %243 = vector.load %arg5[%c0_149, %c1_150] : memref<24x2xf32, #tpu.memory_space<vmem>>, vector<24x1xf32>
    %c2_i32_151 = arith.constant 2 : i32
    %244 = tpu.dynamic_rotate %241 by %c2_i32_151 dim 0 : vector<24x40xf32>, i32 -> vector<24x40xf32>
    %245 = vector.broadcast %243 : vector<24x1xf32> to vector<24x40xf32>
    %246 = arith.mulf %244, %245 : vector<24x40xf32>
    %247 = tpu.concatenate %246, %241 in 1 : vector<24x40xf32>, vector<24x40xf32> -> vector<24x80xf32>
    %c0_152 = arith.constant 0 : index
    %c384_153 = arith.constant 384 : index
    %248 = vector.load %arg3[%c0_152, %c384_153] : memref<96x512xf32, #tpu.memory_space<vmem>>, vector<80x40xf32>
    %c3_154 = arith.constant 3 : index
    %c0_155 = arith.constant 0 : index
    %249 = vector.load %arg4[%c3_154, %c0_155] : memref<8x128xf32, #tpu.memory_space<vmem>>, vector<1x40xf32>
    %cst_156 = arith.constant dense<0.000000e+00> : vector<24x40xf32>
    %250 = tpu.matmul %247, %248, %cst_156 {dimension_numbers = #tpu.dot_dimension_numbers<[1], [0], [0], [1], [0, 0, 1, 1], [], []>} : vector<24x80xf32>, vector<80x40xf32>, vector<24x40xf32> -> vector<24x40xf32>
    %251 = vector.broadcast %249 : vector<1x40xf32> to vector<24x40xf32>
    %252 = arith.addf %250, %251 : vector<24x40xf32>
    %cst_157 = arith.constant 0.000000e+00 : f32
    %253 = vector.broadcast %cst_157 : f32 to vector<24x40xf32>
    %254 = arith.maximumf %252, %253 : vector<24x40xf32>
    %255 = arith.addf %254, %242 : vector<24x40xf32>
    %cst_158 = arith.constant 0.000000e+00 : f32
    %256 = vector.broadcast %cst_158 : f32 to vector<24x40xf32>
    %257 = arith.maximumf %255, %256 : vector<24x40xf32>
    %258 = arith.mulf %257, %4 : vector<24x40xf32>
    %259 = arith.addf %2, %258 : vector<24x40xf32>
    %c3_159 = arith.constant 3 : index
    %c0_160 = arith.constant 0 : index
    %c0_161 = arith.constant 0 : index
    %260 = vector.load %arg6[%c3_159, %c0_160, %c0_161] : memref<12x24x40xf32, #tpu.memory_space<vmem>>, vector<1x24x40xf32>
    %261 = vector.shape_cast %260 : vector<1x24x40xf32> to vector<24x40xf32>
    %cst_162 = arith.constant 5.000000e-01 : f32
    %262 = vector.broadcast %cst_162 : f32 to vector<24x40xf32>
    %263 = arith.cmpf ogt, %261, %262 : vector<24x40xf32>
    %264 = arith.select %263, %259, %199 : vector<24x40xi1>, vector<24x40xf32>
    %c0_163 = arith.constant 0 : index
    %c0_164 = arith.constant 0 : index
    %265 = vector.load %arg5[%c0_163, %c0_164] : memref<24x2xf32, #tpu.memory_space<vmem>>, vector<24x1xf32>
    %c1_i32_165 = arith.constant 1 : i32
    %266 = tpu.dynamic_rotate %264 by %c1_i32_165 dim 0 : vector<24x40xf32>, i32 -> vector<24x40xf32>
    %267 = vector.broadcast %265 : vector<24x1xf32> to vector<24x40xf32>
    %268 = arith.mulf %266, %267 : vector<24x40xf32>
    %269 = tpu.concatenate %268, %264 in 1 : vector<24x40xf32>, vector<24x40xf32> -> vector<24x80xf32>
    %c0_166 = arith.constant 0 : index
    %c0_167 = arith.constant 0 : index
    %270 = vector.load %arg3[%c0_166, %c0_167] : memref<96x512xf32, #tpu.memory_space<vmem>>, vector<80x96xf32>
    %c0_168 = arith.constant 0 : index
    %c0_169 = arith.constant 0 : index
    %271 = vector.load %arg4[%c0_168, %c0_169] : memref<8x128xf32, #tpu.memory_space<vmem>>, vector<1x96xf32>
    %cst_170 = arith.constant dense<0.000000e+00> : vector<24x96xf32>
    %272 = tpu.matmul %269, %270, %cst_170 {dimension_numbers = #tpu.dot_dimension_numbers<[1], [0], [0], [1], [0, 0, 1, 1], [], []>} : vector<24x80xf32>, vector<80x96xf32>, vector<24x96xf32> -> vector<24x96xf32>
    %273 = vector.broadcast %271 : vector<1x96xf32> to vector<24x96xf32>
    %274 = arith.addf %272, %273 : vector<24x96xf32>
    %275 = vector.extract_strided_slice %274 {offsets = [0, 0], sizes = [24, 48], strides = [1, 1]} : vector<24x96xf32> to vector<24x48xf32>
    %cst_171 = arith.constant 0.000000e+00 : f32
    %276 = vector.broadcast %cst_171 : f32 to vector<24x48xf32>
    %277 = arith.maximumf %275, %276 : vector<24x48xf32>
    %278 = vector.extract_strided_slice %274 {offsets = [0, 48], sizes = [24, 48], strides = [1, 1]} : vector<24x96xf32> to vector<24x48xf32>
    %c0_172 = arith.constant 0 : index
    %c0_173 = arith.constant 0 : index
    %279 = vector.load %arg5[%c0_172, %c0_173] : memref<24x2xf32, #tpu.memory_space<vmem>>, vector<24x1xf32>
    %c1_i32_174 = arith.constant 1 : i32
    %280 = tpu.dynamic_rotate %277 by %c1_i32_174 dim 0 : vector<24x48xf32>, i32 -> vector<24x48xf32>
    %281 = vector.broadcast %279 : vector<24x1xf32> to vector<24x48xf32>
    %282 = arith.mulf %280, %281 : vector<24x48xf32>
    %283 = tpu.concatenate %282, %277 in 1 : vector<24x48xf32>, vector<24x48xf32> -> vector<24x96xf32>
    %c0_175 = arith.constant 0 : index
    %c128_176 = arith.constant 128 : index
    %284 = vector.load %arg3[%c0_175, %c128_176] : memref<96x512xf32, #tpu.memory_space<vmem>>, vector<96x48xf32>
    %c1_177 = arith.constant 1 : index
    %c0_178 = arith.constant 0 : index
    %285 = vector.load %arg4[%c1_177, %c0_178] : memref<8x128xf32, #tpu.memory_space<vmem>>, vector<1x48xf32>
    %cst_179 = arith.constant dense<0.000000e+00> : vector<24x48xf32>
    %286 = tpu.matmul %283, %284, %cst_179 {dimension_numbers = #tpu.dot_dimension_numbers<[1], [0], [0], [1], [0, 0, 1, 1], [], []>} : vector<24x96xf32>, vector<96x48xf32>, vector<24x48xf32> -> vector<24x48xf32>
    %287 = vector.broadcast %285 : vector<1x48xf32> to vector<24x48xf32>
    %288 = arith.addf %286, %287 : vector<24x48xf32>
    %cst_180 = arith.constant 0.000000e+00 : f32
    %289 = vector.broadcast %cst_180 : f32 to vector<24x48xf32>
    %290 = arith.maximumf %288, %289 : vector<24x48xf32>
    %291 = arith.addf %290, %278 : vector<24x48xf32>
    %cst_181 = arith.constant 0.000000e+00 : f32
    %292 = vector.broadcast %cst_181 : f32 to vector<24x48xf32>
    %293 = arith.maximumf %291, %292 : vector<24x48xf32>
    %c0_182 = arith.constant 0 : index
    %c1_183 = arith.constant 1 : index
    %294 = vector.load %arg5[%c0_182, %c1_183] : memref<24x2xf32, #tpu.memory_space<vmem>>, vector<24x1xf32>
    %c2_i32_184 = arith.constant 2 : i32
    %295 = tpu.dynamic_rotate %293 by %c2_i32_184 dim 0 : vector<24x48xf32>, i32 -> vector<24x48xf32>
    %296 = vector.broadcast %294 : vector<24x1xf32> to vector<24x48xf32>
    %297 = arith.mulf %295, %296 : vector<24x48xf32>
    %298 = tpu.concatenate %297, %293 in 1 : vector<24x48xf32>, vector<24x48xf32> -> vector<24x96xf32>
    %c0_185 = arith.constant 0 : index
    %c256_186 = arith.constant 256 : index
    %299 = vector.load %arg3[%c0_185, %c256_186] : memref<96x512xf32, #tpu.memory_space<vmem>>, vector<96x80xf32>
    %c2_187 = arith.constant 2 : index
    %c0_188 = arith.constant 0 : index
    %300 = vector.load %arg4[%c2_187, %c0_188] : memref<8x128xf32, #tpu.memory_space<vmem>>, vector<1x80xf32>
    %cst_189 = arith.constant dense<0.000000e+00> : vector<24x80xf32>
    %301 = tpu.matmul %298, %299, %cst_189 {dimension_numbers = #tpu.dot_dimension_numbers<[1], [0], [0], [1], [0, 0, 1, 1], [], []>} : vector<24x96xf32>, vector<96x80xf32>, vector<24x80xf32> -> vector<24x80xf32>
    %302 = vector.broadcast %300 : vector<1x80xf32> to vector<24x80xf32>
    %303 = arith.addf %301, %302 : vector<24x80xf32>
    %304 = vector.extract_strided_slice %303 {offsets = [0, 0], sizes = [24, 40], strides = [1, 1]} : vector<24x80xf32> to vector<24x40xf32>
    %cst_190 = arith.constant 0.000000e+00 : f32
    %305 = vector.broadcast %cst_190 : f32 to vector<24x40xf32>
    %306 = arith.maximumf %304, %305 : vector<24x40xf32>
    %307 = vector.extract_strided_slice %303 {offsets = [0, 40], sizes = [24, 40], strides = [1, 1]} : vector<24x80xf32> to vector<24x40xf32>
    %c0_191 = arith.constant 0 : index
    %c1_192 = arith.constant 1 : index
    %308 = vector.load %arg5[%c0_191, %c1_192] : memref<24x2xf32, #tpu.memory_space<vmem>>, vector<24x1xf32>
    %c2_i32_193 = arith.constant 2 : i32
    %309 = tpu.dynamic_rotate %306 by %c2_i32_193 dim 0 : vector<24x40xf32>, i32 -> vector<24x40xf32>
    %310 = vector.broadcast %308 : vector<24x1xf32> to vector<24x40xf32>
    %311 = arith.mulf %309, %310 : vector<24x40xf32>
    %312 = tpu.concatenate %311, %306 in 1 : vector<24x40xf32>, vector<24x40xf32> -> vector<24x80xf32>
    %c0_194 = arith.constant 0 : index
    %c384_195 = arith.constant 384 : index
    %313 = vector.load %arg3[%c0_194, %c384_195] : memref<96x512xf32, #tpu.memory_space<vmem>>, vector<80x40xf32>
    %c3_196 = arith.constant 3 : index
    %c0_197 = arith.constant 0 : index
    %314 = vector.load %arg4[%c3_196, %c0_197] : memref<8x128xf32, #tpu.memory_space<vmem>>, vector<1x40xf32>
    %cst_198 = arith.constant dense<0.000000e+00> : vector<24x40xf32>
    %315 = tpu.matmul %312, %313, %cst_198 {dimension_numbers = #tpu.dot_dimension_numbers<[1], [0], [0], [1], [0, 0, 1, 1], [], []>} : vector<24x80xf32>, vector<80x40xf32>, vector<24x40xf32> -> vector<24x40xf32>
    %316 = vector.broadcast %314 : vector<1x40xf32> to vector<24x40xf32>
    %317 = arith.addf %315, %316 : vector<24x40xf32>
    %cst_199 = arith.constant 0.000000e+00 : f32
    %318 = vector.broadcast %cst_199 : f32 to vector<24x40xf32>
    %319 = arith.maximumf %317, %318 : vector<24x40xf32>
    %320 = arith.addf %319, %307 : vector<24x40xf32>
    %cst_200 = arith.constant 0.000000e+00 : f32
    %321 = vector.broadcast %cst_200 : f32 to vector<24x40xf32>
    %322 = arith.maximumf %320, %321 : vector<24x40xf32>
    %323 = arith.mulf %322, %4 : vector<24x40xf32>
    %324 = arith.addf %2, %323 : vector<24x40xf32>
    %c4 = arith.constant 4 : index
    %c0_201 = arith.constant 0 : index
    %c0_202 = arith.constant 0 : index
    %325 = vector.load %arg6[%c4, %c0_201, %c0_202] : memref<12x24x40xf32, #tpu.memory_space<vmem>>, vector<1x24x40xf32>
    %326 = vector.shape_cast %325 : vector<1x24x40xf32> to vector<24x40xf32>
    %cst_203 = arith.constant 5.000000e-01 : f32
    %327 = vector.broadcast %cst_203 : f32 to vector<24x40xf32>
    %328 = arith.cmpf ogt, %326, %327 : vector<24x40xf32>
    %329 = arith.select %328, %324, %264 : vector<24x40xi1>, vector<24x40xf32>
    %c0_204 = arith.constant 0 : index
    %c0_205 = arith.constant 0 : index
    %330 = vector.load %arg5[%c0_204, %c0_205] : memref<24x2xf32, #tpu.memory_space<vmem>>, vector<24x1xf32>
    %c1_i32_206 = arith.constant 1 : i32
    %331 = tpu.dynamic_rotate %329 by %c1_i32_206 dim 0 : vector<24x40xf32>, i32 -> vector<24x40xf32>
    %332 = vector.broadcast %330 : vector<24x1xf32> to vector<24x40xf32>
    %333 = arith.mulf %331, %332 : vector<24x40xf32>
    %334 = tpu.concatenate %333, %329 in 1 : vector<24x40xf32>, vector<24x40xf32> -> vector<24x80xf32>
    %c0_207 = arith.constant 0 : index
    %c0_208 = arith.constant 0 : index
    %335 = vector.load %arg3[%c0_207, %c0_208] : memref<96x512xf32, #tpu.memory_space<vmem>>, vector<80x96xf32>
    %c0_209 = arith.constant 0 : index
    %c0_210 = arith.constant 0 : index
    %336 = vector.load %arg4[%c0_209, %c0_210] : memref<8x128xf32, #tpu.memory_space<vmem>>, vector<1x96xf32>
    %cst_211 = arith.constant dense<0.000000e+00> : vector<24x96xf32>
    %337 = tpu.matmul %334, %335, %cst_211 {dimension_numbers = #tpu.dot_dimension_numbers<[1], [0], [0], [1], [0, 0, 1, 1], [], []>} : vector<24x80xf32>, vector<80x96xf32>, vector<24x96xf32> -> vector<24x96xf32>
    %338 = vector.broadcast %336 : vector<1x96xf32> to vector<24x96xf32>
    %339 = arith.addf %337, %338 : vector<24x96xf32>
    %340 = vector.extract_strided_slice %339 {offsets = [0, 0], sizes = [24, 48], strides = [1, 1]} : vector<24x96xf32> to vector<24x48xf32>
    %cst_212 = arith.constant 0.000000e+00 : f32
    %341 = vector.broadcast %cst_212 : f32 to vector<24x48xf32>
    %342 = arith.maximumf %340, %341 : vector<24x48xf32>
    %343 = vector.extract_strided_slice %339 {offsets = [0, 48], sizes = [24, 48], strides = [1, 1]} : vector<24x96xf32> to vector<24x48xf32>
    %c0_213 = arith.constant 0 : index
    %c0_214 = arith.constant 0 : index
    %344 = vector.load %arg5[%c0_213, %c0_214] : memref<24x2xf32, #tpu.memory_space<vmem>>, vector<24x1xf32>
    %c1_i32_215 = arith.constant 1 : i32
    %345 = tpu.dynamic_rotate %342 by %c1_i32_215 dim 0 : vector<24x48xf32>, i32 -> vector<24x48xf32>
    %346 = vector.broadcast %344 : vector<24x1xf32> to vector<24x48xf32>
    %347 = arith.mulf %345, %346 : vector<24x48xf32>
    %348 = tpu.concatenate %347, %342 in 1 : vector<24x48xf32>, vector<24x48xf32> -> vector<24x96xf32>
    %c0_216 = arith.constant 0 : index
    %c128_217 = arith.constant 128 : index
    %349 = vector.load %arg3[%c0_216, %c128_217] : memref<96x512xf32, #tpu.memory_space<vmem>>, vector<96x48xf32>
    %c1_218 = arith.constant 1 : index
    %c0_219 = arith.constant 0 : index
    %350 = vector.load %arg4[%c1_218, %c0_219] : memref<8x128xf32, #tpu.memory_space<vmem>>, vector<1x48xf32>
    %cst_220 = arith.constant dense<0.000000e+00> : vector<24x48xf32>
    %351 = tpu.matmul %348, %349, %cst_220 {dimension_numbers = #tpu.dot_dimension_numbers<[1], [0], [0], [1], [0, 0, 1, 1], [], []>} : vector<24x96xf32>, vector<96x48xf32>, vector<24x48xf32> -> vector<24x48xf32>
    %352 = vector.broadcast %350 : vector<1x48xf32> to vector<24x48xf32>
    %353 = arith.addf %351, %352 : vector<24x48xf32>
    %cst_221 = arith.constant 0.000000e+00 : f32
    %354 = vector.broadcast %cst_221 : f32 to vector<24x48xf32>
    %355 = arith.maximumf %353, %354 : vector<24x48xf32>
    %356 = arith.addf %355, %343 : vector<24x48xf32>
    %cst_222 = arith.constant 0.000000e+00 : f32
    %357 = vector.broadcast %cst_222 : f32 to vector<24x48xf32>
    %358 = arith.maximumf %356, %357 : vector<24x48xf32>
    %c0_223 = arith.constant 0 : index
    %c1_224 = arith.constant 1 : index
    %359 = vector.load %arg5[%c0_223, %c1_224] : memref<24x2xf32, #tpu.memory_space<vmem>>, vector<24x1xf32>
    %c2_i32_225 = arith.constant 2 : i32
    %360 = tpu.dynamic_rotate %358 by %c2_i32_225 dim 0 : vector<24x48xf32>, i32 -> vector<24x48xf32>
    %361 = vector.broadcast %359 : vector<24x1xf32> to vector<24x48xf32>
    %362 = arith.mulf %360, %361 : vector<24x48xf32>
    %363 = tpu.concatenate %362, %358 in 1 : vector<24x48xf32>, vector<24x48xf32> -> vector<24x96xf32>
    %c0_226 = arith.constant 0 : index
    %c256_227 = arith.constant 256 : index
    %364 = vector.load %arg3[%c0_226, %c256_227] : memref<96x512xf32, #tpu.memory_space<vmem>>, vector<96x80xf32>
    %c2_228 = arith.constant 2 : index
    %c0_229 = arith.constant 0 : index
    %365 = vector.load %arg4[%c2_228, %c0_229] : memref<8x128xf32, #tpu.memory_space<vmem>>, vector<1x80xf32>
    %cst_230 = arith.constant dense<0.000000e+00> : vector<24x80xf32>
    %366 = tpu.matmul %363, %364, %cst_230 {dimension_numbers = #tpu.dot_dimension_numbers<[1], [0], [0], [1], [0, 0, 1, 1], [], []>} : vector<24x96xf32>, vector<96x80xf32>, vector<24x80xf32> -> vector<24x80xf32>
    %367 = vector.broadcast %365 : vector<1x80xf32> to vector<24x80xf32>
    %368 = arith.addf %366, %367 : vector<24x80xf32>
    %369 = vector.extract_strided_slice %368 {offsets = [0, 0], sizes = [24, 40], strides = [1, 1]} : vector<24x80xf32> to vector<24x40xf32>
    %cst_231 = arith.constant 0.000000e+00 : f32
    %370 = vector.broadcast %cst_231 : f32 to vector<24x40xf32>
    %371 = arith.maximumf %369, %370 : vector<24x40xf32>
    %372 = vector.extract_strided_slice %368 {offsets = [0, 40], sizes = [24, 40], strides = [1, 1]} : vector<24x80xf32> to vector<24x40xf32>
    %c0_232 = arith.constant 0 : index
    %c1_233 = arith.constant 1 : index
    %373 = vector.load %arg5[%c0_232, %c1_233] : memref<24x2xf32, #tpu.memory_space<vmem>>, vector<24x1xf32>
    %c2_i32_234 = arith.constant 2 : i32
    %374 = tpu.dynamic_rotate %371 by %c2_i32_234 dim 0 : vector<24x40xf32>, i32 -> vector<24x40xf32>
    %375 = vector.broadcast %373 : vector<24x1xf32> to vector<24x40xf32>
    %376 = arith.mulf %374, %375 : vector<24x40xf32>
    %377 = tpu.concatenate %376, %371 in 1 : vector<24x40xf32>, vector<24x40xf32> -> vector<24x80xf32>
    %c0_235 = arith.constant 0 : index
    %c384_236 = arith.constant 384 : index
    %378 = vector.load %arg3[%c0_235, %c384_236] : memref<96x512xf32, #tpu.memory_space<vmem>>, vector<80x40xf32>
    %c3_237 = arith.constant 3 : index
    %c0_238 = arith.constant 0 : index
    %379 = vector.load %arg4[%c3_237, %c0_238] : memref<8x128xf32, #tpu.memory_space<vmem>>, vector<1x40xf32>
    %cst_239 = arith.constant dense<0.000000e+00> : vector<24x40xf32>
    %380 = tpu.matmul %377, %378, %cst_239 {dimension_numbers = #tpu.dot_dimension_numbers<[1], [0], [0], [1], [0, 0, 1, 1], [], []>} : vector<24x80xf32>, vector<80x40xf32>, vector<24x40xf32> -> vector<24x40xf32>
    %381 = vector.broadcast %379 : vector<1x40xf32> to vector<24x40xf32>
    %382 = arith.addf %380, %381 : vector<24x40xf32>
    %cst_240 = arith.constant 0.000000e+00 : f32
    %383 = vector.broadcast %cst_240 : f32 to vector<24x40xf32>
    %384 = arith.maximumf %382, %383 : vector<24x40xf32>
    %385 = arith.addf %384, %372 : vector<24x40xf32>
    %cst_241 = arith.constant 0.000000e+00 : f32
    %386 = vector.broadcast %cst_241 : f32 to vector<24x40xf32>
    %387 = arith.maximumf %385, %386 : vector<24x40xf32>
    %388 = arith.mulf %387, %4 : vector<24x40xf32>
    %389 = arith.addf %2, %388 : vector<24x40xf32>
    %c5 = arith.constant 5 : index
    %c0_242 = arith.constant 0 : index
    %c0_243 = arith.constant 0 : index
    %390 = vector.load %arg6[%c5, %c0_242, %c0_243] : memref<12x24x40xf32, #tpu.memory_space<vmem>>, vector<1x24x40xf32>
    %391 = vector.shape_cast %390 : vector<1x24x40xf32> to vector<24x40xf32>
    %cst_244 = arith.constant 5.000000e-01 : f32
    %392 = vector.broadcast %cst_244 : f32 to vector<24x40xf32>
    %393 = arith.cmpf ogt, %391, %392 : vector<24x40xf32>
    %394 = arith.select %393, %389, %329 : vector<24x40xi1>, vector<24x40xf32>
    %c0_245 = arith.constant 0 : index
    %c0_246 = arith.constant 0 : index
    %395 = vector.load %arg5[%c0_245, %c0_246] : memref<24x2xf32, #tpu.memory_space<vmem>>, vector<24x1xf32>
    %c1_i32_247 = arith.constant 1 : i32
    %396 = tpu.dynamic_rotate %394 by %c1_i32_247 dim 0 : vector<24x40xf32>, i32 -> vector<24x40xf32>
    %397 = vector.broadcast %395 : vector<24x1xf32> to vector<24x40xf32>
    %398 = arith.mulf %396, %397 : vector<24x40xf32>
    %399 = tpu.concatenate %398, %394 in 1 : vector<24x40xf32>, vector<24x40xf32> -> vector<24x80xf32>
    %c0_248 = arith.constant 0 : index
    %c0_249 = arith.constant 0 : index
    %400 = vector.load %arg3[%c0_248, %c0_249] : memref<96x512xf32, #tpu.memory_space<vmem>>, vector<80x96xf32>
    %c0_250 = arith.constant 0 : index
    %c0_251 = arith.constant 0 : index
    %401 = vector.load %arg4[%c0_250, %c0_251] : memref<8x128xf32, #tpu.memory_space<vmem>>, vector<1x96xf32>
    %cst_252 = arith.constant dense<0.000000e+00> : vector<24x96xf32>
    %402 = tpu.matmul %399, %400, %cst_252 {dimension_numbers = #tpu.dot_dimension_numbers<[1], [0], [0], [1], [0, 0, 1, 1], [], []>} : vector<24x80xf32>, vector<80x96xf32>, vector<24x96xf32> -> vector<24x96xf32>
    %403 = vector.broadcast %401 : vector<1x96xf32> to vector<24x96xf32>
    %404 = arith.addf %402, %403 : vector<24x96xf32>
    %405 = vector.extract_strided_slice %404 {offsets = [0, 0], sizes = [24, 48], strides = [1, 1]} : vector<24x96xf32> to vector<24x48xf32>
    %cst_253 = arith.constant 0.000000e+00 : f32
    %406 = vector.broadcast %cst_253 : f32 to vector<24x48xf32>
    %407 = arith.maximumf %405, %406 : vector<24x48xf32>
    %408 = vector.extract_strided_slice %404 {offsets = [0, 48], sizes = [24, 48], strides = [1, 1]} : vector<24x96xf32> to vector<24x48xf32>
    %c0_254 = arith.constant 0 : index
    %c0_255 = arith.constant 0 : index
    %409 = vector.load %arg5[%c0_254, %c0_255] : memref<24x2xf32, #tpu.memory_space<vmem>>, vector<24x1xf32>
    %c1_i32_256 = arith.constant 1 : i32
    %410 = tpu.dynamic_rotate %407 by %c1_i32_256 dim 0 : vector<24x48xf32>, i32 -> vector<24x48xf32>
    %411 = vector.broadcast %409 : vector<24x1xf32> to vector<24x48xf32>
    %412 = arith.mulf %410, %411 : vector<24x48xf32>
    %413 = tpu.concatenate %412, %407 in 1 : vector<24x48xf32>, vector<24x48xf32> -> vector<24x96xf32>
    %c0_257 = arith.constant 0 : index
    %c128_258 = arith.constant 128 : index
    %414 = vector.load %arg3[%c0_257, %c128_258] : memref<96x512xf32, #tpu.memory_space<vmem>>, vector<96x48xf32>
    %c1_259 = arith.constant 1 : index
    %c0_260 = arith.constant 0 : index
    %415 = vector.load %arg4[%c1_259, %c0_260] : memref<8x128xf32, #tpu.memory_space<vmem>>, vector<1x48xf32>
    %cst_261 = arith.constant dense<0.000000e+00> : vector<24x48xf32>
    %416 = tpu.matmul %413, %414, %cst_261 {dimension_numbers = #tpu.dot_dimension_numbers<[1], [0], [0], [1], [0, 0, 1, 1], [], []>} : vector<24x96xf32>, vector<96x48xf32>, vector<24x48xf32> -> vector<24x48xf32>
    %417 = vector.broadcast %415 : vector<1x48xf32> to vector<24x48xf32>
    %418 = arith.addf %416, %417 : vector<24x48xf32>
    %cst_262 = arith.constant 0.000000e+00 : f32
    %419 = vector.broadcast %cst_262 : f32 to vector<24x48xf32>
    %420 = arith.maximumf %418, %419 : vector<24x48xf32>
    %421 = arith.addf %420, %408 : vector<24x48xf32>
    %cst_263 = arith.constant 0.000000e+00 : f32
    %422 = vector.broadcast %cst_263 : f32 to vector<24x48xf32>
    %423 = arith.maximumf %421, %422 : vector<24x48xf32>
    %c0_264 = arith.constant 0 : index
    %c1_265 = arith.constant 1 : index
    %424 = vector.load %arg5[%c0_264, %c1_265] : memref<24x2xf32, #tpu.memory_space<vmem>>, vector<24x1xf32>
    %c2_i32_266 = arith.constant 2 : i32
    %425 = tpu.dynamic_rotate %423 by %c2_i32_266 dim 0 : vector<24x48xf32>, i32 -> vector<24x48xf32>
    %426 = vector.broadcast %424 : vector<24x1xf32> to vector<24x48xf32>
    %427 = arith.mulf %425, %426 : vector<24x48xf32>
    %428 = tpu.concatenate %427, %423 in 1 : vector<24x48xf32>, vector<24x48xf32> -> vector<24x96xf32>
    %c0_267 = arith.constant 0 : index
    %c256_268 = arith.constant 256 : index
    %429 = vector.load %arg3[%c0_267, %c256_268] : memref<96x512xf32, #tpu.memory_space<vmem>>, vector<96x80xf32>
    %c2_269 = arith.constant 2 : index
    %c0_270 = arith.constant 0 : index
    %430 = vector.load %arg4[%c2_269, %c0_270] : memref<8x128xf32, #tpu.memory_space<vmem>>, vector<1x80xf32>
    %cst_271 = arith.constant dense<0.000000e+00> : vector<24x80xf32>
    %431 = tpu.matmul %428, %429, %cst_271 {dimension_numbers = #tpu.dot_dimension_numbers<[1], [0], [0], [1], [0, 0, 1, 1], [], []>} : vector<24x96xf32>, vector<96x80xf32>, vector<24x80xf32> -> vector<24x80xf32>
    %432 = vector.broadcast %430 : vector<1x80xf32> to vector<24x80xf32>
    %433 = arith.addf %431, %432 : vector<24x80xf32>
    %434 = vector.extract_strided_slice %433 {offsets = [0, 0], sizes = [24, 40], strides = [1, 1]} : vector<24x80xf32> to vector<24x40xf32>
    %cst_272 = arith.constant 0.000000e+00 : f32
    %435 = vector.broadcast %cst_272 : f32 to vector<24x40xf32>
    %436 = arith.maximumf %434, %435 : vector<24x40xf32>
    %437 = vector.extract_strided_slice %433 {offsets = [0, 40], sizes = [24, 40], strides = [1, 1]} : vector<24x80xf32> to vector<24x40xf32>
    %c0_273 = arith.constant 0 : index
    %c1_274 = arith.constant 1 : index
    %438 = vector.load %arg5[%c0_273, %c1_274] : memref<24x2xf32, #tpu.memory_space<vmem>>, vector<24x1xf32>
    %c2_i32_275 = arith.constant 2 : i32
    %439 = tpu.dynamic_rotate %436 by %c2_i32_275 dim 0 : vector<24x40xf32>, i32 -> vector<24x40xf32>
    %440 = vector.broadcast %438 : vector<24x1xf32> to vector<24x40xf32>
    %441 = arith.mulf %439, %440 : vector<24x40xf32>
    %442 = tpu.concatenate %441, %436 in 1 : vector<24x40xf32>, vector<24x40xf32> -> vector<24x80xf32>
    %c0_276 = arith.constant 0 : index
    %c384_277 = arith.constant 384 : index
    %443 = vector.load %arg3[%c0_276, %c384_277] : memref<96x512xf32, #tpu.memory_space<vmem>>, vector<80x40xf32>
    %c3_278 = arith.constant 3 : index
    %c0_279 = arith.constant 0 : index
    %444 = vector.load %arg4[%c3_278, %c0_279] : memref<8x128xf32, #tpu.memory_space<vmem>>, vector<1x40xf32>
    %cst_280 = arith.constant dense<0.000000e+00> : vector<24x40xf32>
    %445 = tpu.matmul %442, %443, %cst_280 {dimension_numbers = #tpu.dot_dimension_numbers<[1], [0], [0], [1], [0, 0, 1, 1], [], []>} : vector<24x80xf32>, vector<80x40xf32>, vector<24x40xf32> -> vector<24x40xf32>
    %446 = vector.broadcast %444 : vector<1x40xf32> to vector<24x40xf32>
    %447 = arith.addf %445, %446 : vector<24x40xf32>
    %cst_281 = arith.constant 0.000000e+00 : f32
    %448 = vector.broadcast %cst_281 : f32 to vector<24x40xf32>
    %449 = arith.maximumf %447, %448 : vector<24x40xf32>
    %450 = arith.addf %449, %437 : vector<24x40xf32>
    %cst_282 = arith.constant 0.000000e+00 : f32
    %451 = vector.broadcast %cst_282 : f32 to vector<24x40xf32>
    %452 = arith.maximumf %450, %451 : vector<24x40xf32>
    %453 = arith.mulf %452, %4 : vector<24x40xf32>
    %454 = arith.addf %2, %453 : vector<24x40xf32>
    %c6 = arith.constant 6 : index
    %c0_283 = arith.constant 0 : index
    %c0_284 = arith.constant 0 : index
    %455 = vector.load %arg6[%c6, %c0_283, %c0_284] : memref<12x24x40xf32, #tpu.memory_space<vmem>>, vector<1x24x40xf32>
    %456 = vector.shape_cast %455 : vector<1x24x40xf32> to vector<24x40xf32>
    %cst_285 = arith.constant 5.000000e-01 : f32
    %457 = vector.broadcast %cst_285 : f32 to vector<24x40xf32>
    %458 = arith.cmpf ogt, %456, %457 : vector<24x40xf32>
    %459 = arith.select %458, %454, %394 : vector<24x40xi1>, vector<24x40xf32>
    %c0_286 = arith.constant 0 : index
    %c0_287 = arith.constant 0 : index
    %460 = vector.load %arg5[%c0_286, %c0_287] : memref<24x2xf32, #tpu.memory_space<vmem>>, vector<24x1xf32>
    %c1_i32_288 = arith.constant 1 : i32
    %461 = tpu.dynamic_rotate %459 by %c1_i32_288 dim 0 : vector<24x40xf32>, i32 -> vector<24x40xf32>
    %462 = vector.broadcast %460 : vector<24x1xf32> to vector<24x40xf32>
    %463 = arith.mulf %461, %462 : vector<24x40xf32>
    %464 = tpu.concatenate %463, %459 in 1 : vector<24x40xf32>, vector<24x40xf32> -> vector<24x80xf32>
    %c0_289 = arith.constant 0 : index
    %c0_290 = arith.constant 0 : index
    %465 = vector.load %arg3[%c0_289, %c0_290] : memref<96x512xf32, #tpu.memory_space<vmem>>, vector<80x96xf32>
    %c0_291 = arith.constant 0 : index
    %c0_292 = arith.constant 0 : index
    %466 = vector.load %arg4[%c0_291, %c0_292] : memref<8x128xf32, #tpu.memory_space<vmem>>, vector<1x96xf32>
    %cst_293 = arith.constant dense<0.000000e+00> : vector<24x96xf32>
    %467 = tpu.matmul %464, %465, %cst_293 {dimension_numbers = #tpu.dot_dimension_numbers<[1], [0], [0], [1], [0, 0, 1, 1], [], []>} : vector<24x80xf32>, vector<80x96xf32>, vector<24x96xf32> -> vector<24x96xf32>
    %468 = vector.broadcast %466 : vector<1x96xf32> to vector<24x96xf32>
    %469 = arith.addf %467, %468 : vector<24x96xf32>
    %470 = vector.extract_strided_slice %469 {offsets = [0, 0], sizes = [24, 48], strides = [1, 1]} : vector<24x96xf32> to vector<24x48xf32>
    %cst_294 = arith.constant 0.000000e+00 : f32
    %471 = vector.broadcast %cst_294 : f32 to vector<24x48xf32>
    %472 = arith.maximumf %470, %471 : vector<24x48xf32>
    %473 = vector.extract_strided_slice %469 {offsets = [0, 48], sizes = [24, 48], strides = [1, 1]} : vector<24x96xf32> to vector<24x48xf32>
    %c0_295 = arith.constant 0 : index
    %c0_296 = arith.constant 0 : index
    %474 = vector.load %arg5[%c0_295, %c0_296] : memref<24x2xf32, #tpu.memory_space<vmem>>, vector<24x1xf32>
    %c1_i32_297 = arith.constant 1 : i32
    %475 = tpu.dynamic_rotate %472 by %c1_i32_297 dim 0 : vector<24x48xf32>, i32 -> vector<24x48xf32>
    %476 = vector.broadcast %474 : vector<24x1xf32> to vector<24x48xf32>
    %477 = arith.mulf %475, %476 : vector<24x48xf32>
    %478 = tpu.concatenate %477, %472 in 1 : vector<24x48xf32>, vector<24x48xf32> -> vector<24x96xf32>
    %c0_298 = arith.constant 0 : index
    %c128_299 = arith.constant 128 : index
    %479 = vector.load %arg3[%c0_298, %c128_299] : memref<96x512xf32, #tpu.memory_space<vmem>>, vector<96x48xf32>
    %c1_300 = arith.constant 1 : index
    %c0_301 = arith.constant 0 : index
    %480 = vector.load %arg4[%c1_300, %c0_301] : memref<8x128xf32, #tpu.memory_space<vmem>>, vector<1x48xf32>
    %cst_302 = arith.constant dense<0.000000e+00> : vector<24x48xf32>
    %481 = tpu.matmul %478, %479, %cst_302 {dimension_numbers = #tpu.dot_dimension_numbers<[1], [0], [0], [1], [0, 0, 1, 1], [], []>} : vector<24x96xf32>, vector<96x48xf32>, vector<24x48xf32> -> vector<24x48xf32>
    %482 = vector.broadcast %480 : vector<1x48xf32> to vector<24x48xf32>
    %483 = arith.addf %481, %482 : vector<24x48xf32>
    %cst_303 = arith.constant 0.000000e+00 : f32
    %484 = vector.broadcast %cst_303 : f32 to vector<24x48xf32>
    %485 = arith.maximumf %483, %484 : vector<24x48xf32>
    %486 = arith.addf %485, %473 : vector<24x48xf32>
    %cst_304 = arith.constant 0.000000e+00 : f32
    %487 = vector.broadcast %cst_304 : f32 to vector<24x48xf32>
    %488 = arith.maximumf %486, %487 : vector<24x48xf32>
    %c0_305 = arith.constant 0 : index
    %c1_306 = arith.constant 1 : index
    %489 = vector.load %arg5[%c0_305, %c1_306] : memref<24x2xf32, #tpu.memory_space<vmem>>, vector<24x1xf32>
    %c2_i32_307 = arith.constant 2 : i32
    %490 = tpu.dynamic_rotate %488 by %c2_i32_307 dim 0 : vector<24x48xf32>, i32 -> vector<24x48xf32>
    %491 = vector.broadcast %489 : vector<24x1xf32> to vector<24x48xf32>
    %492 = arith.mulf %490, %491 : vector<24x48xf32>
    %493 = tpu.concatenate %492, %488 in 1 : vector<24x48xf32>, vector<24x48xf32> -> vector<24x96xf32>
    %c0_308 = arith.constant 0 : index
    %c256_309 = arith.constant 256 : index
    %494 = vector.load %arg3[%c0_308, %c256_309] : memref<96x512xf32, #tpu.memory_space<vmem>>, vector<96x80xf32>
    %c2_310 = arith.constant 2 : index
    %c0_311 = arith.constant 0 : index
    %495 = vector.load %arg4[%c2_310, %c0_311] : memref<8x128xf32, #tpu.memory_space<vmem>>, vector<1x80xf32>
    %cst_312 = arith.constant dense<0.000000e+00> : vector<24x80xf32>
    %496 = tpu.matmul %493, %494, %cst_312 {dimension_numbers = #tpu.dot_dimension_numbers<[1], [0], [0], [1], [0, 0, 1, 1], [], []>} : vector<24x96xf32>, vector<96x80xf32>, vector<24x80xf32> -> vector<24x80xf32>
    %497 = vector.broadcast %495 : vector<1x80xf32> to vector<24x80xf32>
    %498 = arith.addf %496, %497 : vector<24x80xf32>
    %499 = vector.extract_strided_slice %498 {offsets = [0, 0], sizes = [24, 40], strides = [1, 1]} : vector<24x80xf32> to vector<24x40xf32>
    %cst_313 = arith.constant 0.000000e+00 : f32
    %500 = vector.broadcast %cst_313 : f32 to vector<24x40xf32>
    %501 = arith.maximumf %499, %500 : vector<24x40xf32>
    %502 = vector.extract_strided_slice %498 {offsets = [0, 40], sizes = [24, 40], strides = [1, 1]} : vector<24x80xf32> to vector<24x40xf32>
    %c0_314 = arith.constant 0 : index
    %c1_315 = arith.constant 1 : index
    %503 = vector.load %arg5[%c0_314, %c1_315] : memref<24x2xf32, #tpu.memory_space<vmem>>, vector<24x1xf32>
    %c2_i32_316 = arith.constant 2 : i32
    %504 = tpu.dynamic_rotate %501 by %c2_i32_316 dim 0 : vector<24x40xf32>, i32 -> vector<24x40xf32>
    %505 = vector.broadcast %503 : vector<24x1xf32> to vector<24x40xf32>
    %506 = arith.mulf %504, %505 : vector<24x40xf32>
    %507 = tpu.concatenate %506, %501 in 1 : vector<24x40xf32>, vector<24x40xf32> -> vector<24x80xf32>
    %c0_317 = arith.constant 0 : index
    %c384_318 = arith.constant 384 : index
    %508 = vector.load %arg3[%c0_317, %c384_318] : memref<96x512xf32, #tpu.memory_space<vmem>>, vector<80x40xf32>
    %c3_319 = arith.constant 3 : index
    %c0_320 = arith.constant 0 : index
    %509 = vector.load %arg4[%c3_319, %c0_320] : memref<8x128xf32, #tpu.memory_space<vmem>>, vector<1x40xf32>
    %cst_321 = arith.constant dense<0.000000e+00> : vector<24x40xf32>
    %510 = tpu.matmul %507, %508, %cst_321 {dimension_numbers = #tpu.dot_dimension_numbers<[1], [0], [0], [1], [0, 0, 1, 1], [], []>} : vector<24x80xf32>, vector<80x40xf32>, vector<24x40xf32> -> vector<24x40xf32>
    %511 = vector.broadcast %509 : vector<1x40xf32> to vector<24x40xf32>
    %512 = arith.addf %510, %511 : vector<24x40xf32>
    %cst_322 = arith.constant 0.000000e+00 : f32
    %513 = vector.broadcast %cst_322 : f32 to vector<24x40xf32>
    %514 = arith.maximumf %512, %513 : vector<24x40xf32>
    %515 = arith.addf %514, %502 : vector<24x40xf32>
    %cst_323 = arith.constant 0.000000e+00 : f32
    %516 = vector.broadcast %cst_323 : f32 to vector<24x40xf32>
    %517 = arith.maximumf %515, %516 : vector<24x40xf32>
    %518 = arith.mulf %517, %4 : vector<24x40xf32>
    %519 = arith.addf %2, %518 : vector<24x40xf32>
    %c7 = arith.constant 7 : index
    %c0_324 = arith.constant 0 : index
    %c0_325 = arith.constant 0 : index
    %520 = vector.load %arg6[%c7, %c0_324, %c0_325] : memref<12x24x40xf32, #tpu.memory_space<vmem>>, vector<1x24x40xf32>
    %521 = vector.shape_cast %520 : vector<1x24x40xf32> to vector<24x40xf32>
    %cst_326 = arith.constant 5.000000e-01 : f32
    %522 = vector.broadcast %cst_326 : f32 to vector<24x40xf32>
    %523 = arith.cmpf ogt, %521, %522 : vector<24x40xf32>
    %524 = arith.select %523, %519, %459 : vector<24x40xi1>, vector<24x40xf32>
    %c0_327 = arith.constant 0 : index
    %c0_328 = arith.constant 0 : index
    %525 = vector.load %arg5[%c0_327, %c0_328] : memref<24x2xf32, #tpu.memory_space<vmem>>, vector<24x1xf32>
    %c1_i32_329 = arith.constant 1 : i32
    %526 = tpu.dynamic_rotate %524 by %c1_i32_329 dim 0 : vector<24x40xf32>, i32 -> vector<24x40xf32>
    %527 = vector.broadcast %525 : vector<24x1xf32> to vector<24x40xf32>
    %528 = arith.mulf %526, %527 : vector<24x40xf32>
    %529 = tpu.concatenate %528, %524 in 1 : vector<24x40xf32>, vector<24x40xf32> -> vector<24x80xf32>
    %c0_330 = arith.constant 0 : index
    %c0_331 = arith.constant 0 : index
    %530 = vector.load %arg3[%c0_330, %c0_331] : memref<96x512xf32, #tpu.memory_space<vmem>>, vector<80x96xf32>
    %c0_332 = arith.constant 0 : index
    %c0_333 = arith.constant 0 : index
    %531 = vector.load %arg4[%c0_332, %c0_333] : memref<8x128xf32, #tpu.memory_space<vmem>>, vector<1x96xf32>
    %cst_334 = arith.constant dense<0.000000e+00> : vector<24x96xf32>
    %532 = tpu.matmul %529, %530, %cst_334 {dimension_numbers = #tpu.dot_dimension_numbers<[1], [0], [0], [1], [0, 0, 1, 1], [], []>} : vector<24x80xf32>, vector<80x96xf32>, vector<24x96xf32> -> vector<24x96xf32>
    %533 = vector.broadcast %531 : vector<1x96xf32> to vector<24x96xf32>
    %534 = arith.addf %532, %533 : vector<24x96xf32>
    %535 = vector.extract_strided_slice %534 {offsets = [0, 0], sizes = [24, 48], strides = [1, 1]} : vector<24x96xf32> to vector<24x48xf32>
    %cst_335 = arith.constant 0.000000e+00 : f32
    %536 = vector.broadcast %cst_335 : f32 to vector<24x48xf32>
    %537 = arith.maximumf %535, %536 : vector<24x48xf32>
    %538 = vector.extract_strided_slice %534 {offsets = [0, 48], sizes = [24, 48], strides = [1, 1]} : vector<24x96xf32> to vector<24x48xf32>
    %c0_336 = arith.constant 0 : index
    %c0_337 = arith.constant 0 : index
    %539 = vector.load %arg5[%c0_336, %c0_337] : memref<24x2xf32, #tpu.memory_space<vmem>>, vector<24x1xf32>
    %c1_i32_338 = arith.constant 1 : i32
    %540 = tpu.dynamic_rotate %537 by %c1_i32_338 dim 0 : vector<24x48xf32>, i32 -> vector<24x48xf32>
    %541 = vector.broadcast %539 : vector<24x1xf32> to vector<24x48xf32>
    %542 = arith.mulf %540, %541 : vector<24x48xf32>
    %543 = tpu.concatenate %542, %537 in 1 : vector<24x48xf32>, vector<24x48xf32> -> vector<24x96xf32>
    %c0_339 = arith.constant 0 : index
    %c128_340 = arith.constant 128 : index
    %544 = vector.load %arg3[%c0_339, %c128_340] : memref<96x512xf32, #tpu.memory_space<vmem>>, vector<96x48xf32>
    %c1_341 = arith.constant 1 : index
    %c0_342 = arith.constant 0 : index
    %545 = vector.load %arg4[%c1_341, %c0_342] : memref<8x128xf32, #tpu.memory_space<vmem>>, vector<1x48xf32>
    %cst_343 = arith.constant dense<0.000000e+00> : vector<24x48xf32>
    %546 = tpu.matmul %543, %544, %cst_343 {dimension_numbers = #tpu.dot_dimension_numbers<[1], [0], [0], [1], [0, 0, 1, 1], [], []>} : vector<24x96xf32>, vector<96x48xf32>, vector<24x48xf32> -> vector<24x48xf32>
    %547 = vector.broadcast %545 : vector<1x48xf32> to vector<24x48xf32>
    %548 = arith.addf %546, %547 : vector<24x48xf32>
    %cst_344 = arith.constant 0.000000e+00 : f32
    %549 = vector.broadcast %cst_344 : f32 to vector<24x48xf32>
    %550 = arith.maximumf %548, %549 : vector<24x48xf32>
    %551 = arith.addf %550, %538 : vector<24x48xf32>
    %cst_345 = arith.constant 0.000000e+00 : f32
    %552 = vector.broadcast %cst_345 : f32 to vector<24x48xf32>
    %553 = arith.maximumf %551, %552 : vector<24x48xf32>
    %c0_346 = arith.constant 0 : index
    %c1_347 = arith.constant 1 : index
    %554 = vector.load %arg5[%c0_346, %c1_347] : memref<24x2xf32, #tpu.memory_space<vmem>>, vector<24x1xf32>
    %c2_i32_348 = arith.constant 2 : i32
    %555 = tpu.dynamic_rotate %553 by %c2_i32_348 dim 0 : vector<24x48xf32>, i32 -> vector<24x48xf32>
    %556 = vector.broadcast %554 : vector<24x1xf32> to vector<24x48xf32>
    %557 = arith.mulf %555, %556 : vector<24x48xf32>
    %558 = tpu.concatenate %557, %553 in 1 : vector<24x48xf32>, vector<24x48xf32> -> vector<24x96xf32>
    %c0_349 = arith.constant 0 : index
    %c256_350 = arith.constant 256 : index
    %559 = vector.load %arg3[%c0_349, %c256_350] : memref<96x512xf32, #tpu.memory_space<vmem>>, vector<96x80xf32>
    %c2_351 = arith.constant 2 : index
    %c0_352 = arith.constant 0 : index
    %560 = vector.load %arg4[%c2_351, %c0_352] : memref<8x128xf32, #tpu.memory_space<vmem>>, vector<1x80xf32>
    %cst_353 = arith.constant dense<0.000000e+00> : vector<24x80xf32>
    %561 = tpu.matmul %558, %559, %cst_353 {dimension_numbers = #tpu.dot_dimension_numbers<[1], [0], [0], [1], [0, 0, 1, 1], [], []>} : vector<24x96xf32>, vector<96x80xf32>, vector<24x80xf32> -> vector<24x80xf32>
    %562 = vector.broadcast %560 : vector<1x80xf32> to vector<24x80xf32>
    %563 = arith.addf %561, %562 : vector<24x80xf32>
    %564 = vector.extract_strided_slice %563 {offsets = [0, 0], sizes = [24, 40], strides = [1, 1]} : vector<24x80xf32> to vector<24x40xf32>
    %cst_354 = arith.constant 0.000000e+00 : f32
    %565 = vector.broadcast %cst_354 : f32 to vector<24x40xf32>
    %566 = arith.maximumf %564, %565 : vector<24x40xf32>
    %567 = vector.extract_strided_slice %563 {offsets = [0, 40], sizes = [24, 40], strides = [1, 1]} : vector<24x80xf32> to vector<24x40xf32>
    %c0_355 = arith.constant 0 : index
    %c1_356 = arith.constant 1 : index
    %568 = vector.load %arg5[%c0_355, %c1_356] : memref<24x2xf32, #tpu.memory_space<vmem>>, vector<24x1xf32>
    %c2_i32_357 = arith.constant 2 : i32
    %569 = tpu.dynamic_rotate %566 by %c2_i32_357 dim 0 : vector<24x40xf32>, i32 -> vector<24x40xf32>
    %570 = vector.broadcast %568 : vector<24x1xf32> to vector<24x40xf32>
    %571 = arith.mulf %569, %570 : vector<24x40xf32>
    %572 = tpu.concatenate %571, %566 in 1 : vector<24x40xf32>, vector<24x40xf32> -> vector<24x80xf32>
    %c0_358 = arith.constant 0 : index
    %c384_359 = arith.constant 384 : index
    %573 = vector.load %arg3[%c0_358, %c384_359] : memref<96x512xf32, #tpu.memory_space<vmem>>, vector<80x40xf32>
    %c3_360 = arith.constant 3 : index
    %c0_361 = arith.constant 0 : index
    %574 = vector.load %arg4[%c3_360, %c0_361] : memref<8x128xf32, #tpu.memory_space<vmem>>, vector<1x40xf32>
    %cst_362 = arith.constant dense<0.000000e+00> : vector<24x40xf32>
    %575 = tpu.matmul %572, %573, %cst_362 {dimension_numbers = #tpu.dot_dimension_numbers<[1], [0], [0], [1], [0, 0, 1, 1], [], []>} : vector<24x80xf32>, vector<80x40xf32>, vector<24x40xf32> -> vector<24x40xf32>
    %576 = vector.broadcast %574 : vector<1x40xf32> to vector<24x40xf32>
    %577 = arith.addf %575, %576 : vector<24x40xf32>
    %cst_363 = arith.constant 0.000000e+00 : f32
    %578 = vector.broadcast %cst_363 : f32 to vector<24x40xf32>
    %579 = arith.maximumf %577, %578 : vector<24x40xf32>
    %580 = arith.addf %579, %567 : vector<24x40xf32>
    %cst_364 = arith.constant 0.000000e+00 : f32
    %581 = vector.broadcast %cst_364 : f32 to vector<24x40xf32>
    %582 = arith.maximumf %580, %581 : vector<24x40xf32>
    %583 = arith.mulf %582, %4 : vector<24x40xf32>
    %584 = arith.addf %2, %583 : vector<24x40xf32>
    %c8 = arith.constant 8 : index
    %c0_365 = arith.constant 0 : index
    %c0_366 = arith.constant 0 : index
    %585 = vector.load %arg6[%c8, %c0_365, %c0_366] : memref<12x24x40xf32, #tpu.memory_space<vmem>>, vector<1x24x40xf32>
    %586 = vector.shape_cast %585 : vector<1x24x40xf32> to vector<24x40xf32>
    %cst_367 = arith.constant 5.000000e-01 : f32
    %587 = vector.broadcast %cst_367 : f32 to vector<24x40xf32>
    %588 = arith.cmpf ogt, %586, %587 : vector<24x40xf32>
    %589 = arith.select %588, %584, %524 : vector<24x40xi1>, vector<24x40xf32>
    %c0_368 = arith.constant 0 : index
    %c0_369 = arith.constant 0 : index
    %590 = vector.load %arg5[%c0_368, %c0_369] : memref<24x2xf32, #tpu.memory_space<vmem>>, vector<24x1xf32>
    %c1_i32_370 = arith.constant 1 : i32
    %591 = tpu.dynamic_rotate %589 by %c1_i32_370 dim 0 : vector<24x40xf32>, i32 -> vector<24x40xf32>
    %592 = vector.broadcast %590 : vector<24x1xf32> to vector<24x40xf32>
    %593 = arith.mulf %591, %592 : vector<24x40xf32>
    %594 = tpu.concatenate %593, %589 in 1 : vector<24x40xf32>, vector<24x40xf32> -> vector<24x80xf32>
    %c0_371 = arith.constant 0 : index
    %c0_372 = arith.constant 0 : index
    %595 = vector.load %arg3[%c0_371, %c0_372] : memref<96x512xf32, #tpu.memory_space<vmem>>, vector<80x96xf32>
    %c0_373 = arith.constant 0 : index
    %c0_374 = arith.constant 0 : index
    %596 = vector.load %arg4[%c0_373, %c0_374] : memref<8x128xf32, #tpu.memory_space<vmem>>, vector<1x96xf32>
    %cst_375 = arith.constant dense<0.000000e+00> : vector<24x96xf32>
    %597 = tpu.matmul %594, %595, %cst_375 {dimension_numbers = #tpu.dot_dimension_numbers<[1], [0], [0], [1], [0, 0, 1, 1], [], []>} : vector<24x80xf32>, vector<80x96xf32>, vector<24x96xf32> -> vector<24x96xf32>
    %598 = vector.broadcast %596 : vector<1x96xf32> to vector<24x96xf32>
    %599 = arith.addf %597, %598 : vector<24x96xf32>
    %600 = vector.extract_strided_slice %599 {offsets = [0, 0], sizes = [24, 48], strides = [1, 1]} : vector<24x96xf32> to vector<24x48xf32>
    %cst_376 = arith.constant 0.000000e+00 : f32
    %601 = vector.broadcast %cst_376 : f32 to vector<24x48xf32>
    %602 = arith.maximumf %600, %601 : vector<24x48xf32>
    %603 = vector.extract_strided_slice %599 {offsets = [0, 48], sizes = [24, 48], strides = [1, 1]} : vector<24x96xf32> to vector<24x48xf32>
    %c0_377 = arith.constant 0 : index
    %c0_378 = arith.constant 0 : index
    %604 = vector.load %arg5[%c0_377, %c0_378] : memref<24x2xf32, #tpu.memory_space<vmem>>, vector<24x1xf32>
    %c1_i32_379 = arith.constant 1 : i32
    %605 = tpu.dynamic_rotate %602 by %c1_i32_379 dim 0 : vector<24x48xf32>, i32 -> vector<24x48xf32>
    %606 = vector.broadcast %604 : vector<24x1xf32> to vector<24x48xf32>
    %607 = arith.mulf %605, %606 : vector<24x48xf32>
    %608 = tpu.concatenate %607, %602 in 1 : vector<24x48xf32>, vector<24x48xf32> -> vector<24x96xf32>
    %c0_380 = arith.constant 0 : index
    %c128_381 = arith.constant 128 : index
    %609 = vector.load %arg3[%c0_380, %c128_381] : memref<96x512xf32, #tpu.memory_space<vmem>>, vector<96x48xf32>
    %c1_382 = arith.constant 1 : index
    %c0_383 = arith.constant 0 : index
    %610 = vector.load %arg4[%c1_382, %c0_383] : memref<8x128xf32, #tpu.memory_space<vmem>>, vector<1x48xf32>
    %cst_384 = arith.constant dense<0.000000e+00> : vector<24x48xf32>
    %611 = tpu.matmul %608, %609, %cst_384 {dimension_numbers = #tpu.dot_dimension_numbers<[1], [0], [0], [1], [0, 0, 1, 1], [], []>} : vector<24x96xf32>, vector<96x48xf32>, vector<24x48xf32> -> vector<24x48xf32>
    %612 = vector.broadcast %610 : vector<1x48xf32> to vector<24x48xf32>
    %613 = arith.addf %611, %612 : vector<24x48xf32>
    %cst_385 = arith.constant 0.000000e+00 : f32
    %614 = vector.broadcast %cst_385 : f32 to vector<24x48xf32>
    %615 = arith.maximumf %613, %614 : vector<24x48xf32>
    %616 = arith.addf %615, %603 : vector<24x48xf32>
    %cst_386 = arith.constant 0.000000e+00 : f32
    %617 = vector.broadcast %cst_386 : f32 to vector<24x48xf32>
    %618 = arith.maximumf %616, %617 : vector<24x48xf32>
    %c0_387 = arith.constant 0 : index
    %c1_388 = arith.constant 1 : index
    %619 = vector.load %arg5[%c0_387, %c1_388] : memref<24x2xf32, #tpu.memory_space<vmem>>, vector<24x1xf32>
    %c2_i32_389 = arith.constant 2 : i32
    %620 = tpu.dynamic_rotate %618 by %c2_i32_389 dim 0 : vector<24x48xf32>, i32 -> vector<24x48xf32>
    %621 = vector.broadcast %619 : vector<24x1xf32> to vector<24x48xf32>
    %622 = arith.mulf %620, %621 : vector<24x48xf32>
    %623 = tpu.concatenate %622, %618 in 1 : vector<24x48xf32>, vector<24x48xf32> -> vector<24x96xf32>
    %c0_390 = arith.constant 0 : index
    %c256_391 = arith.constant 256 : index
    %624 = vector.load %arg3[%c0_390, %c256_391] : memref<96x512xf32, #tpu.memory_space<vmem>>, vector<96x80xf32>
    %c2_392 = arith.constant 2 : index
    %c0_393 = arith.constant 0 : index
    %625 = vector.load %arg4[%c2_392, %c0_393] : memref<8x128xf32, #tpu.memory_space<vmem>>, vector<1x80xf32>
    %cst_394 = arith.constant dense<0.000000e+00> : vector<24x80xf32>
    %626 = tpu.matmul %623, %624, %cst_394 {dimension_numbers = #tpu.dot_dimension_numbers<[1], [0], [0], [1], [0, 0, 1, 1], [], []>} : vector<24x96xf32>, vector<96x80xf32>, vector<24x80xf32> -> vector<24x80xf32>
    %627 = vector.broadcast %625 : vector<1x80xf32> to vector<24x80xf32>
    %628 = arith.addf %626, %627 : vector<24x80xf32>
    %629 = vector.extract_strided_slice %628 {offsets = [0, 0], sizes = [24, 40], strides = [1, 1]} : vector<24x80xf32> to vector<24x40xf32>
    %cst_395 = arith.constant 0.000000e+00 : f32
    %630 = vector.broadcast %cst_395 : f32 to vector<24x40xf32>
    %631 = arith.maximumf %629, %630 : vector<24x40xf32>
    %632 = vector.extract_strided_slice %628 {offsets = [0, 40], sizes = [24, 40], strides = [1, 1]} : vector<24x80xf32> to vector<24x40xf32>
    %c0_396 = arith.constant 0 : index
    %c1_397 = arith.constant 1 : index
    %633 = vector.load %arg5[%c0_396, %c1_397] : memref<24x2xf32, #tpu.memory_space<vmem>>, vector<24x1xf32>
    %c2_i32_398 = arith.constant 2 : i32
    %634 = tpu.dynamic_rotate %631 by %c2_i32_398 dim 0 : vector<24x40xf32>, i32 -> vector<24x40xf32>
    %635 = vector.broadcast %633 : vector<24x1xf32> to vector<24x40xf32>
    %636 = arith.mulf %634, %635 : vector<24x40xf32>
    %637 = tpu.concatenate %636, %631 in 1 : vector<24x40xf32>, vector<24x40xf32> -> vector<24x80xf32>
    %c0_399 = arith.constant 0 : index
    %c384_400 = arith.constant 384 : index
    %638 = vector.load %arg3[%c0_399, %c384_400] : memref<96x512xf32, #tpu.memory_space<vmem>>, vector<80x40xf32>
    %c3_401 = arith.constant 3 : index
    %c0_402 = arith.constant 0 : index
    %639 = vector.load %arg4[%c3_401, %c0_402] : memref<8x128xf32, #tpu.memory_space<vmem>>, vector<1x40xf32>
    %cst_403 = arith.constant dense<0.000000e+00> : vector<24x40xf32>
    %640 = tpu.matmul %637, %638, %cst_403 {dimension_numbers = #tpu.dot_dimension_numbers<[1], [0], [0], [1], [0, 0, 1, 1], [], []>} : vector<24x80xf32>, vector<80x40xf32>, vector<24x40xf32> -> vector<24x40xf32>
    %641 = vector.broadcast %639 : vector<1x40xf32> to vector<24x40xf32>
    %642 = arith.addf %640, %641 : vector<24x40xf32>
    %cst_404 = arith.constant 0.000000e+00 : f32
    %643 = vector.broadcast %cst_404 : f32 to vector<24x40xf32>
    %644 = arith.maximumf %642, %643 : vector<24x40xf32>
    %645 = arith.addf %644, %632 : vector<24x40xf32>
    %cst_405 = arith.constant 0.000000e+00 : f32
    %646 = vector.broadcast %cst_405 : f32 to vector<24x40xf32>
    %647 = arith.maximumf %645, %646 : vector<24x40xf32>
    %648 = arith.mulf %647, %4 : vector<24x40xf32>
    %649 = arith.addf %2, %648 : vector<24x40xf32>
    %c9 = arith.constant 9 : index
    %c0_406 = arith.constant 0 : index
    %c0_407 = arith.constant 0 : index
    %650 = vector.load %arg6[%c9, %c0_406, %c0_407] : memref<12x24x40xf32, #tpu.memory_space<vmem>>, vector<1x24x40xf32>
    %651 = vector.shape_cast %650 : vector<1x24x40xf32> to vector<24x40xf32>
    %cst_408 = arith.constant 5.000000e-01 : f32
    %652 = vector.broadcast %cst_408 : f32 to vector<24x40xf32>
    %653 = arith.cmpf ogt, %651, %652 : vector<24x40xf32>
    %654 = arith.select %653, %649, %589 : vector<24x40xi1>, vector<24x40xf32>
    %c0_409 = arith.constant 0 : index
    %c0_410 = arith.constant 0 : index
    %655 = vector.load %arg5[%c0_409, %c0_410] : memref<24x2xf32, #tpu.memory_space<vmem>>, vector<24x1xf32>
    %c1_i32_411 = arith.constant 1 : i32
    %656 = tpu.dynamic_rotate %654 by %c1_i32_411 dim 0 : vector<24x40xf32>, i32 -> vector<24x40xf32>
    %657 = vector.broadcast %655 : vector<24x1xf32> to vector<24x40xf32>
    %658 = arith.mulf %656, %657 : vector<24x40xf32>
    %659 = tpu.concatenate %658, %654 in 1 : vector<24x40xf32>, vector<24x40xf32> -> vector<24x80xf32>
    %c0_412 = arith.constant 0 : index
    %c0_413 = arith.constant 0 : index
    %660 = vector.load %arg3[%c0_412, %c0_413] : memref<96x512xf32, #tpu.memory_space<vmem>>, vector<80x96xf32>
    %c0_414 = arith.constant 0 : index
    %c0_415 = arith.constant 0 : index
    %661 = vector.load %arg4[%c0_414, %c0_415] : memref<8x128xf32, #tpu.memory_space<vmem>>, vector<1x96xf32>
    %cst_416 = arith.constant dense<0.000000e+00> : vector<24x96xf32>
    %662 = tpu.matmul %659, %660, %cst_416 {dimension_numbers = #tpu.dot_dimension_numbers<[1], [0], [0], [1], [0, 0, 1, 1], [], []>} : vector<24x80xf32>, vector<80x96xf32>, vector<24x96xf32> -> vector<24x96xf32>
    %663 = vector.broadcast %661 : vector<1x96xf32> to vector<24x96xf32>
    %664 = arith.addf %662, %663 : vector<24x96xf32>
    %665 = vector.extract_strided_slice %664 {offsets = [0, 0], sizes = [24, 48], strides = [1, 1]} : vector<24x96xf32> to vector<24x48xf32>
    %cst_417 = arith.constant 0.000000e+00 : f32
    %666 = vector.broadcast %cst_417 : f32 to vector<24x48xf32>
    %667 = arith.maximumf %665, %666 : vector<24x48xf32>
    %668 = vector.extract_strided_slice %664 {offsets = [0, 48], sizes = [24, 48], strides = [1, 1]} : vector<24x96xf32> to vector<24x48xf32>
    %c0_418 = arith.constant 0 : index
    %c0_419 = arith.constant 0 : index
    %669 = vector.load %arg5[%c0_418, %c0_419] : memref<24x2xf32, #tpu.memory_space<vmem>>, vector<24x1xf32>
    %c1_i32_420 = arith.constant 1 : i32
    %670 = tpu.dynamic_rotate %667 by %c1_i32_420 dim 0 : vector<24x48xf32>, i32 -> vector<24x48xf32>
    %671 = vector.broadcast %669 : vector<24x1xf32> to vector<24x48xf32>
    %672 = arith.mulf %670, %671 : vector<24x48xf32>
    %673 = tpu.concatenate %672, %667 in 1 : vector<24x48xf32>, vector<24x48xf32> -> vector<24x96xf32>
    %c0_421 = arith.constant 0 : index
    %c128_422 = arith.constant 128 : index
    %674 = vector.load %arg3[%c0_421, %c128_422] : memref<96x512xf32, #tpu.memory_space<vmem>>, vector<96x48xf32>
    %c1_423 = arith.constant 1 : index
    %c0_424 = arith.constant 0 : index
    %675 = vector.load %arg4[%c1_423, %c0_424] : memref<8x128xf32, #tpu.memory_space<vmem>>, vector<1x48xf32>
    %cst_425 = arith.constant dense<0.000000e+00> : vector<24x48xf32>
    %676 = tpu.matmul %673, %674, %cst_425 {dimension_numbers = #tpu.dot_dimension_numbers<[1], [0], [0], [1], [0, 0, 1, 1], [], []>} : vector<24x96xf32>, vector<96x48xf32>, vector<24x48xf32> -> vector<24x48xf32>
    %677 = vector.broadcast %675 : vector<1x48xf32> to vector<24x48xf32>
    %678 = arith.addf %676, %677 : vector<24x48xf32>
    %cst_426 = arith.constant 0.000000e+00 : f32
    %679 = vector.broadcast %cst_426 : f32 to vector<24x48xf32>
    %680 = arith.maximumf %678, %679 : vector<24x48xf32>
    %681 = arith.addf %680, %668 : vector<24x48xf32>
    %cst_427 = arith.constant 0.000000e+00 : f32
    %682 = vector.broadcast %cst_427 : f32 to vector<24x48xf32>
    %683 = arith.maximumf %681, %682 : vector<24x48xf32>
    %c0_428 = arith.constant 0 : index
    %c1_429 = arith.constant 1 : index
    %684 = vector.load %arg5[%c0_428, %c1_429] : memref<24x2xf32, #tpu.memory_space<vmem>>, vector<24x1xf32>
    %c2_i32_430 = arith.constant 2 : i32
    %685 = tpu.dynamic_rotate %683 by %c2_i32_430 dim 0 : vector<24x48xf32>, i32 -> vector<24x48xf32>
    %686 = vector.broadcast %684 : vector<24x1xf32> to vector<24x48xf32>
    %687 = arith.mulf %685, %686 : vector<24x48xf32>
    %688 = tpu.concatenate %687, %683 in 1 : vector<24x48xf32>, vector<24x48xf32> -> vector<24x96xf32>
    %c0_431 = arith.constant 0 : index
    %c256_432 = arith.constant 256 : index
    %689 = vector.load %arg3[%c0_431, %c256_432] : memref<96x512xf32, #tpu.memory_space<vmem>>, vector<96x80xf32>
    %c2_433 = arith.constant 2 : index
    %c0_434 = arith.constant 0 : index
    %690 = vector.load %arg4[%c2_433, %c0_434] : memref<8x128xf32, #tpu.memory_space<vmem>>, vector<1x80xf32>
    %cst_435 = arith.constant dense<0.000000e+00> : vector<24x80xf32>
    %691 = tpu.matmul %688, %689, %cst_435 {dimension_numbers = #tpu.dot_dimension_numbers<[1], [0], [0], [1], [0, 0, 1, 1], [], []>} : vector<24x96xf32>, vector<96x80xf32>, vector<24x80xf32> -> vector<24x80xf32>
    %692 = vector.broadcast %690 : vector<1x80xf32> to vector<24x80xf32>
    %693 = arith.addf %691, %692 : vector<24x80xf32>
    %694 = vector.extract_strided_slice %693 {offsets = [0, 0], sizes = [24, 40], strides = [1, 1]} : vector<24x80xf32> to vector<24x40xf32>
    %cst_436 = arith.constant 0.000000e+00 : f32
    %695 = vector.broadcast %cst_436 : f32 to vector<24x40xf32>
    %696 = arith.maximumf %694, %695 : vector<24x40xf32>
    %697 = vector.extract_strided_slice %693 {offsets = [0, 40], sizes = [24, 40], strides = [1, 1]} : vector<24x80xf32> to vector<24x40xf32>
    %c0_437 = arith.constant 0 : index
    %c1_438 = arith.constant 1 : index
    %698 = vector.load %arg5[%c0_437, %c1_438] : memref<24x2xf32, #tpu.memory_space<vmem>>, vector<24x1xf32>
    %c2_i32_439 = arith.constant 2 : i32
    %699 = tpu.dynamic_rotate %696 by %c2_i32_439 dim 0 : vector<24x40xf32>, i32 -> vector<24x40xf32>
    %700 = vector.broadcast %698 : vector<24x1xf32> to vector<24x40xf32>
    %701 = arith.mulf %699, %700 : vector<24x40xf32>
    %702 = tpu.concatenate %701, %696 in 1 : vector<24x40xf32>, vector<24x40xf32> -> vector<24x80xf32>
    %c0_440 = arith.constant 0 : index
    %c384_441 = arith.constant 384 : index
    %703 = vector.load %arg3[%c0_440, %c384_441] : memref<96x512xf32, #tpu.memory_space<vmem>>, vector<80x40xf32>
    %c3_442 = arith.constant 3 : index
    %c0_443 = arith.constant 0 : index
    %704 = vector.load %arg4[%c3_442, %c0_443] : memref<8x128xf32, #tpu.memory_space<vmem>>, vector<1x40xf32>
    %cst_444 = arith.constant dense<0.000000e+00> : vector<24x40xf32>
    %705 = tpu.matmul %702, %703, %cst_444 {dimension_numbers = #tpu.dot_dimension_numbers<[1], [0], [0], [1], [0, 0, 1, 1], [], []>} : vector<24x80xf32>, vector<80x40xf32>, vector<24x40xf32> -> vector<24x40xf32>
    %706 = vector.broadcast %704 : vector<1x40xf32> to vector<24x40xf32>
    %707 = arith.addf %705, %706 : vector<24x40xf32>
    %cst_445 = arith.constant 0.000000e+00 : f32
    %708 = vector.broadcast %cst_445 : f32 to vector<24x40xf32>
    %709 = arith.maximumf %707, %708 : vector<24x40xf32>
    %710 = arith.addf %709, %697 : vector<24x40xf32>
    %cst_446 = arith.constant 0.000000e+00 : f32
    %711 = vector.broadcast %cst_446 : f32 to vector<24x40xf32>
    %712 = arith.maximumf %710, %711 : vector<24x40xf32>
    %713 = arith.mulf %712, %4 : vector<24x40xf32>
    %714 = arith.addf %2, %713 : vector<24x40xf32>
    %c10 = arith.constant 10 : index
    %c0_447 = arith.constant 0 : index
    %c0_448 = arith.constant 0 : index
    %715 = vector.load %arg6[%c10, %c0_447, %c0_448] : memref<12x24x40xf32, #tpu.memory_space<vmem>>, vector<1x24x40xf32>
    %716 = vector.shape_cast %715 : vector<1x24x40xf32> to vector<24x40xf32>
    %cst_449 = arith.constant 5.000000e-01 : f32
    %717 = vector.broadcast %cst_449 : f32 to vector<24x40xf32>
    %718 = arith.cmpf ogt, %716, %717 : vector<24x40xf32>
    %719 = arith.select %718, %714, %654 : vector<24x40xi1>, vector<24x40xf32>
    %c0_450 = arith.constant 0 : index
    %c0_451 = arith.constant 0 : index
    %720 = vector.load %arg5[%c0_450, %c0_451] : memref<24x2xf32, #tpu.memory_space<vmem>>, vector<24x1xf32>
    %c1_i32_452 = arith.constant 1 : i32
    %721 = tpu.dynamic_rotate %719 by %c1_i32_452 dim 0 : vector<24x40xf32>, i32 -> vector<24x40xf32>
    %722 = vector.broadcast %720 : vector<24x1xf32> to vector<24x40xf32>
    %723 = arith.mulf %721, %722 : vector<24x40xf32>
    %724 = tpu.concatenate %723, %719 in 1 : vector<24x40xf32>, vector<24x40xf32> -> vector<24x80xf32>
    %c0_453 = arith.constant 0 : index
    %c0_454 = arith.constant 0 : index
    %725 = vector.load %arg3[%c0_453, %c0_454] : memref<96x512xf32, #tpu.memory_space<vmem>>, vector<80x96xf32>
    %c0_455 = arith.constant 0 : index
    %c0_456 = arith.constant 0 : index
    %726 = vector.load %arg4[%c0_455, %c0_456] : memref<8x128xf32, #tpu.memory_space<vmem>>, vector<1x96xf32>
    %cst_457 = arith.constant dense<0.000000e+00> : vector<24x96xf32>
    %727 = tpu.matmul %724, %725, %cst_457 {dimension_numbers = #tpu.dot_dimension_numbers<[1], [0], [0], [1], [0, 0, 1, 1], [], []>} : vector<24x80xf32>, vector<80x96xf32>, vector<24x96xf32> -> vector<24x96xf32>
    %728 = vector.broadcast %726 : vector<1x96xf32> to vector<24x96xf32>
    %729 = arith.addf %727, %728 : vector<24x96xf32>
    %730 = vector.extract_strided_slice %729 {offsets = [0, 0], sizes = [24, 48], strides = [1, 1]} : vector<24x96xf32> to vector<24x48xf32>
    %cst_458 = arith.constant 0.000000e+00 : f32
    %731 = vector.broadcast %cst_458 : f32 to vector<24x48xf32>
    %732 = arith.maximumf %730, %731 : vector<24x48xf32>
    %733 = vector.extract_strided_slice %729 {offsets = [0, 48], sizes = [24, 48], strides = [1, 1]} : vector<24x96xf32> to vector<24x48xf32>
    %c0_459 = arith.constant 0 : index
    %c0_460 = arith.constant 0 : index
    %734 = vector.load %arg5[%c0_459, %c0_460] : memref<24x2xf32, #tpu.memory_space<vmem>>, vector<24x1xf32>
    %c1_i32_461 = arith.constant 1 : i32
    %735 = tpu.dynamic_rotate %732 by %c1_i32_461 dim 0 : vector<24x48xf32>, i32 -> vector<24x48xf32>
    %736 = vector.broadcast %734 : vector<24x1xf32> to vector<24x48xf32>
    %737 = arith.mulf %735, %736 : vector<24x48xf32>
    %738 = tpu.concatenate %737, %732 in 1 : vector<24x48xf32>, vector<24x48xf32> -> vector<24x96xf32>
    %c0_462 = arith.constant 0 : index
    %c128_463 = arith.constant 128 : index
    %739 = vector.load %arg3[%c0_462, %c128_463] : memref<96x512xf32, #tpu.memory_space<vmem>>, vector<96x48xf32>
    %c1_464 = arith.constant 1 : index
    %c0_465 = arith.constant 0 : index
    %740 = vector.load %arg4[%c1_464, %c0_465] : memref<8x128xf32, #tpu.memory_space<vmem>>, vector<1x48xf32>
    %cst_466 = arith.constant dense<0.000000e+00> : vector<24x48xf32>
    %741 = tpu.matmul %738, %739, %cst_466 {dimension_numbers = #tpu.dot_dimension_numbers<[1], [0], [0], [1], [0, 0, 1, 1], [], []>} : vector<24x96xf32>, vector<96x48xf32>, vector<24x48xf32> -> vector<24x48xf32>
    %742 = vector.broadcast %740 : vector<1x48xf32> to vector<24x48xf32>
    %743 = arith.addf %741, %742 : vector<24x48xf32>
    %cst_467 = arith.constant 0.000000e+00 : f32
    %744 = vector.broadcast %cst_467 : f32 to vector<24x48xf32>
    %745 = arith.maximumf %743, %744 : vector<24x48xf32>
    %746 = arith.addf %745, %733 : vector<24x48xf32>
    %cst_468 = arith.constant 0.000000e+00 : f32
    %747 = vector.broadcast %cst_468 : f32 to vector<24x48xf32>
    %748 = arith.maximumf %746, %747 : vector<24x48xf32>
    %c0_469 = arith.constant 0 : index
    %c1_470 = arith.constant 1 : index
    %749 = vector.load %arg5[%c0_469, %c1_470] : memref<24x2xf32, #tpu.memory_space<vmem>>, vector<24x1xf32>
    %c2_i32_471 = arith.constant 2 : i32
    %750 = tpu.dynamic_rotate %748 by %c2_i32_471 dim 0 : vector<24x48xf32>, i32 -> vector<24x48xf32>
    %751 = vector.broadcast %749 : vector<24x1xf32> to vector<24x48xf32>
    %752 = arith.mulf %750, %751 : vector<24x48xf32>
    %753 = tpu.concatenate %752, %748 in 1 : vector<24x48xf32>, vector<24x48xf32> -> vector<24x96xf32>
    %c0_472 = arith.constant 0 : index
    %c256_473 = arith.constant 256 : index
    %754 = vector.load %arg3[%c0_472, %c256_473] : memref<96x512xf32, #tpu.memory_space<vmem>>, vector<96x80xf32>
    %c2_474 = arith.constant 2 : index
    %c0_475 = arith.constant 0 : index
    %755 = vector.load %arg4[%c2_474, %c0_475] : memref<8x128xf32, #tpu.memory_space<vmem>>, vector<1x80xf32>
    %cst_476 = arith.constant dense<0.000000e+00> : vector<24x80xf32>
    %756 = tpu.matmul %753, %754, %cst_476 {dimension_numbers = #tpu.dot_dimension_numbers<[1], [0], [0], [1], [0, 0, 1, 1], [], []>} : vector<24x96xf32>, vector<96x80xf32>, vector<24x80xf32> -> vector<24x80xf32>
    %757 = vector.broadcast %755 : vector<1x80xf32> to vector<24x80xf32>
    %758 = arith.addf %756, %757 : vector<24x80xf32>
    %759 = vector.extract_strided_slice %758 {offsets = [0, 0], sizes = [24, 40], strides = [1, 1]} : vector<24x80xf32> to vector<24x40xf32>
    %cst_477 = arith.constant 0.000000e+00 : f32
    %760 = vector.broadcast %cst_477 : f32 to vector<24x40xf32>
    %761 = arith.maximumf %759, %760 : vector<24x40xf32>
    %762 = vector.extract_strided_slice %758 {offsets = [0, 40], sizes = [24, 40], strides = [1, 1]} : vector<24x80xf32> to vector<24x40xf32>
    %c0_478 = arith.constant 0 : index
    %c1_479 = arith.constant 1 : index
    %763 = vector.load %arg5[%c0_478, %c1_479] : memref<24x2xf32, #tpu.memory_space<vmem>>, vector<24x1xf32>
    %c2_i32_480 = arith.constant 2 : i32
    %764 = tpu.dynamic_rotate %761 by %c2_i32_480 dim 0 : vector<24x40xf32>, i32 -> vector<24x40xf32>
    %765 = vector.broadcast %763 : vector<24x1xf32> to vector<24x40xf32>
    %766 = arith.mulf %764, %765 : vector<24x40xf32>
    %767 = tpu.concatenate %766, %761 in 1 : vector<24x40xf32>, vector<24x40xf32> -> vector<24x80xf32>
    %c0_481 = arith.constant 0 : index
    %c384_482 = arith.constant 384 : index
    %768 = vector.load %arg3[%c0_481, %c384_482] : memref<96x512xf32, #tpu.memory_space<vmem>>, vector<80x40xf32>
    %c3_483 = arith.constant 3 : index
    %c0_484 = arith.constant 0 : index
    %769 = vector.load %arg4[%c3_483, %c0_484] : memref<8x128xf32, #tpu.memory_space<vmem>>, vector<1x40xf32>
    %cst_485 = arith.constant dense<0.000000e+00> : vector<24x40xf32>
    %770 = tpu.matmul %767, %768, %cst_485 {dimension_numbers = #tpu.dot_dimension_numbers<[1], [0], [0], [1], [0, 0, 1, 1], [], []>} : vector<24x80xf32>, vector<80x40xf32>, vector<24x40xf32> -> vector<24x40xf32>
    %771 = vector.broadcast %769 : vector<1x40xf32> to vector<24x40xf32>
    %772 = arith.addf %770, %771 : vector<24x40xf32>
    %cst_486 = arith.constant 0.000000e+00 : f32
    %773 = vector.broadcast %cst_486 : f32 to vector<24x40xf32>
    %774 = arith.maximumf %772, %773 : vector<24x40xf32>
    %775 = arith.addf %774, %762 : vector<24x40xf32>
    %cst_487 = arith.constant 0.000000e+00 : f32
    %776 = vector.broadcast %cst_487 : f32 to vector<24x40xf32>
    %777 = arith.maximumf %775, %776 : vector<24x40xf32>
    %778 = arith.mulf %777, %4 : vector<24x40xf32>
    %779 = arith.addf %2, %778 : vector<24x40xf32>
    %c11 = arith.constant 11 : index
    %c0_488 = arith.constant 0 : index
    %c0_489 = arith.constant 0 : index
    %780 = vector.load %arg6[%c11, %c0_488, %c0_489] : memref<12x24x40xf32, #tpu.memory_space<vmem>>, vector<1x24x40xf32>
    %781 = vector.shape_cast %780 : vector<1x24x40xf32> to vector<24x40xf32>
    %cst_490 = arith.constant 5.000000e-01 : f32
    %782 = vector.broadcast %cst_490 : f32 to vector<24x40xf32>
    %783 = arith.cmpf ogt, %781, %782 : vector<24x40xf32>
    %784 = arith.select %783, %779, %719 : vector<24x40xi1>, vector<24x40xf32>
    %c0_491 = arith.constant 0 : index
    %c0_492 = arith.constant 0 : index
    %785 = vector.load %arg7[%c0_491, %c0_492] : memref<24x40xf32, #tpu.memory_space<vmem>>, vector<24x40xf32>
    tpu.vector_store %arg7[%c0_491, %c0_492], %784 {strides = array<i32>} : memref<24x40xf32, #tpu.memory_space<vmem>>, vector<24x40xf32>,
    return
  }
  func.func @transform_0(%arg0: i32) -> (i32, i32) {
    %c0_i32 = arith.constant 0 : i32
    %c0_i32_0 = arith.constant 0 : i32
    %c0_i32_1 = arith.constant 0 : i32
    return %c0_i32, %c0_i32_0 : i32, i32
  }
  func.func @transform_1(%arg0: i32) -> (i32, i32) {
    %c0_i32 = arith.constant 0 : i32
    %c0_i32_0 = arith.constant 0 : i32
    %c0_i32_1 = arith.constant 0 : i32
    return %c0_i32, %c0_i32_0 : i32, i32
  }
  func.func @transform_2(%arg0: i32) -> (i32, i32) {
    %c0_i32 = arith.constant 0 : i32
    %c0_i32_0 = arith.constant 0 : i32
    %c0_i32_1 = arith.constant 0 : i32
    return %c0_i32, %c0_i32_0 : i32, i32
  }
  func.func @transform_3(%arg0: i32) -> (i32, i32) {
    %c0_i32 = arith.constant 0 : i32
    %c0_i32_0 = arith.constant 0 : i32
    %c0_i32_1 = arith.constant 0 : i32
    return %c0_i32, %c0_i32_0 : i32, i32
  }
  func.func @transform_4(%arg0: i32) -> (i32, i32) {
    %c0_i32 = arith.constant 0 : i32
    %c0_i32_0 = arith.constant 0 : i32
    %c0_i32_1 = arith.constant 0 : i32
    return %c0_i32, %c0_i32_0 : i32, i32
  }
  func.func @transform_5(%arg0: i32) -> (i32, i32, i32) {
    %c0_i32 = arith.constant 0 : i32
    %c0_i32_0 = arith.constant 0 : i32
    %c0_i32_1 = arith.constant 0 : i32
    %c0_i32_2 = arith.constant 0 : i32
    return %c0_i32, %c0_i32_0, %c0_i32_1 : i32, i32, i32
  }
  func.func @transform_6(%arg0: i32) -> (i32, i32) {
    %c0_i32 = arith.constant 0 : i32
    %c0_i32_0 = arith.constant 0 : i32
    %c0_i32_1 = arith.constant 0 : i32
    return %c0_i32, %c0_i32_0 : i32, i32
  }
}

</mosaic_0001>

<llo_original>
// kernel: forward.3
$region0: #{forward.3}
  #allocation0 [shape = 'u32[]', space=smem, size = 0x4, offset = 0x4, fixed_abs, tag = 'smem constant byte address 0x4 - core index']
  #allocation1 [shape = 'u32[72,128]{1,0:T(1,128)}', space=vmem, size = 0x9000, scoped, tag = 'internal scratch']
  %s0 = inlined_call_operand.vmem [shape: f32[24,40], index: 0, kind: input, shape index: {}]
  %s1 = inlined_call_operand.vmem [shape: f32[24,40], index: 1, kind: input, shape index: {}]
  %s2 = inlined_call_operand.vmem [shape: f32[24,40], index: 2, kind: input, shape index: {}]
  %s3 = inlined_call_operand.vmem [shape: f32[4,24,24], index: 3, kind: input, shape index: {}]
  %s4 = inlined_call_operand.vmem [shape: f32[4,40,40], index: 4, kind: input, shape index: {}]
  %s5 = inlined_call_operand.vmem [shape: f32[4,40], index: 5, kind: input, shape index: {}]
  %s6 = inlined_call_operand.vmem [shape: f32[24,40], index: 6, kind: output, shape index: {}]
  %s7 = sld [smem:[#allocation0]]
  $region34: #{forward.3} parent=0
    _
  %s9 = ssub.s32 1, %s7
  %s10 = scalar_select 0, %s9, %s7
  // Predicated region
  $region2: #{forward.3} parent=0 // pred_check
    _
  $region3: #{forward.3} parent=0 // pred_check_branch
    %12 = sbr.rel (0) target = $region5
  $region4: #{forward.3} parent=0 // pred_region
    _
  $region5: #{forward.3} parent=0 // pred_fallthru
    _
  // Predicated region
  $region6: #{forward.3} parent=0 // pred_check
    _
  $region7: #{forward.3} parent=0 // pred_check_branch
    %14 = sbr.rel (0) target = $region9
  $region8: #{forward.3} parent=0 // pred_region
    _
  $region9: #{forward.3} parent=0 // pred_fallthru
    _
  // Predicated region
  $region10: #{forward.3} parent=0 // pred_check
    _
  $region11: #{forward.3} parent=0 // pred_check_branch
    %16 = sbr.rel (0) target = $region13
  $region12: #{forward.3} parent=0 // pred_region
    _
  $region13: #{forward.3} parent=0 // pred_fallthru
    _
  // Predicated region
  $region14: #{forward.3} parent=0 // pred_check
    _
  $region15: #{forward.3} parent=0 // pred_check_branch
    %18 = sbr.rel (0) target = $region17
  $region16: #{forward.3} parent=0 // pred_region
    _
  $region17: #{forward.3} parent=0 // pred_fallthru
    _
  // Predicated region
  $region18: #{forward.3} parent=0 // pred_check
    _
  $region19: #{forward.3} parent=0 // pred_check_branch
    %20 = sbr.rel (0) target = $region21
  $region20: #{forward.3} parent=0 // pred_region
    _
  $region21: #{forward.3} parent=0 // pred_fallthru
    _
  // Predicated region
  $region22: #{forward.3} parent=0 // pred_check
    _
  $region23: #{forward.3} parent=0 // pred_check_branch
    %22 = sbr.rel (0) target = $region25
  $region24: #{forward.3} parent=0 // pred_region
    _
  $region25: #{forward.3} parent=0 // pred_fallthru
    _
  %v23 = vld [vmem:[%s0] sm:$0xff]
  %v24 = vld [vmem:[%s0 + $0x8] sm:$0xff]
  %v25 = vld [vmem:[%s0 + $0x10] sm:$0xff]
  %v26 = vld [vmem:[%s4] sm:$0xff]
  %v27 = vld [vmem:[%s4 + $0x8] sm:$0xff]
  %v28 = vld [vmem:[%s4 + $0x10] sm:$0xff]
  %v29 = vld [vmem:[%s4 + $0x18] sm:$0xff]
  %v30 = vld [vmem:[%s4 + $0x20] sm:$0xff]
  %vm31 = vcmask 326656
  %v33 = vsel %vm31, %v23, 0
  %v36 = vsel %vm31, %v24, 0
  %v39 = vsel %vm31, %v25, 0
  %41 = vmatpush.msra.mxu0 0.0
  %42 = vmatpush.msra.mxu0 0.0
  %43 = vmatpush.msra.mxu0 0.0
  %44 = vmatpush.msra.mxu0 0.0
  %45 = vmatpush.msra.mxu0 0.0
  %46 = vmatpush.msra.mxu0 0.0
  %47 = vmatpush.msra.mxu0 0.0
  %48 = vmatpush.msra.mxu0 0.0
  %49 = vmatpush.msra.mxu0 0.0
  %50 = vmatpush.msra.mxu0 0.0
  %51 = vmatpush.msra.mxu0 0.0
  %52 = vmatpush.msra.mxu0 %v30
  %53 = vmatpush.msra.mxu0 %v29
  %54 = vmatpush.msra.mxu0 %v28
  %55 = vmatpush.msra.mxu0 %v27
  %56 = vmatpush.msra.mxu0 %v26
  %57 = vmatmul.f32.gmra.mxu0 %v33
  %v58 = vpop.f32.mrf.mxu0
  %v59 = vadd.f32 0.0, %v58
  %60 = vmatmul.f32.gmra.mxu0 %v36
  %v61 = vpop.f32.mrf.mxu0
  %v62 = vadd.f32 0.0, %v61
  %63 = vmatmul.f32.gmra.mxu0 %v39
  %v64 = vpop.f32.mrf.mxu0
  %v65 = vadd.f32 0.0, %v64
  %66 = vdwg.mxu0
  %v67 = vld [vmem:[%s3] sm:$0xff]
  %v68 = vld [vmem:[%s3 + $0x8] sm:$0xff]
  %v69 = vld [vmem:[%s3 + $0x10] sm:$0xff]
  %v70 = vld [vmem:[%s5] sm:$0x1]
  %v71 = vperm.slane %v70, 0
  %vm72 = vcmask 195584
  %v74 = vsel %vm72, %v67, 0
  %v77 = vsel %vm72, %v68, 0
  %v80 = vsel %vm72, %v69, 0
  %82 = vmatpush.msra.mxu0 0.0
  %83 = vmatpush.msra.mxu0 0.0
  %84 = vmatpush.msra.mxu0 0.0
  %85 = vmatpush.msra.mxu0 0.0
  %86 = vmatpush.msra.mxu0 0.0
  %87 = vmatpush.msra.mxu0 0.0
  %88 = vmatpush.msra.mxu0 0.0
  %89 = vmatpush.msra.mxu0 0.0
  %90 = vmatpush.msra.mxu0 0.0
  %91 = vmatpush.msra.mxu0 0.0
  %92 = vmatpush.msra.mxu0 0.0
  %93 = vmatpush.msra.mxu0 0.0
  %94 = vmatpush.msra.mxu0 0.0
  %95 = vmatpush.msra.mxu0 %v65
  %96 = vmatpush.msra.mxu0 %v62
  %97 = vmatpush.msra.mxu0 %v59
  %98 = vmatmul.f32.gmra.mxu0 %v74
  %v99 = vpop.f32.mrf.mxu0
  %v100 = vadd.f32 %v71, %v99
  %101 = vmatmul.f32.gmra.mxu0 %v77
  %v102 = vpop.f32.mrf.mxu0
  %v103 = vadd.f32 %v71, %v102
  %104 = vmatmul.f32.gmra.mxu0 %v80
  %v105 = vpop.f32.mrf.mxu0
  %v106 = vadd.f32 %v71, %v105
  %107 = vdwg.mxu0
  %v108 = vmax.f32 %v100, 0.0
  %v109 = vmax.f32 %v103, 0.0
  %v110 = vmax.f32 %v106, 0.0
  %s111 = scalar_lea.vmem %s4, 40
  %v112 = vld [vmem:[%s111] sm:$0xff]
  %v113 = vld [vmem:[%s111 + $0x8] sm:$0xff]
  %v114 = vld [vmem:[%s111 + $0x10] sm:$0xff]
  %v115 = vld [vmem:[%s111 + $0x18] sm:$0xff]
  %v116 = vld [vmem:[%s111 + $0x20] sm:$0xff]
  %v118 = vsel %vm31, %v108, 0
  %v121 = vsel %vm31, %v109, 0
  %v124 = vsel %vm31, %v110, 0
  %126 = vmatpush.msra.mxu0 0.0
  %127 = vmatpush.msra.mxu0 0.0
  %128 = vmatpush.msra.mxu0 0.0
  %129 = vmatpush.msra.mxu0 0.0
  %130 = vmatpush.msra.mxu0 0.0
  %131 = vmatpush.msra.mxu0 0.0
  %132 = vmatpush.msra.mxu0 0.0
  %133 = vmatpush.msra.mxu0 0.0
  %134 = vmatpush.msra.mxu0 0.0
  %135 = vmatpush.msra.mxu0 0.0
  %136 = vmatpush.msra.mxu0 0.0
  %137 = vmatpush.msra.mxu0 %v116
  %138 = vmatpush.msra.mxu0 %v115
  %139 = vmatpush.msra.mxu0 %v114
  %140 = vmatpush.msra.mxu0 %v113
  %141 = vmatpush.msra.mxu0 %v112
  %142 = vmatmul.f32.gmra.mxu0 %v118
  %v143 = vpop.f32.mrf.mxu0
  %v144 = vadd.f32 0.0, %v143
  %145 = vmatmul.f32.gmra.mxu0 %v121
  %v146 = vpop.f32.mrf.mxu0
  %v147 = vadd.f32 0.0, %v146
  %148 = vmatmul.f32.gmra.mxu0 %v124
  %v149 = vpop.f32.mrf.mxu0
  %v150 = vadd.f32 0.0, %v149
  %151 = vdwg.mxu0
  %s152 = scalar_lea.vmem %s3, 24
  %v153 = vld [vmem:[%s152] sm:$0xff]
  %v154 = vld [vmem:[%s152 + $0x8] sm:$0xff]
  %v155 = vld [vmem:[%s152 + $0x10] sm:$0xff]
  %v156 = vld [vmem:[%s5 + $0x1] sm:$0x1]
  %v157 = vperm.slane %v156, 0
  %v159 = vsel %vm72, %v153, 0
  %v162 = vsel %vm72, %v154, 0
  %v165 = vsel %vm72, %v155, 0
  %167 = vmatpush.msra.mxu0 0.0
  %168 = vmatpush.msra.mxu0 0.0
  %169 = vmatpush.msra.mxu0 0.0
  %170 = vmatpush.msra.mxu0 0.0
  %171 = vmatpush.msra.mxu0 0.0
  %172 = vmatpush.msra.mxu0 0.0
  %173 = vmatpush.msra.mxu0 0.0
  %174 = vmatpush.msra.mxu0 0.0
  %175 = vmatpush.msra.mxu0 0.0
  %176 = vmatpush.msra.mxu0 0.0
  %177 = vmatpush.msra.mxu0 0.0
  %178 = vmatpush.msra.mxu0 0.0
  %179 = vmatpush.msra.mxu0 0.0
  %180 = vmatpush.msra.mxu0 %v150
  %181 = vmatpush.msra.mxu0 %v147
  %182 = vmatpush.msra.mxu0 %v144
  %183 = vmatmul.f32.gmra.mxu0 %v159
  %v184 = vpop.f32.mrf.mxu0
  %v185 = vadd.f32 %v157, %v184
  %186 = vmatmul.f32.gmra.mxu0 %v162
  %v187 = vpop.f32.mrf.mxu0
  %v188 = vadd.f32 %v157, %v187
  %189 = vmatmul.f32.gmra.mxu0 %v165
  %v190 = vpop.f32.mrf.mxu0
  %v191 = vadd.f32 %v157, %v190
  %192 = vdwg.mxu0
  %v193 = vmax.f32 %v185, 0.0
  %v194 = vmax.f32 %v188, 0.0
  %v195 = vmax.f32 %v191, 0.0
  %s196 = scalar_lea.vmem %s4, 80
  %v197 = vld [vmem:[%s196] sm:$0xff]
  %v198 = vld [vmem:[%s196 + $0x8] sm:$0xff]
  %v199 = vld [vmem:[%s196 + $0x10] sm:$0xff]
  %v200 = vld [vmem:[%s196 + $0x18] sm:$0xff]
  %v201 = vld [vmem:[%s196 + $0x20] sm:$0xff]
  %v203 = vsel %vm31, %v193, 0
  %v206 = vsel %vm31, %v194, 0
  %v209 = vsel %vm31, %v195, 0
  %211 = vmatpush.msra.mxu0 0.0
  %212 = vmatpush.msra.mxu0 0.0
  %213 = vmatpush.msra.mxu0 0.0
  %214 = vmatpush.msra.mxu0 0.0
  %215 = vmatpush.msra.mxu0 0.0
  %216 = vmatpush.msra.mxu0 0.0
  %217 = vmatpush.msra.mxu0 0.0
  %218 = vmatpush.msra.mxu0 0.0
  %219 = vmatpush.msra.mxu0 0.0
  %220 = vmatpush.msra.mxu0 0.0
  %221 = vmatpush.msra.mxu0 0.0
  %222 = vmatpush.msra.mxu0 %v201
  %223 = vmatpush.msra.mxu0 %v200
  %224 = vmatpush.msra.mxu0 %v199
  %225 = vmatpush.msra.mxu0 %v198
  %226 = vmatpush.msra.mxu0 %v197
  %227 = vmatmul.f32.gmra.mxu0 %v203
  %v228 = vpop.f32.mrf.mxu0
  %v229 = vadd.f32 0.0, %v228
  %230 = vmatmul.f32.gmra.mxu0 %v206
  %v231 = vpop.f32.mrf.mxu0
  %v232 = vadd.f32 0.0, %v231
  %233 = vmatmul.f32.gmra.mxu0 %v209
  %v234 = vpop.f32.mrf.mxu0
  %v235 = vadd.f32 0.0, %v234
  %236 = vdwg.mxu0
  %s237 = scalar_lea.vmem %s3, 48
  %v238 = vld [vmem:[%s237] sm:$0xff]
  %v239 = vld [vmem:[%s237 + $0x8] sm:$0xff]
  %v240 = vld [vmem:[%s237 + $0x10] sm:$0xff]
  %v241 = vld [vmem:[%s5 + $0x2] sm:$0x1]
  %v242 = vperm.slane %v241, 0
  %v244 = vsel %vm72, %v238, 0
  %v247 = vsel %vm72, %v239, 0
  %v250 = vsel %vm72, %v240, 0
  %252 = vmatpush.msra.mxu0 0.0
  %253 = vmatpush.msra.mxu0 0.0
  %254 = vmatpush.msra.mxu0 0.0
  %255 = vmatpush.msra.mxu0 0.0
  %256 = vmatpush.msra.mxu0 0.0
  %257 = vmatpush.msra.mxu0 0.0
  %258 = vmatpush.msra.mxu0 0.0
  %259 = vmatpush.msra.mxu0 0.0
  %260 = vmatpush.msra.mxu0 0.0
  %261 = vmatpush.msra.mxu0 0.0
  %262 = vmatpush.msra.mxu0 0.0
  %263 = vmatpush.msra.mxu0 0.0
  %264 = vmatpush.msra.mxu0 0.0
  %265 = vmatpush.msra.mxu0 %v235
  %266 = vmatpush.msra.mxu0 %v232
  %267 = vmatpush.msra.mxu0 %v229
  %268 = vmatmul.f32.gmra.mxu0 %v244
  %v269 = vpop.f32.mrf.mxu0
  %v270 = vadd.f32 %v242, %v269
  %271 = vmatmul.f32.gmra.mxu0 %v247
  %v272 = vpop.f32.mrf.mxu0
  %v273 = vadd.f32 %v242, %v272
  %274 = vmatmul.f32.gmra.mxu0 %v250
  %v275 = vpop.f32.mrf.mxu0
  %v276 = vadd.f32 %v242, %v275
  %277 = vdwg.mxu0
  %v278 = vmax.f32 %v270, 0.0
  %v279 = vmax.f32 %v273, 0.0
  %v280 = vmax.f32 %v276, 0.0
  %s281 = scalar_lea.vmem %s4, 120
  %v282 = vld [vmem:[%s281] sm:$0xff]
  %v283 = vld [vmem:[%s281 + $0x8] sm:$0xff]
  %v284 = vld [vmem:[%s281 + $0x10] sm:$0xff]
  %v285 = vld [vmem:[%s281 + $0x18] sm:$0xff]
  %v286 = vld [vmem:[%s281 + $0x20] sm:$0xff]
  %v288 = vsel %vm31, %v278, 0
  %v291 = vsel %vm31, %v279, 0
  %v294 = vsel %vm31, %v280, 0
  %296 = vmatpush.msra.mxu0 0.0
  %297 = vmatpush.msra.mxu0 0.0
  %298 = vmatpush.msra.mxu0 0.0
  %299 = vmatpush.msra.mxu0 0.0
  %300 = vmatpush.msra.mxu0 0.0
  %301 = vmatpush.msra.mxu0 0.0
  %302 = vmatpush.msra.mxu0 0.0
  %303 = vmatpush.msra.mxu0 0.0
  %304 = vmatpush.msra.mxu0 0.0
  %305 = vmatpush.msra.mxu0 0.0
  %306 = vmatpush.msra.mxu0 0.0
  %307 = vmatpush.msra.mxu0 %v286
  %308 = vmatpush.msra.mxu0 %v285
  %309 = vmatpush.msra.mxu0 %v284
  %310 = vmatpush.msra.mxu0 %v283
  %311 = vmatpush.msra.mxu0 %v282
  %312 = vmatmul.f32.gmra.mxu0 %v288
  %v313 = vpop.f32.mrf.mxu0
  %v314 = vadd.f32 0.0, %v313
  %315 = vmatmul.f32.gmra.mxu0 %v291
  %v316 = vpop.f32.mrf.mxu0
  %v317 = vadd.f32 0.0, %v316
  %318 = vmatmul.f32.gmra.mxu0 %v294
  %v319 = vpop.f32.mrf.mxu0
  %v320 = vadd.f32 0.0, %v319
  %321 = vdwg.mxu0
  %s322 = scalar_lea.vmem %s3, 72
  %v323 = vld [vmem:[%s322] sm:$0xff]
  %v324 = vld [vmem:[%s322 + $0x8] sm:$0xff]
  %v325 = vld [vmem:[%s322 + $0x10] sm:$0xff]
  %v326 = vld [vmem:[%s5 + $0x3] sm:$0x1]
  %v327 = vperm.slane %v326, 0
  %v329 = vsel %vm72, %v323, 0
  %v332 = vsel %vm72, %v324, 0
  %v335 = vsel %vm72, %v325, 0
  %337 = vmatpush.msra.mxu0 0.0
  %338 = vmatpush.msra.mxu0 0.0
  %339 = vmatpush.msra.mxu0 0.0
  %340 = vmatpush.msra.mxu0 0.0
  %341 = vmatpush.msra.mxu0 0.0
  %342 = vmatpush.msra.mxu0 0.0
  %343 = vmatpush.msra.mxu0 0.0
  %344 = vmatpush.msra.mxu0 0.0
  %345 = vmatpush.msra.mxu0 0.0
  %346 = vmatpush.msra.mxu0 0.0
  %347 = vmatpush.msra.mxu0 0.0
  %348 = vmatpush.msra.mxu0 0.0
  %349 = vmatpush.msra.mxu0 0.0
  %350 = vmatpush.msra.mxu0 %v320
  %351 = vmatpush.msra.mxu0 %v317
  %352 = vmatpush.msra.mxu0 %v314
  %353 = vmatmul.f32.gmra.mxu0 %v329
  %v354 = vpop.f32.mrf.mxu0
  %v355 = vadd.f32 %v327, %v354
  %356 = vmatmul.f32.gmra.mxu0 %v332
  %v357 = vpop.f32.mrf.mxu0
  %v358 = vadd.f32 %v327, %v357
  %359 = vmatmul.f32.gmra.mxu0 %v335
  %v360 = vpop.f32.mrf.mxu0
  %v361 = vadd.f32 %v327, %v360
  %362 = vdwg.mxu0
  %v363 = vmax.f32 %v355, 0.0
  %v364 = vmax.f32 %v358, 0.0
  %v365 = vmax.f32 %v361, 0.0
  %v366 = vld [vmem:[%s2] sm:$0xff]
  %v367 = vld [vmem:[%s2 + $0x8] sm:$0xff]
  %v368 = vld [vmem:[%s2 + $0x10] sm:$0xff]
  %v369 = vld [vmem:[%s1] sm:$0xff]
  %v370 = vld [vmem:[%s1 + $0x8] sm:$0xff]
  %v371 = vld [vmem:[%s1 + $0x10] sm:$0xff]
  %v372 = vmul.f32 %v369, %v366
  %v373 = vmul.f32 %v370, %v367
  %v374 = vmul.f32 %v371, %v368
  %v375 = vsub.f32 1.0, %v366
  %v376 = vsub.f32 1.0, %v367
  %v377 = vsub.f32 1.0, %v368
  %v378 = vmul.f32 %v363, %v375
  %v379 = vmul.f32 %v364, %v376
  %v380 = vmul.f32 %v365, %v377
  %v381 = vadd.f32 %v372, %v378
  %v382 = vadd.f32 %v373, %v379
  %v383 = vadd.f32 %v374, %v380
  %384 = vst.msk [vmem:[%s6] sm:$0xff] %vm31, %v381
  %385 = vst.msk [vmem:[%s6 + $0x8] sm:$0xff] %vm31, %v382
  %386 = vst.msk [vmem:[%s6 + $0x10] sm:$0xff] %vm31, %v383
  // Predicated region
  $region26: #{forward.3} parent=0 // pred_check
    _
  $region27: #{forward.3} parent=0 // pred_check_branch
    %388 = sbr.rel (0) target = $region29
  $region28: #{forward.3} parent=0 // pred_region
    _
  $region29: #{forward.3} parent=0 // pred_fallthru
    _
  // Predicated region
  $region30: #{forward.3} parent=0 // pred_check
    _
  $region31: #{forward.3} parent=0 // pred_check_branch
    %390 = sbr.rel (0) target = $region33
  $region32: #{forward.3} parent=0 // pred_region
    _
  $region33: #{forward.3} parent=0 // pred_fallthru
    _

// kernel: forward.2
$region0: #{forward.2}
  #allocation0 [shape = 'u32[]', space=smem, size = 0x4, offset = 0x4, fixed_abs, tag = 'smem constant byte address 0x4 - core index']
  #allocation1 [shape = 'u32[72,128]{1,0:T(1,128)}', space=vmem, size = 0x9000, scoped, tag = 'internal scratch']
  %s0 = inlined_call_operand.vmem [shape: f32[24,40], index: 0, kind: input, shape index: {}]
  %s1 = inlined_call_operand.vmem [shape: f32[24,40], index: 1, kind: input, shape index: {}]
  %s2 = inlined_call_operand.vmem [shape: f32[96,512], index: 2, kind: input, shape index: {}]
  %s3 = inlined_call_operand.vmem [shape: f32[8,128], index: 3, kind: input, shape index: {}]
  %s4 = inlined_call_operand.vmem [shape: f32[24,2], index: 4, kind: input, shape index: {}]
  %s5 = inlined_call_operand.vmem [shape: f32[12,24,40], index: 5, kind: input, shape index: {}]
  %s6 = inlined_call_operand.vmem [shape: f32[24,40], index: 6, kind: output, shape index: {}]
  %s7 = sld [smem:[#allocation0]]
  $region34: #{forward.2} parent=0
    _
  %s9 = ssub.s32 1, %s7
  %s10 = scalar_select 0, %s9, %s7
  // Predicated region
  $region2: #{forward.2} parent=0 // pred_check
    _
  $region3: #{forward.2} parent=0 // pred_check_branch
    %12 = sbr.rel (0) target = $region5
  $region4: #{forward.2} parent=0 // pred_region
    _
  $region5: #{forward.2} parent=0 // pred_fallthru
    _
  // Predicated region
  $region6: #{forward.2} parent=0 // pred_check
    _
  $region7: #{forward.2} parent=0 // pred_check_branch
    %14 = sbr.rel (0) target = $region9
  $region8: #{forward.2} parent=0 // pred_region
    _
  $region9: #{forward.2} parent=0 // pred_fallthru
    _
  // Predicated region
  $region10: #{forward.2} parent=0 // pred_check
    _
  $region11: #{forward.2} parent=0 // pred_check_branch
    %16 = sbr.rel (0) target = $region13
  $region12: #{forward.2} parent=0 // pred_region
    _
  $region13: #{forward.2} parent=0 // pred_fallthru
    _
  // Predicated region
  $region14: #{forward.2} parent=0 // pred_check
    _
  $region15: #{forward.2} parent=0 // pred_check_branch
    %18 = sbr.rel (0) target = $region17
  $region16: #{forward.2} parent=0 // pred_region
    _
  $region17: #{forward.2} parent=0 // pred_fallthru
    _
  // Predicated region
  $region18: #{forward.2} parent=0 // pred_check
    _
  $region19: #{forward.2} parent=0 // pred_check_branch
    %20 = sbr.rel (0) target = $region21
  $region20: #{forward.2} parent=0 // pred_region
    _
  $region21: #{forward.2} parent=0 // pred_fallthru
    _
  // Predicated region
  $region22: #{forward.2} parent=0 // pred_check
    _
  $region23: #{forward.2} parent=0 // pred_check_branch
    %22 = sbr.rel (0) target = $region25
  $region24: #{forward.2} parent=0 // pred_region
    _
  $region25: #{forward.2} parent=0 // pred_fallthru
    _
  %v23 = vld [vmem:[%s0] sm:$0xff]
  %v24 = vld [vmem:[%s0 + $0x8] sm:$0xff]
  %v25 = vld [vmem:[%s0 + $0x10] sm:$0xff]
  %v26 = vld [vmem:[%s1] sm:$0xff]
  %v27 = vld [vmem:[%s1 + $0x8] sm:$0xff]
  %v28 = vld [vmem:[%s1 + $0x10] sm:$0xff]
  %v29 = vmul.f32 %v23, %v26
  %v30 = vmul.f32 %v24, %v27
  %v31 = vmul.f32 %v25, %v28
  %v32 = vsub.f32 1.0, %v26
  %v33 = vsub.f32 1.0, %v27
  %v34 = vsub.f32 1.0, %v28
  %v35 = vld [vmem:[%s4] sm:$0xff]
  %v36 = vld [vmem:[%s4 + $0x8] sm:$0xff]
  %v37 = vld [vmem:[%s4 + $0x10] sm:$0xff]
  %v38 = vrot.slane %v29, 7
  %v39 = vrot.slane %v30, 7
  %v40 = vrot.slane %v31, 7
  %v41 = vlaneseq
  %v42 = vshrl.u32 %v41, 7
  %vm43 = vcmp.lt.s32.totalorder %v42, 1
  %v44 = vsel %vm43, %v39, %v40
  %v45 = vsel %vm43, %v38, %v39
  %v46 = vsel %vm43, %v40, %v38
  %48 = vset.pattern.permute.xlu0 0
  %49 = vperm.xlu0 %48, %v35
  %v50 = vpop.permute.xlu0 %49
  %53 = vset.pattern.permute.xlu0 0
  %54 = vperm.xlu0 %53, %v36
  %v55 = vpop.permute.xlu0 %54
  %58 = vset.pattern.permute.xlu0 0
  %59 = vperm.xlu0 %58, %v37
  %v60 = vpop.permute.xlu0 %59
  %v62 = vmul.f32 %v46, %v50
  %v63 = vmul.f32 %v45, %v55
  %v64 = vmul.f32 %v44, %v60
  %68 = vrot.lane.b32.xlu0 %v29, 40
  %v69 = vpop.permute.xlu0 %68
  %70 = vrot.lane.b32.xlu0 %v30, 40
  %v71 = vpop.permute.xlu0 %70
  %72 = vrot.lane.b32.xlu0 %v31, 40
  %v73 = vpop.permute.xlu0 %72
  %vm77 = vcmask 326656
  %v78 = vsel %vm77, %v62, %v69
  %v79 = vsel %vm77, %v63, %v71
  %v80 = vsel %vm77, %v64, %v73
  %v81 = vld [vmem:[%s2] sm:$0xff]
  %v82 = vld [vmem:[%s2 + $0x20] sm:$0xff]
  %v83 = vld [vmem:[%s2 + $0x40] sm:$0xff]
  %v84 = vld [vmem:[%s2 + $0x60] sm:$0xff]
  %v85 = vld [vmem:[%s2 + $0x80] sm:$0xff]
  %v86 = vld [vmem:[%s2 + $0xa0] sm:$0xff]
  %v87 = vld [vmem:[%s2 + $0xc0] sm:$0xff]
  %v88 = vld [vmem:[%s2 + $0xe0] sm:$0xff]
  %v89 = vld [vmem:[%s2 + $0x100] sm:$0xff]
  %v90 = vld [vmem:[%s2 + $0x120] sm:$0xff]
  %v91 = vld [vmem:[%s3] sm:$0x1]
  %v92 = vperm.slane %v91, 0
  %vm93 = vcmask 654336
  %v95 = vsel %vm93, %v78, 0
  %v98 = vsel %vm93, %v79, 0
  %v101 = vsel %vm93, %v80, 0
  %103 = vmatpush.msra.mxu0 0.0
  %104 = vmatpush.msra.mxu0 0.0
  %105 = vmatpush.msra.mxu0 0.0
  %106 = vmatpush.msra.mxu0 0.0
  %107 = vmatpush.msra.mxu0 0.0
  %108 = vmatpush.msra.mxu0 0.0
  %109 = vmatpush.msra.mxu0 %v90
  %110 = vmatpush.msra.mxu0 %v89
  %111 = vmatpush.msra.mxu0 %v88
  %112 = vmatpush.msra.mxu0 %v87
  %113 = vmatpush.msra.mxu0 %v86
  %114 = vmatpush.msra.mxu0 %v85
  %115 = vmatpush.msra.mxu0 %v84
  %116 = vmatpush.msra.mxu0 %v83
  %117 = vmatpush.msra.mxu0 %v82
  %118 = vmatpush.msra.mxu0 %v81
  %119 = vmatmul.f32.gmra.mxu0 %v95
  %v120 = vpop.f32.mrf.mxu0
  %v121 = vadd.f32 %v92, %v120
  %122 = vmatmul.f32.gmra.mxu0 %v98
  %v123 = vpop.f32.mrf.mxu0
  %v124 = vadd.f32 %v92, %v123
  %125 = vmatmul.f32.gmra.mxu0 %v101
  %v126 = vpop.f32.mrf.mxu0
  %v127 = vadd.f32 %v92, %v126
  %128 = vdwg.mxu0
  %v129 = vmax.f32 %v121, 0.0
  %v130 = vmax.f32 %v124, 0.0
  %v131 = vmax.f32 %v127, 0.0
  %v132 = vrot.slane %v129, 7
  %v133 = vrot.slane %v130, 7
  %v134 = vrot.slane %v131, 7
  %v135 = vsel %vm43, %v133, %v134
  %v136 = vsel %vm43, %v132, %v133
  %v137 = vsel %vm43, %v134, %v132
  %v138 = vmul.f32 %v137, %v50
  %v139 = vmul.f32 %v136, %v55
  %v140 = vmul.f32 %v135, %v60
  %144 = vrot.lane.b32.xlu0 %v129, 48
  %v145 = vpop.permute.xlu0 %144
  %146 = vrot.lane.b32.xlu0 %v130, 48
  %v147 = vpop.permute.xlu0 %146
  %148 = vrot.lane.b32.xlu0 %v131, 48
  %v149 = vpop.permute.xlu0 %148
  %vm153 = vcmask 392192
  %v154 = vsel %vm153, %v138, %v145
  %v155 = vsel %vm153, %v139, %v147
  %v156 = vsel %vm153, %v140, %v149
  %v157 = vld [vmem:[%s2 + $0x8] sm:$0xff]
  %v158 = vld [vmem:[%s2 + $0x28] sm:$0xff]
  %v159 = vld [vmem:[%s2 + $0x48] sm:$0xff]
  %v160 = vld [vmem:[%s2 + $0x68] sm:$0xff]
  %v161 = vld [vmem:[%s2 + $0x88] sm:$0xff]
  %v162 = vld [vmem:[%s2 + $0xa8] sm:$0xff]
  %v163 = vld [vmem:[%s2 + $0xc8] sm:$0xff]
  %v164 = vld [vmem:[%s2 + $0xe8] sm:$0xff]
  %v165 = vld [vmem:[%s2 + $0x108] sm:$0xff]
  %v166 = vld [vmem:[%s2 + $0x128] sm:$0xff]
  %v167 = vld [vmem:[%s2 + $0x148] sm:$0xff]
  %v168 = vld [vmem:[%s2 + $0x168] sm:$0xff]
  %v169 = vld [vmem:[%s3 + $0x1] sm:$0x1]
  %v170 = vperm.slane %v169, 0
  %vm171 = vcmask 785408
  %v173 = vsel %vm171, %v154, 0
  %v176 = vsel %vm171, %v155, 0
  %v179 = vsel %vm171, %v156, 0
  %181 = vmatpush.msra.mxu0 0.0
  %182 = vmatpush.msra.mxu0 0.0
  %183 = vmatpush.msra.mxu0 0.0
  %184 = vmatpush.msra.mxu0 0.0
  %185 = vmatpush.msra.mxu0 %v168
  %186 = vmatpush.msra.mxu0 %v167
  %187 = vmatpush.msra.mxu0 %v166
  %188 = vmatpush.msra.mxu0 %v165
  %189 = vmatpush.msra.mxu0 %v164
  %190 = vmatpush.msra.mxu0 %v163
  %191 = vmatpush.msra.mxu0 %v162
  %192 = vmatpush.msra.mxu0 %v161
  %193 = vmatpush.msra.mxu0 %v160
  %194 = vmatpush.msra.mxu0 %v159
  %195 = vmatpush.msra.mxu0 %v158
  %196 = vmatpush.msra.mxu0 %v157
  %197 = vmatmul.f32.gmra.mxu0 %v173
  %v198 = vpop.f32.mrf.mxu0
  %v199 = vadd.f32 %v170, %v198
  %200 = vmatmul.f32.gmra.mxu0 %v176
  %v201 = vpop.f32.mrf.mxu0
  %v202 = vadd.f32 %v170, %v201
  %203 = vmatmul.f32.gmra.mxu0 %v179
  %v204 = vpop.f32.mrf.mxu0
  %v205 = vadd.f32 %v170, %v204
  %206 = vdwg.mxu0
  %v207 = vmax.f32 %v199, 0.0
  %v208 = vmax.f32 %v202, 0.0
  %v209 = vmax.f32 %v205, 0.0
  %213 = vrot.lane.b32.xlu0 %v121, 80
  %v214 = vpop.permute.xlu0 %213
  %215 = vrot.lane.b32.xlu0 %v124, 80
  %v216 = vpop.permute.xlu0 %215
  %217 = vrot.lane.b32.xlu0 %v127, 80
  %v218 = vpop.permute.xlu0 %217
  %v222 = vadd.f32 %v207, %v214
  %v223 = vadd.f32 %v208, %v216
  %v224 = vadd.f32 %v209, %v218
  %v225 = vmax.f32 %v222, 0.0
  %v226 = vmax.f32 %v223, 0.0
  %v227 = vmax.f32 %v224, 0.0
  %v228 = vrot.slane %v225, 6
  %v229 = vrot.slane %v226, 6
  %v230 = vrot.slane %v227, 6
  %vm231 = vcmp.lt.s32.totalorder %v42, 2
  %v232 = vsel %vm231, %v229, %v230
  %v233 = vsel %vm231, %v228, %v229
  %v234 = vsel %vm231, %v230, %v228
  %235 = vset.pattern.permute.xlu0 1
  %236 = vperm.xlu0 %235, %v35
  %v237 = vpop.permute.xlu0 %236
  %239 = vset.pattern.permute.xlu0 1
  %240 = vperm.xlu0 %239, %v36
  %v241 = vpop.permute.xlu0 %240
  %243 = vset.pattern.permute.xlu0 1
  %244 = vperm.xlu0 %243, %v37
  %v245 = vpop.permute.xlu0 %244
  %v247 = vmul.f32 %v234, %v237
  %v248 = vmul.f32 %v233, %v241
  %v249 = vmul.f32 %v232, %v245
  %253 = vrot.lane.b32.xlu0 %v225, 48
  %v254 = vpop.permute.xlu0 %253
  %255 = vrot.lane.b32.xlu0 %v226, 48
  %v256 = vpop.permute.xlu0 %255
  %257 = vrot.lane.b32.xlu0 %v227, 48
  %v258 = vpop.permute.xlu0 %257
  %v262 = vsel %vm153, %v247, %v254
  %v263 = vsel %vm153, %v248, %v256
  %v264 = vsel %vm153, %v249, %v258
  %v265 = vld [vmem:[%s2 + $0x10] sm:$0xff]
  %v266 = vld [vmem:[%s2 + $0x30] sm:$0xff]
  %v267 = vld [vmem:[%s2 + $0x50] sm:$0xff]
  %v268 = vld [vmem:[%s2 + $0x70] sm:$0xff]
  %v269 = vld [vmem:[%s2 + $0x90] sm:$0xff]
  %v270 = vld [vmem:[%s2 + $0xb0] sm:$0xff]
  %v271 = vld [vmem:[%s2 + $0xd0] sm:$0xff]
  %v272 = vld [vmem:[%s2 + $0xf0] sm:$0xff]
  %v273 = vld [vmem:[%s2 + $0x110] sm:$0xff]
  %v274 = vld [vmem:[%s2 + $0x130] sm:$0xff]
  %v275 = vld [vmem:[%s2 + $0x150] sm:$0xff]
  %v276 = vld [vmem:[%s2 + $0x170] sm:$0xff]
  %v277 = vld [vmem:[%s3 + $0x2] sm:$0x1]
  %v278 = vperm.slane %v277, 0
  %v280 = vsel %vm171, %v262, 0
  %v283 = vsel %vm171, %v263, 0
  %v286 = vsel %vm171, %v264, 0
  %288 = vmatpush.msra.mxu0 0.0
  %289 = vmatpush.msra.mxu0 0.0
  %290 = vmatpush.msra.mxu0 0.0
  %291 = vmatpush.msra.mxu0 0.0
  %292 = vmatpush.msra.mxu0 %v276
  %293 = vmatpush.msra.mxu0 %v275
  %294 = vmatpush.msra.mxu0 %v274
  %295 = vmatpush.msra.mxu0 %v273
  %296 = vmatpush.msra.mxu0 %v272
  %297 = vmatpush.msra.mxu0 %v271
  %298 = vmatpush.msra.mxu0 %v270
  %299 = vmatpush.msra.mxu0 %v269
  %300 = vmatpush.msra.mxu0 %v268
  %301 = vmatpush.msra.mxu0 %v267
  %302 = vmatpush.msra.mxu0 %v266
  %303 = vmatpush.msra.mxu0 %v265
  %304 = vmatmul.f32.gmra.mxu0 %v280
  %v305 = vpop.f32.mrf.mxu0
  %v306 = vadd.f32 %v278, %v305
  %307 = vmatmul.f32.gmra.mxu0 %v283
  %v308 = vpop.f32.mrf.mxu0
  %v309 = vadd.f32 %v278, %v308
  %310 = vmatmul.f32.gmra.mxu0 %v286
  %v311 = vpop.f32.mrf.mxu0
  %v312 = vadd.f32 %v278, %v311
  %313 = vdwg.mxu0
  %v314 = vmax.f32 %v306, 0.0
  %v315 = vmax.f32 %v309, 0.0
  %v316 = vmax.f32 %v312, 0.0
  %v317 = vrot.slane %v314, 6
  %v318 = vrot.slane %v315, 6
  %v319 = vrot.slane %v316, 6
  %v320 = vsel %vm231, %v318, %v319
  %v321 = vsel %vm231, %v317, %v318
  %v322 = vsel %vm231, %v319, %v317
  %v323 = vmul.f32 %v322, %v237
  %v324 = vmul.f32 %v321, %v241
  %v325 = vmul.f32 %v320, %v245
  %329 = vrot.lane.b32.xlu0 %v314, 40
  %v330 = vpop.permute.xlu0 %329
  %331 = vrot.lane.b32.xlu0 %v315, 40
  %v332 = vpop.permute.xlu0 %331
  %333 = vrot.lane.b32.xlu0 %v316, 40
  %v334 = vpop.permute.xlu0 %333
  %v338 = vsel %vm77, %v323, %v330
  %v339 = vsel %vm77, %v324, %v332
  %v340 = vsel %vm77, %v325, %v334
  %v341 = vld [vmem:[%s2 + $0x18] sm:$0xff]
  %v342 = vld [vmem:[%s2 + $0x38] sm:$0xff]
  %v343 = vld [vmem:[%s2 + $0x58] sm:$0xff]
  %v344 = vld [vmem:[%s2 + $0x78] sm:$0xff]
  %v345 = vld [vmem:[%s2 + $0x98] sm:$0xff]
  %v346 = vld [vmem:[%s2 + $0xb8] sm:$0xff]
  %v347 = vld [vmem:[%s2 + $0xd8] sm:$0xff]
  %v348 = vld [vmem:[%s2 + $0xf8] sm:$0xff]
  %v349 = vld [vmem:[%s2 + $0x118] sm:$0xff]
  %v350 = vld [vmem:[%s2 + $0x138] sm:$0xff]
  %v351 = vld [vmem:[%s3 + $0x3] sm:$0x1]
  %v352 = vperm.slane %v351, 0
  %v354 = vsel %vm93, %v338, 0
  %v357 = vsel %vm93, %v339, 0
  %v360 = vsel %vm93, %v340, 0
  %362 = vmatpush.msra.mxu0 0.0
  %363 = vmatpush.msra.mxu0 0.0
  %364 = vmatpush.msra.mxu0 0.0
  %365 = vmatpush.msra.mxu0 0.0
  %366 = vmatpush.msra.mxu0 0.0
  %367 = vmatpush.msra.mxu0 0.0
  %368 = vmatpush.msra.mxu0 %v350
  %369 = vmatpush.msra.mxu0 %v349
  %370 = vmatpush.msra.mxu0 %v348
  %371 = vmatpush.msra.mxu0 %v347
  %372 = vmatpush.msra.mxu0 %v346
  %373 = vmatpush.msra.mxu0 %v345
  %374 = vmatpush.msra.mxu0 %v344
  %375 = vmatpush.msra.mxu0 %v343
  %376 = vmatpush.msra.mxu0 %v342
  %377 = vmatpush.msra.mxu0 %v341
  %378 = vmatmul.f32.gmra.mxu0 %v354
  %v379 = vpop.f32.mrf.mxu0
  %v380 = vadd.f32 %v352, %v379
  %381 = vmatmul.f32.gmra.mxu0 %v357
  %v382 = vpop.f32.mrf.mxu0
  %v383 = vadd.f32 %v352, %v382
  %384 = vmatmul.f32.gmra.mxu0 %v360
  %v385 = vpop.f32.mrf.mxu0
  %v386 = vadd.f32 %v352, %v385
  %387 = vdwg.mxu0
  %v388 = vmax.f32 %v380, 0.0
  %v389 = vmax.f32 %v383, 0.0
  %v390 = vmax.f32 %v386, 0.0
  %394 = vrot.lane.b32.xlu0 %v306, 88
  %v395 = vpop.permute.xlu0 %394
  %396 = vrot.lane.b32.xlu0 %v309, 88
  %v397 = vpop.permute.xlu0 %396
  %398 = vrot.lane.b32.xlu0 %v312, 88
  %v399 = vpop.permute.xlu0 %398
  %v403 = vadd.f32 %v388, %v395
  %v404 = vadd.f32 %v389, %v397
  %v405 = vadd.f32 %v390, %v399
  %v406 = vmax.f32 %v403, 0.0
  %v407 = vmax.f32 %v404, 0.0
  %v408 = vmax.f32 %v405, 0.0
  %v409 = vmul.f32 %v406, %v32
  %v410 = vmul.f32 %v407, %v33
  %v411 = vmul.f32 %v408, %v34
  %v412 = vadd.f32 %v29, %v409
  %v413 = vadd.f32 %v30, %v410
  %v414 = vadd.f32 %v31, %v411
  %v415 = vld [vmem:[%s5] sm:$0xff]
  %v416 = vld [vmem:[%s5 + $0x8] sm:$0xff]
  %v417 = vld [vmem:[%s5 + $0x10] sm:$0xff]
  %vm418 = vcmp.gt.f32.partialorder %v415, 0.5
  %vm419 = vcmp.gt.f32.partialorder %v416, 0.5
  %vm420 = vcmp.gt.f32.partialorder %v417, 0.5
  %v421 = vsel %vm418, %v412, %v29
  %v422 = vsel %vm419, %v413, %v30
  %v423 = vsel %vm420, %v414, %v31
  %v424 = vrot.slane %v421, 7
  %v425 = vrot.slane %v422, 7
  %v426 = vrot.slane %v423, 7
  %v427 = vsel %vm43, %v425, %v426
  %v428 = vsel %vm43, %v424, %v425
  %v429 = vsel %vm43, %v426, %v424
  %v430 = vmul.f32 %v429, %v50
  %v431 = vmul.f32 %v428, %v55
  %v432 = vmul.f32 %v427, %v60
  %436 = vrot.lane.b32.xlu0 %v421, 40
  %v437 = vpop.permute.xlu0 %436
  %438 = vrot.lane.b32.xlu0 %v422, 40
  %v439 = vpop.permute.xlu0 %438
  %440 = vrot.lane.b32.xlu0 %v423, 40
  %v441 = vpop.permute.xlu0 %440
  %v445 = vsel %vm77, %v430, %v437
  %v446 = vsel %vm77, %v431, %v439
  %v447 = vsel %vm77, %v432, %v441
  %v449 = vsel %vm93, %v445, 0
  %v452 = vsel %vm93, %v446, 0
  %v455 = vsel %vm93, %v447, 0
  %457 = vmatpush.msra.mxu0 0.0
  %458 = vmatpush.msra.mxu0 0.0
  %459 = vmatpush.msra.mxu0 0.0
  %460 = vmatpush.msra.mxu0 0.0
  %461 = vmatpush.msra.mxu0 0.0
  %462 = vmatpush.msra.mxu0 0.0
  %463 = vmatpush.msra.mxu0 %v90
  %464 = vmatpush.msra.mxu0 %v89
  %465 = vmatpush.msra.mxu0 %v88
  %466 = vmatpush.msra.mxu0 %v87
  %467 = vmatpush.msra.mxu0 %v86
  %468 = vmatpush.msra.mxu0 %v85
  %469 = vmatpush.msra.mxu0 %v84
  %470 = vmatpush.msra.mxu0 %v83
  %471 = vmatpush.msra.mxu0 %v82
  %472 = vmatpush.msra.mxu0 %v81
  %473 = vmatmul.f32.gmra.mxu0 %v449
  %v474 = vpop.f32.mrf.mxu0
  %v475 = vadd.f32 %v92, %v474
  %476 = vmatmul.f32.gmra.mxu0 %v452
  %v477 = vpop.f32.mrf.mxu0
  %v478 = vadd.f32 %v92, %v477
  %479 = vmatmul.f32.gmra.mxu0 %v455
  %v480 = vpop.f32.mrf.mxu0
  %v481 = vadd.f32 %v92, %v480
  %482 = vdwg.mxu0
  %v483 = vmax.f32 %v475, 0.0
  %v484 = vmax.f32 %v478, 0.0
  %v485 = vmax.f32 %v481, 0.0
  %v486 = vrot.slane %v483, 7
  %v487 = vrot.slane %v484, 7
  %v488 = vrot.slane %v485, 7
  %v489 = vsel %vm43, %v487, %v488
  %v490 = vsel %vm43, %v486, %v487
  %v491 = vsel %vm43, %v488, %v486
  %v492 = vmul.f32 %v491, %v50
  %v493 = vmul.f32 %v490, %v55
  %v494 = vmul.f32 %v489, %v60
  %498 = vrot.lane.b32.xlu0 %v483, 48
  %v499 = vpop.permute.xlu0 %498
  %500 = vrot.lane.b32.xlu0 %v484, 48
  %v501 = vpop.permute.xlu0 %500
  %502 = vrot.lane.b32.xlu0 %v485, 48
  %v503 = vpop.permute.xlu0 %502
  %v507 = vsel %vm153, %v492, %v499
  %v508 = vsel %vm153, %v493, %v501
  %v509 = vsel %vm153, %v494, %v503
  %v511 = vsel %vm171, %v507, 0
  %v514 = vsel %vm171, %v508, 0
  %v517 = vsel %vm171, %v509, 0
  %519 = vmatpush.msra.mxu0 0.0
  %520 = vmatpush.msra.mxu0 0.0
  %521 = vmatpush.msra.mxu0 0.0
  %522 = vmatpush.msra.mxu0 0.0
  %523 = vmatpush.msra.mxu0 %v168
  %524 = vmatpush.msra.mxu0 %v167
  %525 = vmatpush.msra.mxu0 %v166
  %526 = vmatpush.msra.mxu0 %v165
  %527 = vmatpush.msra.mxu0 %v164
  %528 = vmatpush.msra.mxu0 %v163
  %529 = vmatpush.msra.mxu0 %v162
  %530 = vmatpush.msra.mxu0 %v161
  %531 = vmatpush.msra.mxu0 %v160
  %532 = vmatpush.msra.mxu0 %v159
  %533 = vmatpush.msra.mxu0 %v158
  %534 = vmatpush.msra.mxu0 %v157
  %535 = vmatmul.f32.gmra.mxu0 %v511
  %v536 = vpop.f32.mrf.mxu0
  %v537 = vadd.f32 %v170, %v536
  %538 = vmatmul.f32.gmra.mxu0 %v514
  %v539 = vpop.f32.mrf.mxu0
  %v540 = vadd.f32 %v170, %v539
  %541 = vmatmul.f32.gmra.mxu0 %v517
  %v542 = vpop.f32.mrf.mxu0
  %v543 = vadd.f32 %v170, %v542
  %544 = vdwg.mxu0
  %v545 = vmax.f32 %v537, 0.0
  %v546 = vmax.f32 %v540, 0.0
  %v547 = vmax.f32 %v543, 0.0
  %551 = vrot.lane.b32.xlu0 %v475, 80
  %v552 = vpop.permute.xlu0 %551
  %553 = vrot.lane.b32.xlu0 %v478, 80
  %v554 = vpop.permute.xlu0 %553
  %555 = vrot.lane.b32.xlu0 %v481, 80
  %v556 = vpop.permute.xlu0 %555
  %v560 = vadd.f32 %v545, %v552
  %v561 = vadd.f32 %v546, %v554
  %v562 = vadd.f32 %v547, %v556
  %v563 = vmax.f32 %v560, 0.0
  %v564 = vmax.f32 %v561, 0.0
  %v565 = vmax.f32 %v562, 0.0
  %v566 = vrot.slane %v563, 6
  %v567 = vrot.slane %v564, 6
  %v568 = vrot.slane %v565, 6
  %v569 = vsel %vm231, %v567, %v568
  %v570 = vsel %vm231, %v566, %v567
  %v571 = vsel %vm231, %v568, %v566
  %v572 = vmul.f32 %v571, %v237
  %v573 = vmul.f32 %v570, %v241
  %v574 = vmul.f32 %v569, %v245
  %578 = vrot.lane.b32.xlu0 %v563, 48
  %v579 = vpop.permute.xlu0 %578
  %580 = vrot.lane.b32.xlu0 %v564, 48
  %v581 = vpop.permute.xlu0 %580
  %582 = vrot.lane.b32.xlu0 %v565, 48
  %v583 = vpop.permute.xlu0 %582
  %v587 = vsel %vm153, %v572, %v579
  %v588 = vsel %vm153, %v573, %v581
  %v589 = vsel %vm153, %v574, %v583
  %v591 = vsel %vm171, %v587, 0
  %v594 = vsel %vm171, %v588, 0
  %v597 = vsel %vm171, %v589, 0
  %599 = vmatpush.msra.mxu0 0.0
  %600 = vmatpush.msra.mxu0 0.0
  %601 = vmatpush.msra.mxu0 0.0
  %602 = vmatpush.msra.mxu0 0.0
  %603 = vmatpush.msra.mxu0 %v276
  %604 = vmatpush.msra.mxu0 %v275
  %605 = vmatpush.msra.mxu0 %v274
  %606 = vmatpush.msra.mxu0 %v273
  %607 = vmatpush.msra.mxu0 %v272
  %608 = vmatpush.msra.mxu0 %v271
  %609 = vmatpush.msra.mxu0 %v270
  %610 = vmatpush.msra.mxu0 %v269
  %611 = vmatpush.msra.mxu0 %v268
  %612 = vmatpush.msra.mxu0 %v267
  %613 = vmatpush.msra.mxu0 %v266
  %614 = vmatpush.msra.mxu0 %v265
  %615 = vmatmul.f32.gmra.mxu0 %v591
  %v616 = vpop.f32.mrf.mxu0
  %v617 = vadd.f32 %v278, %v616
  %618 = vmatmul.f32.gmra.mxu0 %v594
  %v619 = vpop.f32.mrf.mxu0
  %v620 = vadd.f32 %v278, %v619
  %621 = vmatmul.f32.gmra.mxu0 %v597
  %v622 = vpop.f32.mrf.mxu0
  %v623 = vadd.f32 %v278, %v622
  %624 = vdwg.mxu0
  %v625 = vmax.f32 %v617, 0.0
  %v626 = vmax.f32 %v620, 0.0
  %v627 = vmax.f32 %v623, 0.0
  %v628 = vrot.slane %v625, 6
  %v629 = vrot.slane %v626, 6
  %v630 = vrot.slane %v627, 6
  %v631 = vsel %vm231, %v629, %v630
  %v632 = vsel %vm231, %v628, %v629
  %v633 = vsel %vm231, %v630, %v628
  %v634 = vmul.f32 %v633, %v237
  %v635 = vmul.f32 %v632, %v241
  %v636 = vmul.f32 %v631, %v245
  %640 = vrot.lane.b32.xlu0 %v625, 40
  %v641 = vpop.permute.xlu0 %640
  %642 = vrot.lane.b32.xlu0 %v626, 40
  %v643 = vpop.permute.xlu0 %642
  %644 = vrot.lane.b32.xlu0 %v627, 40
  %v645 = vpop.permute.xlu0 %644
  %v649 = vsel %vm77, %v634, %v641
  %v650 = vsel %vm77, %v635, %v643
  %v651 = vsel %vm77, %v636, %v645
  %v653 = vsel %vm93, %v649, 0
  %v656 = vsel %vm93, %v650, 0
  %v659 = vsel %vm93, %v651, 0
  %661 = vmatpush.msra.mxu0 0.0
  %662 = vmatpush.msra.mxu0 0.0
  %663 = vmatpush.msra.mxu0 0.0
  %664 = vmatpush.msra.mxu0 0.0
  %665 = vmatpush.msra.mxu0 0.0
  %666 = vmatpush.msra.mxu0 0.0
  %667 = vmatpush.msra.mxu0 %v350
  %668 = vmatpush.msra.mxu0 %v349
  %669 = vmatpush.msra.mxu0 %v348
  %670 = vmatpush.msra.mxu0 %v347
  %671 = vmatpush.msra.mxu0 %v346
  %672 = vmatpush.msra.mxu0 %v345
  %673 = vmatpush.msra.mxu0 %v344
  %674 = vmatpush.msra.mxu0 %v343
  %675 = vmatpush.msra.mxu0 %v342
  %676 = vmatpush.msra.mxu0 %v341
  %677 = vmatmul.f32.gmra.mxu0 %v653
  %v678 = vpop.f32.mrf.mxu0
  %v679 = vadd.f32 %v352, %v678
  %680 = vmatmul.f32.gmra.mxu0 %v656
  %v681 = vpop.f32.mrf.mxu0
  %v682 = vadd.f32 %v352, %v681
  %683 = vmatmul.f32.gmra.mxu0 %v659
  %v684 = vpop.f32.mrf.mxu0
  %v685 = vadd.f32 %v352, %v684
  %686 = vdwg.mxu0
  %v687 = vmax.f32 %v679, 0.0
  %v688 = vmax.f32 %v682, 0.0
  %v689 = vmax.f32 %v685, 0.0
  %693 = vrot.lane.b32.xlu0 %v617, 88
  %v694 = vpop.permute.xlu0 %693
  %695 = vrot.lane.b32.xlu0 %v620, 88
  %v696 = vpop.permute.xlu0 %695
  %697 = vrot.lane.b32.xlu0 %v623, 88
  %v698 = vpop.permute.xlu0 %697
  %v702 = vadd.f32 %v687, %v694
  %v703 = vadd.f32 %v688, %v696
  %v704 = vadd.f32 %v689, %v698
  %v705 = vmax.f32 %v702, 0.0
  %v706 = vmax.f32 %v703, 0.0
  %v707 = vmax.f32 %v704, 0.0
  %v708 = vmul.f32 %v705, %v32
  %v709 = vmul.f32 %v706, %v33
  %v710 = vmul.f32 %v707, %v34
  %v711 = vadd.f32 %v29, %v708
  %v712 = vadd.f32 %v30, %v709
  %v713 = vadd.f32 %v31, %v710
  %s714 = scalar_lea.vmem %s5, 24
  %v715 = vld [vmem:[%s714] sm:$0xff]
  %v716 = vld [vmem:[%s714 + $0x8] sm:$0xff]
  %v717 = vld [vmem:[%s714 + $0x10] sm:$0xff]
  %vm718 = vcmp.gt.f32.partialorder %v715, 0.5
  %vm719 = vcmp.gt.f32.partialorder %v716, 0.5
  %vm720 = vcmp.gt.f32.partialorder %v717, 0.5
  %v721 = vsel %vm718, %v711, %v421
  %v722 = vsel %vm719, %v712, %v422
  %v723 = vsel %vm720, %v713, %v423
  %v724 = vrot.slane %v721, 7
  %v725 = vrot.slane %v722, 7
  %v726 = vrot.slane %v723, 7
  %v727 = vsel %vm43, %v725, %v726
  %v728 = vsel %vm43, %v724, %v725
  %v729 = vsel %vm43, %v726, %v724
  %v730 = vmul.f32 %v729, %v50
  %v731 = vmul.f32 %v728, %v55
  %v732 = vmul.f32 %v727, %v60
  %736 = vrot.lane.b32.xlu0 %v721, 40
  %v737 = vpop.permute.xlu0 %736
  %738 = vrot.lane.b32.xlu0 %v722, 40
  %v739 = vpop.permute.xlu0 %738
  %740 = vrot.lane.b32.xlu0 %v723, 40
  %v741 = vpop.permute.xlu0 %740
  %v745 = vsel %vm77, %v730, %v737
  %v746 = vsel %vm77, %v731, %v739
  %v747 = vsel %vm77, %v732, %v741
  %v749 = vsel %vm93, %v745, 0
  %v752 = vsel %vm93, %v746, 0
  %v755 = vsel %vm93, %v747, 0
  %757 = vmatpush.msra.mxu0 0.0
  %758 = vmatpush.msra.mxu0 0.0
  %759 = vmatpush.msra.mxu0 0.0
  %760 = vmatpush.msra.mxu0 0.0
  %761 = vmatpush.msra.mxu0 0.0
  %762 = vmatpush.msra.mxu0 0.0
  %763 = vmatpush.msra.mxu0 %v90
  %764 = vmatpush.msra.mxu0 %v89
  %765 = vmatpush.msra.mxu0 %v88
  %766 = vmatpush.msra.mxu0 %v87
  %767 = vmatpush.msra.mxu0 %v86
  %768 = vmatpush.msra.mxu0 %v85
  %769 = vmatpush.msra.mxu0 %v84
  %770 = vmatpush.msra.mxu0 %v83
  %771 = vmatpush.msra.mxu0 %v82
  %772 = vmatpush.msra.mxu0 %v81
  %773 = vmatmul.f32.gmra.mxu0 %v749
  %v774 = vpop.f32.mrf.mxu0
  %v775 = vadd.f32 %v92, %v774
  %776 = vmatmul.f32.gmra.mxu0 %v752
  %v777 = vpop.f32.mrf.mxu0
  %v778 = vadd.f32 %v92, %v777
  %779 = vmatmul.f32.gmra.mxu0 %v755
  %v780 = vpop.f32.mrf.mxu0
  %v781 = vadd.f32 %v92, %v780
  %782 = vdwg.mxu0
  %v783 = vmax.f32 %v775, 0.0
  %v784 = vmax.f32 %v778, 0.0
  %v785 = vmax.f32 %v781, 0.0
  %v786 = vrot.slane %v783, 7
  %v787 = vrot.slane %v784, 7
  %v788 = vrot.slane %v785, 7
  %v789 = vsel %vm43, %v787, %v788
  %v790 = vsel %vm43, %v786, %v787
  %v791 = vsel %vm43, %v788, %v786
  %v792 = vmul.f32 %v791, %v50
  %v793 = vmul.f32 %v790, %v55
  %v794 = vmul.f32 %v789, %v60
  %798 = vrot.lane.b32.xlu0 %v783, 48
  %v799 = vpop.permute.xlu0 %798
  %800 = vrot.lane.b32.xlu0 %v784, 48
  %v801 = vpop.permute.xlu0 %800
  %802 = vrot.lane.b32.xlu0 %v785, 48
  %v803 = vpop.permute.xlu0 %802
  %v807 = vsel %vm153, %v792, %v799
  %v808 = vsel %vm153, %v793, %v801
  %v809 = vsel %vm153, %v794, %v803
  %v811 = vsel %vm171, %v807, 0
  %v814 = vsel %vm171, %v808, 0
  %v817 = vsel %vm171, %v809, 0
  %819 = vmatpush.msra.mxu0 0.0
  %820 = vmatpush.msra.mxu0 0.0
  %821 = vmatpush.msra.mxu0 0.0
  %822 = vmatpush.msra.mxu0 0.0
  %823 = vmatpush.msra.mxu0 %v168
  %824 = vmatpush.msra.mxu0 %v167
  %825 = vmatpush.msra.mxu0 %v166
  %826 = vmatpush.msra.mxu0 %v165
  %827 = vmatpush.msra.mxu0 %v164
  %828 = vmatpush.msra.mxu0 %v163
  %829 = vmatpush.msra.mxu0 %v162
  %830 = vmatpush.msra.mxu0 %v161
  %831 = vmatpush.msra.mxu0 %v160
  %832 = vmatpush.msra.mxu0 %v159
  %833 = vmatpush.msra.mxu0 %v158
  %834 = vmatpush.msra.mxu0 %v157
  %835 = vmatmul.f32.gmra.mxu0 %v811
  %v836 = vpop.f32.mrf.mxu0
  %v837 = vadd.f32 %v170, %v836
  %838 = vmatmul.f32.gmra.mxu0 %v814
  %v839 = vpop.f32.mrf.mxu0
  %v840 = vadd.f32 %v170, %v839
  %841 = vmatmul.f32.gmra.mxu0 %v817
  %v842 = vpop.f32.mrf.mxu0
  %v843 = vadd.f32 %v170, %v842
  %844 = vdwg.mxu0
  %v845 = vmax.f32 %v837, 0.0
  %v846 = vmax.f32 %v840, 0.0
  %v847 = vmax.f32 %v843, 0.0
  %851 = vrot.lane.b32.xlu0 %v775, 80
  %v852 = vpop.permute.xlu0 %851
  %853 = vrot.lane.b32.xlu0 %v778, 80
  %v854 = vpop.permute.xlu0 %853
  %855 = vrot.lane.b32.xlu0 %v781, 80
  %v856 = vpop.permute.xlu0 %855
  %v860 = vadd.f32 %v845, %v852
  %v861 = vadd.f32 %v846, %v854
  %v862 = vadd.f32 %v847, %v856
  %v863 = vmax.f32 %v860, 0.0
  %v864 = vmax.f32 %v861, 0.0
  %v865 = vmax.f32 %v862, 0.0
  %v866 = vrot.slane %v863, 6
  %v867 = vrot.slane %v864, 6
  %v868 = vrot.slane %v865, 6
  %v869 = vsel %vm231, %v867, %v868
  %v870 = vsel %vm231, %v866, %v867
  %v871 = vsel %vm231, %v868, %v866
  %v872 = vmul.f32 %v871, %v237
  %v873 = vmul.f32 %v870, %v241
  %v874 = vmul.f32 %v869, %v245
  %878 = vrot.lane.b32.xlu0 %v863, 48
  %v879 = vpop.permute.xlu0 %878
  %880 = vrot.lane.b32.xlu0 %v864, 48
  %v881 = vpop.permute.xlu0 %880
  %882 = vrot.lane.b32.xlu0 %v865, 48
  %v883 = vpop.permute.xlu0 %882
  %v887 = vsel %vm153, %v872, %v879
  %v888 = vsel %vm153, %v873, %v881
  %v889 = vsel %vm153, %v874, %v883
  %v891 = vsel %vm171, %v887, 0
  %v894 = vsel %vm171, %v888, 0
  %v897 = vsel %vm171, %v889, 0
  %899 = vmatpush.msra.mxu0 0.0
  %900 = vmatpush.msra.mxu0 0.0
  %901 = vmatpush.msra.mxu0 0.0
  %902 = vmatpush.msra.mxu0 0.0
  %903 = vmatpush.msra.mxu0 %v276
  %904 = vmatpush.msra.mxu0 %v275
  %905 = vmatpush.msra.mxu0 %v274
  %906 = vmatpush.msra.mxu0 %v273
  %907 = vmatpush.msra.mxu0 %v272
  %908 = vmatpush.msra.mxu0 %v271
  %909 = vmatpush.msra.mxu0 %v270
  %910 = vmatpush.msra.mxu0 %v269
  %911 = vmatpush.msra.mxu0 %v268
  %912 = vmatpush.msra.mxu0 %v267
  %913 = vmatpush.msra.mxu0 %v266
  %914 = vmatpush.msra.mxu0 %v265
  %915 = vmatmul.f32.gmra.mxu0 %v891
  %v916 = vpop.f32.mrf.mxu0
  %v917 = vadd.f32 %v278, %v916
  %918 = vmatmul.f32.gmra.mxu0 %v894
  %v919 = vpop.f32.mrf.mxu0
  %v920 = vadd.f32 %v278, %v919
  %921 = vmatmul.f32.gmra.mxu0 %v897
  %v922 = vpop.f32.mrf.mxu0
  %v923 = vadd.f32 %v278, %v922
  %924 = vdwg.mxu0
  %v925 = vmax.f32 %v917, 0.0
  %v926 = vmax.f32 %v920, 0.0
  %v927 = vmax.f32 %v923, 0.0
  %v928 = vrot.slane %v925, 6
  %v929 = vrot.slane %v926, 6
  %v930 = vrot.slane %v927, 6
  %v931 = vsel %vm231, %v929, %v930
  %v932 = vsel %vm231, %v928, %v929
  %v933 = vsel %vm231, %v930, %v928
  %v934 = vmul.f32 %v933, %v237
  %v935 = vmul.f32 %v932, %v241
  %v936 = vmul.f32 %v931, %v245
  %940 = vrot.lane.b32.xlu0 %v925, 40
  %v941 = vpop.permute.xlu0 %940
  %942 = vrot.lane.b32.xlu0 %v926, 40
  %v943 = vpop.permute.xlu0 %942
  %944 = vrot.lane.b32.xlu0 %v927, 40
  %v945 = vpop.permute.xlu0 %944
  %v949 = vsel %vm77, %v934, %v941
  %v950 = vsel %vm77, %v935, %v943
  %v951 = vsel %vm77, %v936, %v945
  %v953 = vsel %vm93, %v949, 0
  %v956 = vsel %vm93, %v950, 0
  %v959 = vsel %vm93, %v951, 0
  %961 = vmatpush.msra.mxu0 0.0
  %962 = vmatpush.msra.mxu0 0.0
  %963 = vmatpush.msra.mxu0 0.0
  %964 = vmatpush.msra.mxu0 0.0
  %965 = vmatpush.msra.mxu0 0.0
  %966 = vmatpush.msra.mxu0 0.0
  %967 = vmatpush.msra.mxu0 %v350
  %968 = vmatpush.msra.mxu0 %v349
  %969 = vmatpush.msra.mxu0 %v348
  %970 = vmatpush.msra.mxu0 %v347
  %971 = vmatpush.msra.mxu0 %v346
  %972 = vmatpush.msra.mxu0 %v345
  %973 = vmatpush.msra.mxu0 %v344
  %974 = vmatpush.msra.mxu0 %v343
  %975 = vmatpush.msra.mxu0 %v342
  %976 = vmatpush.msra.mxu0 %v341
  %977 = vmatmul.f32.gmra.mxu0 %v953
  %v978 = vpop.f32.mrf.mxu0
  %v979 = vadd.f32 %v352, %v978
  %980 = vmatmul.f32.gmra.mxu0 %v956
  %v981 = vpop.f32.mrf.mxu0
  %v982 = vadd.f32 %v352, %v981
  %983 = vmatmul.f32.gmra.mxu0 %v959
  %v984 = vpop.f32.mrf.mxu0
  %v985 = vadd.f32 %v352, %v984
  %986 = vdwg.mxu0
  %v987 = vmax.f32 %v979, 0.0
  %v988 = vmax.f32 %v982, 0.0
  %v989 = vmax.f32 %v985, 0.0
  %993 = vrot.lane.b32.xlu0 %v917, 88
  %v994 = vpop.permute.xlu0 %993
  %995 = vrot.lane.b32.xlu0 %v920, 88
  %v996 = vpop.permute.xlu0 %995
  %997 = vrot.lane.b32.xlu0 %v923, 88
  %v998 = vpop.permute.xlu0 %997
  %v1002 = vadd.f32 %v987, %v994
  %v1003 = vadd.f32 %v988, %v996
  %v1004 = vadd.f32 %v989, %v998
  %v1005 = vmax.f32 %v1002, 0.0
  %v1006 = vmax.f32 %v1003, 0.0
  %v1007 = vmax.f32 %v1004, 0.0
  %v1008 = vmul.f32 %v1005, %v32
  %v1009 = vmul.f32 %v1006, %v33
  %v1010 = vmul.f32 %v1007, %v34
  %v1011 = vadd.f32 %v29, %v1008
  %v1012 = vadd.f32 %v30, %v1009
  %v1013 = vadd.f32 %v31, %v1010
  %s1014 = scalar_lea.vmem %s5, 48
  %v1015 = vld [vmem:[%s1014] sm:$0xff]
  %v1016 = vld [vmem:[%s1014 + $0x8] sm:$0xff]
  %v1017 = vld [vmem:[%s1014 + $0x10] sm:$0xff]
  %vm1018 = vcmp.gt.f32.partialorder %v1015, 0.5
  %vm1019 = vcmp.gt.f32.partialorder %v1016, 0.5
  %vm1020 = vcmp.gt.f32.partialorder %v1017, 0.5
  %v1021 = vsel %vm1018, %v1011, %v721
  %v1022 = vsel %vm1019, %v1012, %v722
  %v1023 = vsel %vm1020, %v1013, %v723
  %v1024 = vrot.slane %v1021, 7
  %v1025 = vrot.slane %v1022, 7
  %v1026 = vrot.slane %v1023, 7
  %v1027 = vsel %vm43, %v1025, %v1026
  %v1028 = vsel %vm43, %v1024, %v1025
  %v1029 = vsel %vm43, %v1026, %v1024
  %v1030 = vmul.f32 %v1029, %v50
  %v1031 = vmul.f32 %v1028, %v55
  %v1032 = vmul.f32 %v1027, %v60
  %1036 = vrot.lane.b32.xlu0 %v1021, 40
  %v1037 = vpop.permute.xlu0 %1036
  %1038 = vrot.lane.b32.xlu0 %v1022, 40
  %v1039 = vpop.permute.xlu0 %1038
  %1040 = vrot.lane.b32.xlu0 %v1023, 40
  %v1041 = vpop.permute.xlu0 %1040
  %v1045 = vsel %vm77, %v1030, %v1037
  %v1046 = vsel %vm77, %v1031, %v1039
  %v1047 = vsel %vm77, %v1032, %v1041
  %v1049 = vsel %vm93, %v1045, 0
  %v1052 = vsel %vm93, %v1046, 0
  %v1055 = vsel %vm93, %v1047, 0
  %1057 = vmatpush.msra.mxu0 0.0
  %1058 = vmatpush.msra.mxu0 0.0
  %1059 = vmatpush.msra.mxu0 0.0
  %1060 = vmatpush.msra.mxu0 0.0
  %1061 = vmatpush.msra.mxu0 0.0
  %1062 = vmatpush.msra.mxu0 0.0
  %1063 = vmatpush.msra.mxu0 %v90
  %1064 = vmatpush.msra.mxu0 %v89
  %1065 = vmatpush.msra.mxu0 %v88
  %1066 = vmatpush.msra.mxu0 %v87
  %1067 = vmatpush.msra.mxu0 %v86
  %1068 = vmatpush.msra.mxu0 %v85
  %1069 = vmatpush.msra.mxu0 %v84
  %1070 = vmatpush.msra.mxu0 %v83
  %1071 = vmatpush.msra.mxu0 %v82
  %1072 = vmatpush.msra.mxu0 %v81
  %1073 = vmatmul.f32.gmra.mxu0 %v1049
  %v1074 = vpop.f32.mrf.mxu0
  %v1075 = vadd.f32 %v92, %v1074
  %1076 = vmatmul.f32.gmra.mxu0 %v1052
  %v1077 = vpop.f32.mrf.mxu0
  %v1078 = vadd.f32 %v92, %v1077
  %1079 = vmatmul.f32.gmra.mxu0 %v1055
  %v1080 = vpop.f32.mrf.mxu0
  %v1081 = vadd.f32 %v92, %v1080
  %1082 = vdwg.mxu0
  %v1083 = vmax.f32 %v1075, 0.0
  %v1084 = vmax.f32 %v1078, 0.0
  %v1085 = vmax.f32 %v1081, 0.0
  %v1086 = vrot.slane %v1083, 7
  %v1087 = vrot.slane %v1084, 7
  %v1088 = vrot.slane %v1085, 7
  %v1089 = vsel %vm43, %v1087, %v1088
  %v1090 = vsel %vm43, %v1086, %v1087
  %v1091 = vsel %vm43, %v1088, %v1086
  %v1092 = vmul.f32 %v1091, %v50
  %v1093 = vmul.f32 %v1090, %v55
  %v1094 = vmul.f32 %v1089, %v60
  %1098 = vrot.lane.b32.xlu0 %v1083, 48
  %v1099 = vpop.permute.xlu0 %1098
  %1100 = vrot.lane.b32.xlu0 %v1084, 48
  %v1101 = vpop.permute.xlu0 %1100
  %1102 = vrot.lane.b32.xlu0 %v1085, 48
  %v1103 = vpop.permute.xlu0 %1102
  %v1107 = vsel %vm153, %v1092, %v1099
  %v1108 = vsel %vm153, %v1093, %v1101
  %v1109 = vsel %vm153, %v1094, %v1103
  %v1111 = vsel %vm171, %v1107, 0
  %v1114 = vsel %vm171, %v1108, 0
  %v1117 = vsel %vm171, %v1109, 0
  %1119 = vmatpush.msra.mxu0 0.0
  %1120 = vmatpush.msra.mxu0 0.0
  %1121 = vmatpush.msra.mxu0 0.0
  %1122 = vmatpush.msra.mxu0 0.0
  %1123 = vmatpush.msra.mxu0 %v168
  %1124 = vmatpush.msra.mxu0 %v167
  %1125 = vmatpush.msra.mxu0 %v166
  %1126 = vmatpush.msra.mxu0 %v165
  %1127 = vmatpush.msra.mxu0 %v164
  %1128 = vmatpush.msra.mxu0 %v163
  %1129 = vmatpush.msra.mxu0 %v162
  %1130 = vmatpush.msra.mxu0 %v161
  %1131 = vmatpush.msra.mxu0 %v160
  %1132 = vmatpush.msra.mxu0 %v159
  %1133 = vmatpush.msra.mxu0 %v158
  %1134 = vmatpush.msra.mxu0 %v157
  %1135 = vmatmul.f32.gmra.mxu0 %v1111
  %v1136 = vpop.f32.mrf.mxu0
  %v1137 = vadd.f32 %v170, %v1136
  %1138 = vmatmul.f32.gmra.mxu0 %v1114
  %v1139 = vpop.f32.mrf.mxu0
  %v1140 = vadd.f32 %v170, %v1139
  %1141 = vmatmul.f32.gmra.mxu0 %v1117
  %v1142 = vpop.f32.mrf.mxu0
  %v1143 = vadd.f32 %v170, %v1142
  %1144 = vdwg.mxu0
  %v1145 = vmax.f32 %v1137, 0.0
  %v1146 = vmax.f32 %v1140, 0.0
  %v1147 = vmax.f32 %v1143, 0.0
  %1151 = vrot.lane.b32.xlu0 %v1075, 80
  %v1152 = vpop.permute.xlu0 %1151
  %1153 = vrot.lane.b32.xlu0 %v1078, 80
  %v1154 = vpop.permute.xlu0 %1153
  %1155 = vrot.lane.b32.xlu0 %v1081, 80
  %v1156 = vpop.permute.xlu0 %1155
  %v1160 = vadd.f32 %v1145, %v1152
  %v1161 = vadd.f32 %v1146, %v1154
  %v1162 = vadd.f32 %v1147, %v1156
  %v1163 = vmax.f32 %v1160, 0.0
  %v1164 = vmax.f32 %v1161, 0.0
  %v1165 = vmax.f32 %v1162, 0.0
  %v1166 = vrot.slane %v1163, 6
  %v1167 = vrot.slane %v1164, 6
  %v1168 = vrot.slane %v1165, 6
  %v1169 = vsel %vm231, %v1167, %v1168
  %v1170 = vsel %vm231, %v1166, %v1167
  %v1171 = vsel %vm231, %v1168, %v1166
  %v1172 = vmul.f32 %v1171, %v237
  %v1173 = vmul.f32 %v1170, %v241
  %v1174 = vmul.f32 %v1169, %v245
  %1178 = vrot.lane.b32.xlu0 %v1163, 48
  %v1179 = vpop.permute.xlu0 %1178
  %1180 = vrot.lane.b32.xlu0 %v1164, 48
  %v1181 = vpop.permute.xlu0 %1180
  %1182 = vrot.lane.b32.xlu0 %v1165, 48
  %v1183 = vpop.permute.xlu0 %1182
  %v1187 = vsel %vm153, %v1172, %v1179
  %v1188 = vsel %vm153, %v1173, %v1181
  %v1189 = vsel %vm153, %v1174, %v1183
  %v1191 = vsel %vm171, %v1187, 0
  %v1194 = vsel %vm171, %v1188, 0
  %v1197 = vsel %vm171, %v1189, 0
  %1199 = vmatpush.msra.mxu0 0.0
  %1200 = vmatpush.msra.mxu0 0.0
  %1201 = vmatpush.msra.mxu0 0.0
  %1202 = vmatpush.msra.mxu0 0.0
  %1203 = vmatpush.msra.mxu0 %v276
  %1204 = vmatpush.msra.mxu0 %v275
  %1205 = vmatpush.msra.mxu0 %v274
  %1206 = vmatpush.msra.mxu0 %v273
  %1207 = vmatpush.msra.mxu0 %v272
  %1208 = vmatpush.msra.mxu0 %v271
  %1209 = vmatpush.msra.mxu0 %v270
  %1210 = vmatpush.msra.mxu0 %v269
  %1211 = vmatpush.msra.mxu0 %v268
  %1212 = vmatpush.msra.mxu0 %v267
  %1213 = vmatpush.msra.mxu0 %v266
  %1214 = vmatpush.msra.mxu0 %v265
  %1215 = vmatmul.f32.gmra.mxu0 %v1191
  %v1216 = vpop.f32.mrf.mxu0
  %v1217 = vadd.f32 %v278, %v1216
  %1218 = vmatmul.f32.gmra.mxu0 %v1194
  %v1219 = vpop.f32.mrf.mxu0
  %v1220 = vadd.f32 %v278, %v1219
  %1221 = vmatmul.f32.gmra.mxu0 %v1197
  %v1222 = vpop.f32.mrf.mxu0
  %v1223 = vadd.f32 %v278, %v1222
  %1224 = vdwg.mxu0
  %v1225 = vmax.f32 %v1217, 0.0
  %v1226 = vmax.f32 %v1220, 0.0
  %v1227 = vmax.f32 %v1223, 0.0
  %v1228 = vrot.slane %v1225, 6
  %v1229 = vrot.slane %v1226, 6
  %v1230 = vrot.slane %v1227, 6
  %v1231 = vsel %vm231, %v1229, %v1230
  %v1232 = vsel %vm231, %v1228, %v1229
  %v1233 = vsel %vm231, %v1230, %v1228
  %v1234 = vmul.f32 %v1233, %v237
  %v1235 = vmul.f32 %v1232, %v241
  %v1236 = vmul.f32 %v1231, %v245
  %1240 = vrot.lane.b32.xlu0 %v1225, 40
  %v1241 = vpop.permute.xlu0 %1240
  %1242 = vrot.lane.b32.xlu0 %v1226, 40
  %v1243 = vpop.permute.xlu0 %1242
  %1244 = vrot.lane.b32.xlu0 %v1227, 40
  %v1245 = vpop.permute.xlu0 %1244
  %v1249 = vsel %vm77, %v1234, %v1241
  %v1250 = vsel %vm77, %v1235, %v1243
  %v1251 = vsel %vm77, %v1236, %v1245
  %v1253 = vsel %vm93, %v1249, 0
  %v1256 = vsel %vm93, %v1250, 0
  %v1259 = vsel %vm93, %v1251, 0
  %1261 = vmatpush.msra.mxu0 0.0
  %1262 = vmatpush.msra.mxu0 0.0
  %1263 = vmatpush.msra.mxu0 0.0
  %1264 = vmatpush.msra.mxu0 0.0
  %1265 = vmatpush.msra.mxu0 0.0
  %1266 = vmatpush.msra.mxu0 0.0
  %1267 = vmatpush.msra.mxu0 %v350
  %1268 = vmatpush.msra.mxu0 %v349
  %1269 = vmatpush.msra.mxu0 %v348
  %1270 = vmatpush.msra.mxu0 %v347
  %1271 = vmatpush.msra.mxu0 %v346
  %1272 = vmatpush.msra.mxu0 %v345
  %1273 = vmatpush.msra.mxu0 %v344
  %1274 = vmatpush.msra.mxu0 %v343
  %1275 = vmatpush.msra.mxu0 %v342
  %1276 = vmatpush.msra.mxu0 %v341
  %1277 = vmatmul.f32.gmra.mxu0 %v1253
  %v1278 = vpop.f32.mrf.mxu0
  %v1279 = vadd.f32 %v352, %v1278
  %1280 = vmatmul.f32.gmra.mxu0 %v1256
  %v1281 = vpop.f32.mrf.mxu0
  %v1282 = vadd.f32 %v352, %v1281
  %1283 = vmatmul.f32.gmra.mxu0 %v1259
  %v1284 = vpop.f32.mrf.mxu0
  %v1285 = vadd.f32 %v352, %v1284
  %1286 = vdwg.mxu0
  %v1287 = vmax.f32 %v1279, 0.0
  %v1288 = vmax.f32 %v1282, 0.0
  %v1289 = vmax.f32 %v1285, 0.0
  %1293 = vrot.lane.b32.xlu0 %v1217, 88
  %v1294 = vpop.permute.xlu0 %1293
  %1295 = vrot.lane.b32.xlu0 %v1220, 88
  %v1296 = vpop.permute.xlu0 %1295
  %1297 = vrot.lane.b32.xlu0 %v1223, 88
  %v1298 = vpop.permute.xlu0 %1297
  %v1302 = vadd.f32 %v1287, %v1294
  %v1303 = vadd.f32 %v1288, %v1296
  %v1304 = vadd.f32 %v1289, %v1298
  %v1305 = vmax.f32 %v1302, 0.0
  %v1306 = vmax.f32 %v1303, 0.0
  %v1307 = vmax.f32 %v1304, 0.0
  %v1308 = vmul.f32 %v1305, %v32
  %v1309 = vmul.f32 %v1306, %v33
  %v1310 = vmul.f32 %v1307, %v34
  %v1311 = vadd.f32 %v29, %v1308
  %v1312 = vadd.f32 %v30, %v1309
  %v1313 = vadd.f32 %v31, %v1310
  %s1314 = scalar_lea.vmem %s5, 72
  %v1315 = vld [vmem:[%s1314] sm:$0xff]
  %v1316 = vld [vmem:[%s1314 + $0x8] sm:$0xff]
  %v1317 = vld [vmem:[%s1314 + $0x10] sm:$0xff]
  %vm1318 = vcmp.gt.f32.partialorder %v1315, 0.5
  %vm1319 = vcmp.gt.f32.partialorder %v1316, 0.5
  %vm1320 = vcmp.gt.f32.partialorder %v1317, 0.5
  %v1321 = vsel %vm1318, %v1311, %v1021
  %v1322 = vsel %vm1319, %v1312, %v1022
  %v1323 = vsel %vm1320, %v1313, %v1023
  %v1324 = vrot.slane %v1321, 7
  %v1325 = vrot.slane %v1322, 7
  %v1326 = vrot.slane %v1323, 7
  %v1327 = vsel %vm43, %v1325, %v1326
  %v1328 = vsel %vm43, %v1324, %v1325
  %v1329 = vsel %vm43, %v1326, %v1324
  %v1330 = vmul.f32 %v1329, %v50
  %v1331 = vmul.f32 %v1328, %v55
  %v1332 = vmul.f32 %v1327, %v60
  %1336 = vrot.lane.b32.xlu0 %v1321, 40
  %v1337 = vpop.permute.xlu0 %1336
  %1338 = vrot.lane.b32.xlu0 %v1322, 40
  %v1339 = vpop.permute.xlu0 %1338
  %1340 = vrot.lane.b32.xlu0 %v1323, 40
  %v1341 = vpop.permute.xlu0 %1340
  %v1345 = vsel %vm77, %v1330, %v1337
  %v1346 = vsel %vm77, %v1331, %v1339
  %v1347 = vsel %vm77, %v1332, %v1341
  %v1349 = vsel %vm93, %v1345, 0
  %v1352 = vsel %vm93, %v1346, 0
  %v1355 = vsel %vm93, %v1347, 0
  %1357 = vmatpush.msra.mxu0 0.0
  %1358 = vmatpush.msra.mxu0 0.0
  %1359 = vmatpush.msra.mxu0 0.0
  %1360 = vmatpush.msra.mxu0 0.0
  %1361 = vmatpush.msra.mxu0 0.0
  %1362 = vmatpush.msra.mxu0 0.0
  %1363 = vmatpush.msra.mxu0 %v90
  %1364 = vmatpush.msra.mxu0 %v89
  %1365 = vmatpush.msra.mxu0 %v88
  %1366 = vmatpush.msra.mxu0 %v87
  %1367 = vmatpush.msra.mxu0 %v86
  %1368 = vmatpush.msra.mxu0 %v85
  %1369 = vmatpush.msra.mxu0 %v84
  %1370 = vmatpush.msra.mxu0 %v83
  %1371 = vmatpush.msra.mxu0 %v82
  %1372 = vmatpush.msra.mxu0 %v81
  %1373 = vmatmul.f32.gmra.mxu0 %v1349
  %v1374 = vpop.f32.mrf.mxu0
  %v1375 = vadd.f32 %v92, %v1374
  %1376 = vmatmul.f32.gmra.mxu0 %v1352
  %v1377 = vpop.f32.mrf.mxu0
  %v1378 = vadd.f32 %v92, %v1377
  %1379 = vmatmul.f32.gmra.mxu0 %v1355
  %v1380 = vpop.f32.mrf.mxu0
  %v1381 = vadd.f32 %v92, %v1380
  %1382 = vdwg.mxu0
  %v1383 = vmax.f32 %v1375, 0.0
  %v1384 = vmax.f32 %v1378, 0.0
  %v1385 = vmax.f32 %v1381, 0.0
  %v1386 = vrot.slane %v1383, 7
  %v1387 = vrot.slane %v1384, 7
  %v1388 = vrot.slane %v1385, 7
  %v1389 = vsel %vm43, %v1387, %v1388
  %v1390 = vsel %vm43, %v1386, %v1387
  %v1391 = vsel %vm43, %v1388, %v1386
  %v1392 = vmul.f32 %v1391, %v50
  %v1393 = vmul.f32 %v1390, %v55
  %v1394 = vmul.f32 %v1389, %v60
  %1398 = vrot.lane.b32.xlu0 %v1383, 48
  %v1399 = vpop.permute.xlu0 %1398
  %1400 = vrot.lane.b32.xlu0 %v1384, 48
  %v1401 = vpop.permute.xlu0 %1400
  %1402 = vrot.lane.b32.xlu0 %v1385, 48
  %v1403 = vpop.permute.xlu0 %1402
  %v1407 = vsel %vm153, %v1392, %v1399
  %v1408 = vsel %vm153, %v1393, %v1401
  %v1409 = vsel %vm153, %v1394, %v1403
  %v1411 = vsel %vm171, %v1407, 0
  %v1414 = vsel %vm171, %v1408, 0
  %v1417 = vsel %vm171, %v1409, 0
  %1419 = vmatpush.msra.mxu0 0.0
  %1420 = vmatpush.msra.mxu0 0.0
  %1421 = vmatpush.msra.mxu0 0.0
  %1422 = vmatpush.msra.mxu0 0.0
  %1423 = vmatpush.msra.mxu0 %v168
  %1424 = vmatpush.msra.mxu0 %v167
  %1425 = vmatpush.msra.mxu0 %v166
  %1426 = vmatpush.msra.mxu0 %v165
  %1427 = vmatpush.msra.mxu0 %v164
  %1428 = vmatpush.msra.mxu0 %v163
  %1429 = vmatpush.msra.mxu0 %v162
  %1430 = vmatpush.msra.mxu0 %v161
  %1431 = vmatpush.msra.mxu0 %v160
  %1432 = vmatpush.msra.mxu0 %v159
  %1433 = vmatpush.msra.mxu0 %v158
  %1434 = vmatpush.msra.mxu0 %v157
  %1435 = vmatmul.f32.gmra.mxu0 %v1411
  %v1436 = vpop.f32.mrf.mxu0
  %v1437 = vadd.f32 %v170, %v1436
  %1438 = vmatmul.f32.gmra.mxu0 %v1414
  %v1439 = vpop.f32.mrf.mxu0
  %v1440 = vadd.f32 %v170, %v1439
  %1441 = vmatmul.f32.gmra.mxu0 %v1417
  %v1442 = vpop.f32.mrf.mxu0
  %v1443 = vadd.f32 %v170, %v1442
  %1444 = vdwg.mxu0
  %v1445 = vmax.f32 %v1437, 0.0
  %v1446 = vmax.f32 %v1440, 0.0
  %v1447 = vmax.f32 %v1443, 0.0
  %1451 = vrot.lane.b32.xlu0 %v1375, 80
  %v1452 = vpop.permute.xlu0 %1451
  %1453 = vrot.lane.b32.xlu0 %v1378, 80
  %v1454 = vpop.permute.xlu0 %1453
  %1455 = vrot.lane.b32.xlu0 %v1381, 80
  %v1456 = vpop.permute.xlu0 %1455
  %v1460 = vadd.f32 %v1445, %v1452
  %v1461 = vadd.f32 %v1446, %v1454
  %v1462 = vadd.f32 %v1447, %v1456
  %v1463 = vmax.f32 %v1460, 0.0
  %v1464 = vmax.f32 %v1461, 0.0
  %v1465 = vmax.f32 %v1462, 0.0
  %v1466 = vrot.slane %v1463, 6
  %v1467 = vrot.slane %v1464, 6
  %v1468 = vrot.slane %v1465, 6
  %v1469 = vsel %vm231, %v1467, %v1468
  %v1470 = vsel %vm231, %v1466, %v1467
  %v1471 = vsel %vm231, %v1468, %v1466
  %v1472 = vmul.f32 %v1471, %v237
  %v1473 = vmul.f32 %v1470, %v241
  %v1474 = vmul.f32 %v1469, %v245
  %1478 = vrot.lane.b32.xlu0 %v1463, 48
  %v1479 = vpop.permute.xlu0 %1478
  %1480 = vrot.lane.b32.xlu0 %v1464, 48
  %v1481 = vpop.permute.xlu0 %1480
  %1482 = vrot.lane.b32.xlu0 %v1465, 48
  %v1483 = vpop.permute.xlu0 %1482
  %v1487 = vsel %vm153, %v1472, %v1479
  %v1488 = vsel %vm153, %v1473, %v1481
  %v1489 = vsel %vm153, %v1474, %v1483
  %v1491 = vsel %vm171, %v1487, 0
  %v1494 = vsel %vm171, %v1488, 0
  %v1497 = vsel %vm171, %v1489, 0
  %1499 = vmatpush.msra.mxu0 0.0
  %1500 = vmatpush.msra.mxu0 0.0
  %1501 = vmatpush.msra.mxu0 0.0
  %1502 = vmatpush.msra.mxu0 0.0
  %1503 = vmatpush.msra.mxu0 %v276
  %1504 = vmatpush.msra.mxu0 %v275
  %1505 = vmatpush.msra.mxu0 %v274
  %1506 = vmatpush.msra.mxu0 %v273
  %1507 = vmatpush.msra.mxu0 %v272
  %1508 = vmatpush.msra.mxu0 %v271
  %1509 = vmatpush.msra.mxu0 %v270
  %1510 = vmatpush.msra.mxu0 %v269
  %1511 = vmatpush.msra.mxu0 %v268
  %1512 = vmatpush.msra.mxu0 %v267
  %1513 = vmatpush.msra.mxu0 %v266
  %1514 = vmatpush.msra.mxu0 %v265
  %1515 = vmatmul.f32.gmra.mxu0 %v1491
  %v1516 = vpop.f32.mrf.mxu0
  %v1517 = vadd.f32 %v278, %v1516
  %1518 = vmatmul.f32.gmra.mxu0 %v1494
  %v1519 = vpop.f32.mrf.mxu0
  %v1520 = vadd.f32 %v278, %v1519
  %1521 = vmatmul.f32.gmra.mxu0 %v1497
  %v1522 = vpop.f32.mrf.mxu0
  %v1523 = vadd.f32 %v278, %v1522
  %1524 = vdwg.mxu0
  %v1525 = vmax.f32 %v1517, 0.0
  %v1526 = vmax.f32 %v1520, 0.0
  %v1527 = vmax.f32 %v1523, 0.0
  %v1528 = vrot.slane %v1525, 6
  %v1529 = vrot.slane %v1526, 6
  %v1530 = vrot.slane %v1527, 6
  %v1531 = vsel %vm231, %v1529, %v1530
  %v1532 = vsel %vm231, %v1528, %v1529
  %v1533 = vsel %vm231, %v1530, %v1528
  %v1534 = vmul.f32 %v1533, %v237
  %v1535 = vmul.f32 %v1532, %v241
  %v1536 = vmul.f32 %v1531, %v245
  %1540 = vrot.lane.b32.xlu0 %v1525, 40
  %v1541 = vpop.permute.xlu0 %1540
  %1542 = vrot.lane.b32.xlu0 %v1526, 40
  %v1543 = vpop.permute.xlu0 %1542
  %1544 = vrot.lane.b32.xlu0 %v1527, 40
  %v1545 = vpop.permute.xlu0 %1544
  %v1549 = vsel %vm77, %v1534, %v1541
  %v1550 = vsel %vm77, %v1535, %v1543
  %v1551 = vsel %vm77, %v1536, %v1545
  %v1553 = vsel %vm93, %v1549, 0
  %v1556 = vsel %vm93, %v1550, 0
  %v1559 = vsel %vm93, %v1551, 0
  %1561 = vmatpush.msra.mxu0 0.0
  %1562 = vmatpush.msra.mxu0 0.0
  %1563 = vmatpush.msra.mxu0 0.0
  %1564 = vmatpush.msra.mxu0 0.0
  %1565 = vmatpush.msra.mxu0 0.0
  %1566 = vmatpush.msra.mxu0 0.0
  %1567 = vmatpush.msra.mxu0 %v350
  %1568 = vmatpush.msra.mxu0 %v349
  %1569 = vmatpush.msra.mxu0 %v348
  %1570 = vmatpush.msra.mxu0 %v347
  %1571 = vmatpush.msra.mxu0 %v346
  %1572 = vmatpush.msra.mxu0 %v345
  %1573 = vmatpush.msra.mxu0 %v344
  %1574 = vmatpush.msra.mxu0 %v343
  %1575 = vmatpush.msra.mxu0 %v342
  %1576 = vmatpush.msra.mxu0 %v341
  %1577 = vmatmul.f32.gmra.mxu0 %v1553
  %v1578 = vpop.f32.mrf.mxu0
  %v1579 = vadd.f32 %v352, %v1578
  %1580 = vmatmul.f32.gmra.mxu0 %v1556
  %v1581 = vpop.f32.mrf.mxu0
  %v1582 = vadd.f32 %v352, %v1581
  %1583 = vmatmul.f32.gmra.mxu0 %v1559
  %v1584 = vpop.f32.mrf.mxu0
  %v1585 = vadd.f32 %v352, %v1584
  %1586 = vdwg.mxu0
  %v1587 = vmax.f32 %v1579, 0.0
  %v1588 = vmax.f32 %v1582, 0.0
  %v1589 = vmax.f32 %v1585, 0.0
  %1593 = vrot.lane.b32.xlu0 %v1517, 88
  %v1594 = vpop.permute.xlu0 %1593
  %1595 = vrot.lane.b32.xlu0 %v1520, 88
  %v1596 = vpop.permute.xlu0 %1595
  %1597 = vrot.lane.b32.xlu0 %v1523, 88
  %v1598 = vpop.permute.xlu0 %1597
  %v1602 = vadd.f32 %v1587, %v1594
  %v1603 = vadd.f32 %v1588, %v1596
  %v1604 = vadd.f32 %v1589, %v1598
  %v1605 = vmax.f32 %v1602, 0.0
  %v1606 = vmax.f32 %v1603, 0.0
  %v1607 = vmax.f32 %v1604, 0.0
  %v1608 = vmul.f32 %v1605, %v32
  %v1609 = vmul.f32 %v1606, %v33
  %v1610 = vmul.f32 %v1607, %v34
  %v1611 = vadd.f32 %v29, %v1608
  %v1612 = vadd.f32 %v30, %v1609
  %v1613 = vadd.f32 %v31, %v1610
  %s1614 = scalar_lea.vmem %s5, 96
  %v1615 = vld [vmem:[%s1614] sm:$0xff]
  %v1616 = vld [vmem:[%s1614 + $0x8] sm:$0xff]
  %v1617 = vld [vmem:[%s1614 + $0x10] sm:$0xff]
  %vm1618 = vcmp.gt.f32.partialorder %v1615, 0.5
  %vm1619 = vcmp.gt.f32.partialorder %v1616, 0.5
  %vm1620 = vcmp.gt.f32.partialorder %v1617, 0.5
  %v1621 = vsel %vm1618, %v1611, %v1321
  %v1622 = vsel %vm1619, %v1612, %v1322
  %v1623 = vsel %vm1620, %v1613, %v1323
  %v1624 = vrot.slane %v1621, 7
  %v1625 = vrot.slane %v1622, 7
  %v1626 = vrot.slane %v1623, 7
  %v1627 = vsel %vm43, %v1625, %v1626
  %v1628 = vsel %vm43, %v1624, %v1625
  %v1629 = vsel %vm43, %v1626, %v1624
  %v1630 = vmul.f32 %v1629, %v50
  %v1631 = vmul.f32 %v1628, %v55
  %v1632 = vmul.f32 %v1627, %v60
  %1636 = vrot.lane.b32.xlu0 %v1621, 40
  %v1637 = vpop.permute.xlu0 %1636
  %1638 = vrot.lane.b32.xlu0 %v1622, 40
  %v1639 = vpop.permute.xlu0 %1638
  %1640 = vrot.lane.b32.xlu0 %v1623, 40
  %v1641 = vpop.permute.xlu0 %1640
  %v1645 = vsel %vm77, %v1630, %v1637
  %v1646 = vsel %vm77, %v1631, %v1639
  %v1647 = vsel %vm77, %v1632, %v1641
  %v1649 = vsel %vm93, %v1645, 0
  %v1652 = vsel %vm93, %v1646, 0
  %v1655 = vsel %vm93, %v1647, 0
  %1657 = vmatpush.msra.mxu0 0.0
  %1658 = vmatpush.msra.mxu0 0.0
  %1659 = vmatpush.msra.mxu0 0.0
  %1660 = vmatpush.msra.mxu0 0.0
  %1661 = vmatpush.msra.mxu0 0.0
  %1662 = vmatpush.msra.mxu0 0.0
  %1663 = vmatpush.msra.mxu0 %v90
  %1664 = vmatpush.msra.mxu0 %v89
  %1665 = vmatpush.msra.mxu0 %v88
  %1666 = vmatpush.msra.mxu0 %v87
  %1667 = vmatpush.msra.mxu0 %v86
  %1668 = vmatpush.msra.mxu0 %v85
  %1669 = vmatpush.msra.mxu0 %v84
  %1670 = vmatpush.msra.mxu0 %v83
  %1671 = vmatpush.msra.mxu0 %v82
  %1672 = vmatpush.msra.mxu0 %v81
  %1673 = vmatmul.f32.gmra.mxu0 %v1649
  %v1674 = vpop.f32.mrf.mxu0
  %v1675 = vadd.f32 %v92, %v1674
  %1676 = vmatmul.f32.gmra.mxu0 %v1652
  %v1677 = vpop.f32.mrf.mxu0
  %v1678 = vadd.f32 %v92, %v1677
  %1679 = vmatmul.f32.gmra.mxu0 %v1655
  %v1680 = vpop.f32.mrf.mxu0
  %v1681 = vadd.f32 %v92, %v1680
  %1682 = vdwg.mxu0
  %v1683 = vmax.f32 %v1675, 0.0
  %v1684 = vmax.f32 %v1678, 0.0
  %v1685 = vmax.f32 %v1681, 0.0
  %v1686 = vrot.slane %v1683, 7
  %v1687 = vrot.slane %v1684, 7
  %v1688 = vrot.slane %v1685, 7
  %v1689 = vsel %vm43, %v1687, %v1688
  %v1690 = vsel %vm43, %v1686, %v1687
  %v1691 = vsel %vm43, %v1688, %v1686
  %v1692 = vmul.f32 %v1691, %v50
  %v1693 = vmul.f32 %v1690, %v55
  %v1694 = vmul.f32 %v1689, %v60
  %1698 = vrot.lane.b32.xlu0 %v1683, 48
  %v1699 = vpop.permute.xlu0 %1698
  %1700 = vrot.lane.b32.xlu0 %v1684, 48
  %v1701 = vpop.permute.xlu0 %1700
  %1702 = vrot.lane.b32.xlu0 %v1685, 48
  %v1703 = vpop.permute.xlu0 %1702
  %v1707 = vsel %vm153, %v1692, %v1699
  %v1708 = vsel %vm153, %v1693, %v1701
  %v1709 = vsel %vm153, %v1694, %v1703
  %v1711 = vsel %vm171, %v1707, 0
  %v1714 = vsel %vm171, %v1708, 0
  %v1717 = vsel %vm171, %v1709, 0
  %1719 = vmatpush.msra.mxu0 0.0
  %1720 = vmatpush.msra.mxu0 0.0
  %1721 = vmatpush.msra.mxu0 0.0
  %1722 = vmatpush.msra.mxu0 0.0
  %1723 = vmatpush.msra.mxu0 %v168
  %1724 = vmatpush.msra.mxu0 %v167
  %1725 = vmatpush.msra.mxu0 %v166
  %1726 = vmatpush.msra.mxu0 %v165
  %1727 = vmatpush.msra.mxu0 %v164
  %1728 = vmatpush.msra.mxu0 %v163
  %1729 = vmatpush.msra.mxu0 %v162
  %1730 = vmatpush.msra.mxu0 %v161
  %1731 = vmatpush.msra.mxu0 %v160
  %1732 = vmatpush.msra.mxu0 %v159
  %1733 = vmatpush.msra.mxu0 %v158
  %1734 = vmatpush.msra.mxu0 %v157
  %1735 = vmatmul.f32.gmra.mxu0 %v1711
  %v1736 = vpop.f32.mrf.mxu0
  %v1737 = vadd.f32 %v170, %v1736
  %1738 = vmatmul.f32.gmra.mxu0 %v1714
  %v1739 = vpop.f32.mrf.mxu0
  %v1740 = vadd.f32 %v170, %v1739
  %1741 = vmatmul.f32.gmra.mxu0 %v1717
  %v1742 = vpop.f32.mrf.mxu0
  %v1743 = vadd.f32 %v170, %v1742
  %1744 = vdwg.mxu0
  %v1745 = vmax.f32 %v1737, 0.0
  %v1746 = vmax.f32 %v1740, 0.0
  %v1747 = vmax.f32 %v1743, 0.0
  %1751 = vrot.lane.b32.xlu0 %v1675, 80
  %v1752 = vpop.permute.xlu0 %1751
  %1753 = vrot.lane.b32.xlu0 %v1678, 80
  %v1754 = vpop.permute.xlu0 %1753
  %1755 = vrot.lane.b32.xlu0 %v1681, 80
  %v1756 = vpop.permute.xlu0 %1755
  %v1760 = vadd.f32 %v1745, %v1752
  %v1761 = vadd.f32 %v1746, %v1754
  %v1762 = vadd.f32 %v1747, %v1756
  %v1763 = vmax.f32 %v1760, 0.0
  %v1764 = vmax.f32 %v1761, 0.0
  %v1765 = vmax.f32 %v1762, 0.0
  %v1766 = vrot.slane %v1763, 6
  %v1767 = vrot.slane %v1764, 6
  %v1768 = vrot.slane %v1765, 6
  %v1769 = vsel %vm231, %v1767, %v1768
  %v1770 = vsel %vm231, %v1766, %v1767
  %v1771 = vsel %vm231, %v1768, %v1766
  %v1772 = vmul.f32 %v1771, %v237
  %v1773 = vmul.f32 %v1770, %v241
  %v1774 = vmul.f32 %v1769, %v245
  %1778 = vrot.lane.b32.xlu0 %v1763, 48
  %v1779 = vpop.permute.xlu0 %1778
  %1780 = vrot.lane.b32.xlu0 %v1764, 48
  %v1781 = vpop.permute.xlu0 %1780
  %1782 = vrot.lane.b32.xlu0 %v1765, 48
  %v1783 = vpop.permute.xlu0 %1782
  %v1787 = vsel %vm153, %v1772, %v1779
  %v1788 = vsel %vm153, %v1773, %v1781
  %v1789 = vsel %vm153, %v1774, %v1783
  %v1791 = vsel %vm171, %v1787, 0
  %v1794 = vsel %vm171, %v1788, 0
  %v1797 = vsel %vm171, %v1789, 0
  %1799 = vmatpush.msra.mxu0 0.0
  %1800 = vmatpush.msra.mxu0 0.0
  %1801 = vmatpush.msra.mxu0 0.0
  %1802 = vmatpush.msra.mxu0 0.0
  %1803 = vmatpush.msra.mxu0 %v276
  %1804 = vmatpush.msra.mxu0 %v275
  %1805 = vmatpush.msra.mxu0 %v274
  %1806 = vmatpush.msra.mxu0 %v273
  %1807 = vmatpush.msra.mxu0 %v272
  %1808 = vmatpush.msra.mxu0 %v271
  %1809 = vmatpush.msra.mxu0 %v270
  %1810 = vmatpush.msra.mxu0 %v269
  %1811 = vmatpush.msra.mxu0 %v268
  %1812 = vmatpush.msra.mxu0 %v267
  %1813 = vmatpush.msra.mxu0 %v266
  %1814 = vmatpush.msra.mxu0 %v265
  %1815 = vmatmul.f32.gmra.mxu0 %v1791
  %v1816 = vpop.f32.mrf.mxu0
  %v1817 = vadd.f32 %v278, %v1816
  %1818 = vmatmul.f32.gmra.mxu0 %v1794
  %v1819 = vpop.f32.mrf.mxu0
  %v1820 = vadd.f32 %v278, %v1819
  %1821 = vmatmul.f32.gmra.mxu0 %v1797
  %v1822 = vpop.f32.mrf.mxu0
  %v1823 = vadd.f32 %v278, %v1822
  %1824 = vdwg.mxu0
  %v1825 = vmax.f32 %v1817, 0.0
  %v1826 = vmax.f32 %v1820, 0.0
  %v1827 = vmax.f32 %v1823, 0.0
  %v1828 = vrot.slane %v1825, 6
  %v1829 = vrot.slane %v1826, 6
  %v1830 = vrot.slane %v1827, 6
  %v1831 = vsel %vm231, %v1829, %v1830
  %v1832 = vsel %vm231, %v1828, %v1829
  %v1833 = vsel %vm231, %v1830, %v1828
  %v1834 = vmul.f32 %v1833, %v237
  %v1835 = vmul.f32 %v1832, %v241
  %v1836 = vmul.f32 %v1831, %v245
  %1840 = vrot.lane.b32.xlu0 %v1825, 40
  %v1841 = vpop.permute.xlu0 %1840
  %1842 = vrot.lane.b32.xlu0 %v1826, 40
  %v1843 = vpop.permute.xlu0 %1842
  %1844 = vrot.lane.b32.xlu0 %v1827, 40
  %v1845 = vpop.permute.xlu0 %1844
  %v1849 = vsel %vm77, %v1834, %v1841
  %v1850 = vsel %vm77, %v1835, %v1843
  %v1851 = vsel %vm77, %v1836, %v1845
  %v1853 = vsel %vm93, %v1849, 0
  %v1856 = vsel %vm93, %v1850, 0
  %v1859 = vsel %vm93, %v1851, 0
  %1861 = vmatpush.msra.mxu0 0.0
  %1862 = vmatpush.msra.mxu0 0.0
  %1863 = vmatpush.msra.mxu0 0.0
  %1864 = vmatpush.msra.mxu0 0.0
  %1865 = vmatpush.msra.mxu0 0.0
  %1866 = vmatpush.msra.mxu0 0.0
  %1867 = vmatpush.msra.mxu0 %v350
  %1868 = vmatpush.msra.mxu0 %v349
  %1869 = vmatpush.msra.mxu0 %v348
  %1870 = vmatpush.msra.mxu0 %v347
  %1871 = vmatpush.msra.mxu0 %v346
  %1872 = vmatpush.msra.mxu0 %v345
  %1873 = vmatpush.msra.mxu0 %v344
  %1874 = vmatpush.msra.mxu0 %v343
  %1875 = vmatpush.msra.mxu0 %v342
  %1876 = vmatpush.msra.mxu0 %v341
  %1877 = vmatmul.f32.gmra.mxu0 %v1853
  %v1878 = vpop.f32.mrf.mxu0
  %v1879 = vadd.f32 %v352, %v1878
  %1880 = vmatmul.f32.gmra.mxu0 %v1856
  %v1881 = vpop.f32.mrf.mxu0
  %v1882 = vadd.f32 %v352, %v1881
  %1883 = vmatmul.f32.gmra.mxu0 %v1859
  %v1884 = vpop.f32.mrf.mxu0
  %v1885 = vadd.f32 %v352, %v1884
  %1886 = vdwg.mxu0
  %v1887 = vmax.f32 %v1879, 0.0
  %v1888 = vmax.f32 %v1882, 0.0
  %v1889 = vmax.f32 %v1885, 0.0
  %1893 = vrot.lane.b32.xlu0 %v1817, 88
  %v1894 = vpop.permute.xlu0 %1893
  %1895 = vrot.lane.b32.xlu0 %v1820, 88
  %v1896 = vpop.permute.xlu0 %1895
  %1897 = vrot.lane.b32.xlu0 %v1823, 88
  %v1898 = vpop.permute.xlu0 %1897
  %v1902 = vadd.f32 %v1887, %v1894
  %v1903 = vadd.f32 %v1888, %v1896
  %v1904 = vadd.f32 %v1889, %v1898
  %v1905 = vmax.f32 %v1902, 0.0
  %v1906 = vmax.f32 %v1903, 0.0
  %v1907 = vmax.f32 %v1904, 0.0
  %v1908 = vmul.f32 %v1905, %v32
  %v1909 = vmul.f32 %v1906, %v33
  %v1910 = vmul.f32 %v1907, %v34
  %v1911 = vadd.f32 %v29, %v1908
  %v1912 = vadd.f32 %v30, %v1909
  %v1913 = vadd.f32 %v31, %v1910
  %s1914 = scalar_lea.vmem %s5, 120
  %v1915 = vld [vmem:[%s1914] sm:$0xff]
  %v1916 = vld [vmem:[%s1914 + $0x8] sm:$0xff]
  %v1917 = vld [vmem:[%s1914 + $0x10] sm:$0xff]
  %vm1918 = vcmp.gt.f32.partialorder %v1915, 0.5
  %vm1919 = vcmp.gt.f32.partialorder %v1916, 0.5
  %vm1920 = vcmp.gt.f32.partialorder %v1917, 0.5
  %v1921 = vsel %vm1918, %v1911, %v1621
  %v1922 = vsel %vm1919, %v1912, %v1622
  %v1923 = vsel %vm1920, %v1913, %v1623
  %v1924 = vrot.slane %v1921, 7
  %v1925 = vrot.slane %v1922, 7
  %v1926 = vrot.slane %v1923, 7
  %v1927 = vsel %vm43, %v1925, %v1926
  %v1928 = vsel %vm43, %v1924, %v1925
  %v1929 = vsel %vm43, %v1926, %v1924
  %v1930 = vmul.f32 %v1929, %v50
  %v1931 = vmul.f32 %v1928, %v55
  %v1932 = vmul.f32 %v1927, %v60
  %1936 = vrot.lane.b32.xlu0 %v1921, 40
  %v1937 = vpop.permute.xlu0 %1936
  %1938 = vrot.lane.b32.xlu0 %v1922, 40
  %v1939 = vpop.permute.xlu0 %1938
  %1940 = vrot.lane.b32.xlu0 %v1923, 40
  %v1941 = vpop.permute.xlu0 %1940
  %v1945 = vsel %vm77, %v1930, %v1937
  %v1946 = vsel %vm77, %v1931, %v1939
  %v1947 = vsel %vm77, %v1932, %v1941
  %v1949 = vsel %vm93, %v1945, 0
  %v1952 = vsel %vm93, %v1946, 0
  %v1955 = vsel %vm93, %v1947, 0
  %1957 = vmatpush.msra.mxu0 0.0
  %1958 = vmatpush.msra.mxu0 0.0
  %1959 = vmatpush.msra.mxu0 0.0
  %1960 = vmatpush.msra.mxu0 0.0
  %1961 = vmatpush.msra.mxu0 0.0
  %1962 = vmatpush.msra.mxu0 0.0
  %1963 = vmatpush.msra.mxu0 %v90
  %1964 = vmatpush.msra.mxu0 %v89
  %1965 = vmatpush.msra.mxu0 %v88
  %1966 = vmatpush.msra.mxu0 %v87
  %1967 = vmatpush.msra.mxu0 %v86
  %1968 = vmatpush.msra.mxu0 %v85
  %1969 = vmatpush.msra.mxu0 %v84
  %1970 = vmatpush.msra.mxu0 %v83
  %1971 = vmatpush.msra.mxu0 %v82
  %1972 = vmatpush.msra.mxu0 %v81
  %1973 = vmatmul.f32.gmra.mxu0 %v1949
  %v1974 = vpop.f32.mrf.mxu0
  %v1975 = vadd.f32 %v92, %v1974
  %1976 = vmatmul.f32.gmra.mxu0 %v1952
  %v1977 = vpop.f32.mrf.mxu0
  %v1978 = vadd.f32 %v92, %v1977
  %1979 = vmatmul.f32.gmra.mxu0 %v1955
  %v1980 = vpop.f32.mrf.mxu0
  %v1981 = vadd.f32 %v92, %v1980
  %1982 = vdwg.mxu0
  %v1983 = vmax.f32 %v1975, 0.0
  %v1984 = vmax.f32 %v1978, 0.0
  %v1985 = vmax.f32 %v1981, 0.0
  %v1986 = vrot.slane %v1983, 7
  %v1987 = vrot.slane %v1984, 7
  %v1988 = vrot.slane %v1985, 7
  %v1989 = vsel %vm43, %v1987, %v1988
  %v1990 = vsel %vm43, %v1986, %v1987
  %v1991 = vsel %vm43, %v1988, %v1986
  %v1992 = vmul.f32 %v1991, %v50
  %v1993 = vmul.f32 %v1990, %v55
  %v1994 = vmul.f32 %v1989, %v60
  %1998 = vrot.lane.b32.xlu0 %v1983, 48
  %v1999 = vpop.permute.xlu0 %1998
  %2000 = vrot.lane.b32.xlu0 %v1984, 48
  %v2001 = vpop.permute.xlu0 %2000
  %2002 = vrot.lane.b32.xlu0 %v1985, 48
  %v2003 = vpop.permute.xlu0 %2002
  %v2007 = vsel %vm153, %v1992, %v1999
  %v2008 = vsel %vm153, %v1993, %v2001
  %v2009 = vsel %vm153, %v1994, %v2003
  %v2011 = vsel %vm171, %v2007, 0
  %v2014 = vsel %vm171, %v2008, 0
  %v2017 = vsel %vm171, %v2009, 0
  %2019 = vmatpush.msra.mxu0 0.0
  %2020 = vmatpush.msra.mxu0 0.0
  %2021 = vmatpush.msra.mxu0 0.0
  %2022 = vmatpush.msra.mxu0 0.0
  %2023 = vmatpush.msra.mxu0 %v168
  %2024 = vmatpush.msra.mxu0 %v167
  %2025 = vmatpush.msra.mxu0 %v166
  %2026 = vmatpush.msra.mxu0 %v165
  %2027 = vmatpush.msra.mxu0 %v164
  %2028 = vmatpush.msra.mxu0 %v163
  %2029 = vmatpush.msra.mxu0 %v162
  %2030 = vmatpush.msra.mxu0 %v161
  %2031 = vmatpush.msra.mxu0 %v160
  %2032 = vmatpush.msra.mxu0 %v159
  %2033 = vmatpush.msra.mxu0 %v158
  %2034 = vmatpush.msra.mxu0 %v157
  %2035 = vmatmul.f32.gmra.mxu0 %v2011
  %v2036 = vpop.f32.mrf.mxu0
  %v2037 = vadd.f32 %v170, %v2036
  %2038 = vmatmul.f32.gmra.mxu0 %v2014
  %v2039 = vpop.f32.mrf.mxu0
  %v2040 = vadd.f32 %v170, %v2039
  %2041 = vmatmul.f32.gmra.mxu0 %v2017
  %v2042 = vpop.f32.mrf.mxu0
  %v2043 = vadd.f32 %v170, %v2042
  %2044 = vdwg.mxu0
  %v2045 = vmax.f32 %v2037, 0.0
  %v2046 = vmax.f32 %v2040, 0.0
  %v2047 = vmax.f32 %v2043, 0.0
  %2051 = vrot.lane.b32.xlu0 %v1975, 80
  %v2052 = vpop.permute.xlu0 %2051
  %2053 = vrot.lane.b32.xlu0 %v1978, 80
  %v2054 = vpop.permute.xlu0 %2053
  %2055 = vrot.lane.b32.xlu0 %v1981, 80
  %v2056 = vpop.permute.xlu0 %2055
  %v2060 = vadd.f32 %v2045, %v2052
  %v2061 = vadd.f32 %v2046, %v2054
  %v2062 = vadd.f32 %v2047, %v2056
  %v2063 = vmax.f32 %v2060, 0.0
  %v2064 = vmax.f32 %v2061, 0.0
  %v2065 = vmax.f32 %v2062, 0.0
  %v2066 = vrot.slane %v2063, 6
  %v2067 = vrot.slane %v2064, 6
  %v2068 = vrot.slane %v2065, 6
  %v2069 = vsel %vm231, %v2067, %v2068
  %v2070 = vsel %vm231, %v2066, %v2067
  %v2071 = vsel %vm231, %v2068, %v2066
  %v2072 = vmul.f32 %v2071, %v237
  %v2073 = vmul.f32 %v2070, %v241
  %v2074 = vmul.f32 %v2069, %v245
  %2078 = vrot.lane.b32.xlu0 %v2063, 48
  %v2079 = vpop.permute.xlu0 %2078
  %2080 = vrot.lane.b32.xlu0 %v2064, 48
  %v2081 = vpop.permute.xlu0 %2080
  %2082 = vrot.lane.b32.xlu0 %v2065, 48
  %v2083 = vpop.permute.xlu0 %2082
  %v2087 = vsel %vm153, %v2072, %v2079
  %v2088 = vsel %vm153, %v2073, %v2081
  %v2089 = vsel %vm153, %v2074, %v2083
  %v2091 = vsel %vm171, %v2087, 0
  %v2094 = vsel %vm171, %v2088, 0
  %v2097 = vsel %vm171, %v2089, 0
  %2099 = vmatpush.msra.mxu0 0.0
  %2100 = vmatpush.msra.mxu0 0.0
  %2101 = vmatpush.msra.mxu0 0.0
  %2102 = vmatpush.msra.mxu0 0.0
  %2103 = vmatpush.msra.mxu0 %v276
  %2104 = vmatpush.msra.mxu0 %v275
  %2105 = vmatpush.msra.mxu0 %v274
  %2106 = vmatpush.msra.mxu0 %v273
  %2107 = vmatpush.msra.mxu0 %v272
  %2108 = vmatpush.msra.mxu0 %v271
  %2109 = vmatpush.msra.mxu0 %v270
  %2110 = vmatpush.msra.mxu0 %v269
  %2111 = vmatpush.msra.mxu0 %v268
  %2112 = vmatpush.msra.mxu0 %v267
  %2113 = vmatpush.msra.mxu0 %v266
  %2114 = vmatpush.msra.mxu0 %v265
  %2115 = vmatmul.f32.gmra.mxu0 %v2091
  %v2116 = vpop.f32.mrf.mxu0
  %v2117 = vadd.f32 %v278, %v2116
  %2118 = vmatmul.f32.gmra.mxu0 %v2094
  %v2119 = vpop.f32.mrf.mxu0
  %v2120 = vadd.f32 %v278, %v2119
  %2121 = vmatmul.f32.gmra.mxu0 %v2097
  %v2122 = vpop.f32.mrf.mxu0
  %v2123 = vadd.f32 %v278, %v2122
  %2124 = vdwg.mxu0
  %v2125 = vmax.f32 %v2117, 0.0
  %v2126 = vmax.f32 %v2120, 0.0
  %v2127 = vmax.f32 %v2123, 0.0
  %v2128 = vrot.slane %v2125, 6
  %v2129 = vrot.slane %v2126, 6
  %v2130 = vrot.slane %v2127, 6
  %v2131 = vsel %vm231, %v2129, %v2130
  %v2132 = vsel %vm231, %v2128, %v2129
  %v2133 = vsel %vm231, %v2130, %v2128
  %v2134 = vmul.f32 %v2133, %v237
  %v2135 = vmul.f32 %v2132, %v241
  %v2136 = vmul.f32 %v2131, %v245
  %2140 = vrot.lane.b32.xlu0 %v2125, 40
  %v2141 = vpop.permute.xlu0 %2140
  %2142 = vrot.lane.b32.xlu0 %v2126, 40
  %v2143 = vpop.permute.xlu0 %2142
  %2144 = vrot.lane.b32.xlu0 %v2127, 40
  %v2145 = vpop.permute.xlu0 %2144
  %v2149 = vsel %vm77, %v2134, %v2141
  %v2150 = vsel %vm77, %v2135, %v2143
  %v2151 = vsel %vm77, %v2136, %v2145
  %v2153 = vsel %vm93, %v2149, 0
  %v2156 = vsel %vm93, %v2150, 0
  %v2159 = vsel %vm93, %v2151, 0
  %2161 = vmatpush.msra.mxu0 0.0
  %2162 = vmatpush.msra.mxu0 0.0
  %2163 = vmatpush.msra.mxu0 0.0
  %2164 = vmatpush.msra.mxu0 0.0
  %2165 = vmatpush.msra.mxu0 0.0
  %2166 = vmatpush.msra.mxu0 0.0
  %2167 = vmatpush.msra.mxu0 %v350
  %2168 = vmatpush.msra.mxu0 %v349
  %2169 = vmatpush.msra.mxu0 %v348
  %2170 = vmatpush.msra.mxu0 %v347
  %2171 = vmatpush.msra.mxu0 %v346
  %2172 = vmatpush.msra.mxu0 %v345
  %2173 = vmatpush.msra.mxu0 %v344
  %2174 = vmatpush.msra.mxu0 %v343
  %2175 = vmatpush.msra.mxu0 %v342
  %2176 = vmatpush.msra.mxu0 %v341
  %2177 = vmatmul.f32.gmra.mxu0 %v2153
  %v2178 = vpop.f32.mrf.mxu0
  %v2179 = vadd.f32 %v352, %v2178
  %2180 = vmatmul.f32.gmra.mxu0 %v2156
  %v2181 = vpop.f32.mrf.mxu0
  %v2182 = vadd.f32 %v352, %v2181
  %2183 = vmatmul.f32.gmra.mxu0 %v2159
  %v2184 = vpop.f32.mrf.mxu0
  %v2185 = vadd.f32 %v352, %v2184
  %2186 = vdwg.mxu0
  %v2187 = vmax.f32 %v2179, 0.0
  %v2188 = vmax.f32 %v2182, 0.0
  %v2189 = vmax.f32 %v2185, 0.0
  %2193 = vrot.lane.b32.xlu0 %v2117, 88
  %v2194 = vpop.permute.xlu0 %2193
  %2195 = vrot.lane.b32.xlu0 %v2120, 88
  %v2196 = vpop.permute.xlu0 %2195
  %2197 = vrot.lane.b32.xlu0 %v2123, 88
  %v2198 = vpop.permute.xlu0 %2197
  %v2202 = vadd.f32 %v2187, %v2194
  %v2203 = vadd.f32 %v2188, %v2196
  %v2204 = vadd.f32 %v2189, %v2198
  %v2205 = vmax.f32 %v2202, 0.0
  %v2206 = vmax.f32 %v2203, 0.0
  %v2207 = vmax.f32 %v2204, 0.0
  %v2208 = vmul.f32 %v2205, %v32
  %v2209 = vmul.f32 %v2206, %v33
  %v2210 = vmul.f32 %v2207, %v34
  %v2211 = vadd.f32 %v29, %v2208
  %v2212 = vadd.f32 %v30, %v2209
  %v2213 = vadd.f32 %v31, %v2210
  %s2214 = scalar_lea.vmem %s5, 144
  %v2215 = vld [vmem:[%s2214] sm:$0xff]
  %v2216 = vld [vmem:[%s2214 + $0x8] sm:$0xff]
  %v2217 = vld [vmem:[%s2214 + $0x10] sm:$0xff]
  %vm2218 = vcmp.gt.f32.partialorder %v2215, 0.5
  %vm2219 = vcmp.gt.f32.partialorder %v2216, 0.5
  %vm2220 = vcmp.gt.f32.partialorder %v2217, 0.5
  %v2221 = vsel %vm2218, %v2211, %v1921
  %v2222 = vsel %vm2219, %v2212, %v1922
  %v2223 = vsel %vm2220, %v2213, %v1923
  %v2224 = vrot.slane %v2221, 7
  %v2225 = vrot.slane %v2222, 7
  %v2226 = vrot.slane %v2223, 7
  %v2227 = vsel %vm43, %v2225, %v2226
  %v2228 = vsel %vm43, %v2224, %v2225
  %v2229 = vsel %vm43, %v2226, %v2224
  %v2230 = vmul.f32 %v2229, %v50
  %v2231 = vmul.f32 %v2228, %v55
  %v2232 = vmul.f32 %v2227, %v60
  %2236 = vrot.lane.b32.xlu0 %v2221, 40
  %v2237 = vpop.permute.xlu0 %2236
  %2238 = vrot.lane.b32.xlu0 %v2222, 40
  %v2239 = vpop.permute.xlu0 %2238
  %2240 = vrot.lane.b32.xlu0 %v2223, 40
  %v2241 = vpop.permute.xlu0 %2240
  %v2245 = vsel %vm77, %v2230, %v2237
  %v2246 = vsel %vm77, %v2231, %v2239
  %v2247 = vsel %vm77, %v2232, %v2241
  %v2249 = vsel %vm93, %v2245, 0
  %v2252 = vsel %vm93, %v2246, 0
  %v2255 = vsel %vm93, %v2247, 0
  %2257 = vmatpush.msra.mxu0 0.0
  %2258 = vmatpush.msra.mxu0 0.0
  %2259 = vmatpush.msra.mxu0 0.0
  %2260 = vmatpush.msra.mxu0 0.0
  %2261 = vmatpush.msra.mxu0 0.0
  %2262 = vmatpush.msra.mxu0 0.0
  %2263 = vmatpush.msra.mxu0 %v90
  %2264 = vmatpush.msra.mxu0 %v89
  %2265 = vmatpush.msra.mxu0 %v88
  %2266 = vmatpush.msra.mxu0 %v87
  %2267 = vmatpush.msra.mxu0 %v86
  %2268 = vmatpush.msra.mxu0 %v85
  %2269 = vmatpush.msra.mxu0 %v84
  %2270 = vmatpush.msra.mxu0 %v83
  %2271 = vmatpush.msra.mxu0 %v82
  %2272 = vmatpush.msra.mxu0 %v81
  %2273 = vmatmul.f32.gmra.mxu0 %v2249
  %v2274 = vpop.f32.mrf.mxu0
  %v2275 = vadd.f32 %v92, %v2274
  %2276 = vmatmul.f32.gmra.mxu0 %v2252
  %v2277 = vpop.f32.mrf.mxu0
  %v2278 = vadd.f32 %v92, %v2277
  %2279 = vmatmul.f32.gmra.mxu0 %v2255
  %v2280 = vpop.f32.mrf.mxu0
  %v2281 = vadd.f32 %v92, %v2280
  %2282 = vdwg.mxu0
  %v2283 = vmax.f32 %v2275, 0.0
  %v2284 = vmax.f32 %v2278, 0.0
  %v2285 = vmax.f32 %v2281, 0.0
  %v2286 = vrot.slane %v2283, 7
  %v2287 = vrot.slane %v2284, 7
  %v2288 = vrot.slane %v2285, 7
  %v2289 = vsel %vm43, %v2287, %v2288
  %v2290 = vsel %vm43, %v2286, %v2287
  %v2291 = vsel %vm43, %v2288, %v2286
  %v2292 = vmul.f32 %v2291, %v50
  %v2293 = vmul.f32 %v2290, %v55
  %v2294 = vmul.f32 %v2289, %v60
  %2298 = vrot.lane.b32.xlu0 %v2283, 48
  %v2299 = vpop.permute.xlu0 %2298
  %2300 = vrot.lane.b32.xlu0 %v2284, 48
  %v2301 = vpop.permute.xlu0 %2300
  %2302 = vrot.lane.b32.xlu0 %v2285, 48
  %v2303 = vpop.permute.xlu0 %2302
  %v2307 = vsel %vm153, %v2292, %v2299
  %v2308 = vsel %vm153, %v2293, %v2301
  %v2309 = vsel %vm153, %v2294, %v2303
  %v2311 = vsel %vm171, %v2307, 0
  %v2314 = vsel %vm171, %v2308, 0
  %v2317 = vsel %vm171, %v2309, 0
  %2319 = vmatpush.msra.mxu0 0.0
  %2320 = vmatpush.msra.mxu0 0.0
  %2321 = vmatpush.msra.mxu0 0.0
  %2322 = vmatpush.msra.mxu0 0.0
  %2323 = vmatpush.msra.mxu0 %v168
  %2324 = vmatpush.msra.mxu0 %v167
  %2325 = vmatpush.msra.mxu0 %v166
  %2326 = vmatpush.msra.mxu0 %v165
  %2327 = vmatpush.msra.mxu0 %v164
  %2328 = vmatpush.msra.mxu0 %v163
  %2329 = vmatpush.msra.mxu0 %v162
  %2330 = vmatpush.msra.mxu0 %v161
  %2331 = vmatpush.msra.mxu0 %v160
  %2332 = vmatpush.msra.mxu0 %v159
  %2333 = vmatpush.msra.mxu0 %v158
  %2334 = vmatpush.msra.mxu0 %v157
  %2335 = vmatmul.f32.gmra.mxu0 %v2311
  %v2336 = vpop.f32.mrf.mxu0
  %v2337 = vadd.f32 %v170, %v2336
  %2338 = vmatmul.f32.gmra.mxu0 %v2314
  %v2339 = vpop.f32.mrf.mxu0
  %v2340 = vadd.f32 %v170, %v2339
  %2341 = vmatmul.f32.gmra.mxu0 %v2317
  %v2342 = vpop.f32.mrf.mxu0
  %v2343 = vadd.f32 %v170, %v2342
  %2344 = vdwg.mxu0
  %v2345 = vmax.f32 %v2337, 0.0
  %v2346 = vmax.f32 %v2340, 0.0
  %v2347 = vmax.f32 %v2343, 0.0
  %2351 = vrot.lane.b32.xlu0 %v2275, 80
  %v2352 = vpop.permute.xlu0 %2351
  %2353 = vrot.lane.b32.xlu0 %v2278, 80
  %v2354 = vpop.permute.xlu0 %2353
  %2355 = vrot.lane.b32.xlu0 %v2281, 80
  %v2356 = vpop.permute.xlu0 %2355
  %v2360 = vadd.f32 %v2345, %v2352
  %v2361 = vadd.f32 %v2346, %v2354
  %v2362 = vadd.f32 %v2347, %v2356
  %v2363 = vmax.f32 %v2360, 0.0
  %v2364 = vmax.f32 %v2361, 0.0
  %v2365 = vmax.f32 %v2362, 0.0
  %v2366 = vrot.slane %v2363, 6
  %v2367 = vrot.slane %v2364, 6
  %v2368 = vrot.slane %v2365, 6
  %v2369 = vsel %vm231, %v2367, %v2368
  %v2370 = vsel %vm231, %v2366, %v2367
  %v2371 = vsel %vm231, %v2368, %v2366
  %v2372 = vmul.f32 %v2371, %v237
  %v2373 = vmul.f32 %v2370, %v241
  %v2374 = vmul.f32 %v2369, %v245
  %2378 = vrot.lane.b32.xlu0 %v2363, 48
  %v2379 = vpop.permute.xlu0 %2378
  %2380 = vrot.lane.b32.xlu0 %v2364, 48
  %v2381 = vpop.permute.xlu0 %2380
  %2382 = vrot.lane.b32.xlu0 %v2365, 48
  %v2383 = vpop.permute.xlu0 %2382
  %v2387 = vsel %vm153, %v2372, %v2379
  %v2388 = vsel %vm153, %v2373, %v2381
  %v2389 = vsel %vm153, %v2374, %v2383
  %v2391 = vsel %vm171, %v2387, 0
  %v2394 = vsel %vm171, %v2388, 0
  %v2397 = vsel %vm171, %v2389, 0
  %2399 = vmatpush.msra.mxu0 0.0
  %2400 = vmatpush.msra.mxu0 0.0
  %2401 = vmatpush.msra.mxu0 0.0
  %2402 = vmatpush.msra.mxu0 0.0
  %2403 = vmatpush.msra.mxu0 %v276
  %2404 = vmatpush.msra.mxu0 %v275
  %2405 = vmatpush.msra.mxu0 %v274
  %2406 = vmatpush.msra.mxu0 %v273
  %2407 = vmatpush.msra.mxu0 %v272
  %2408 = vmatpush.msra.mxu0 %v271
  %2409 = vmatpush.msra.mxu0 %v270
  %2410 = vmatpush.msra.mxu0 %v269
  %2411 = vmatpush.msra.mxu0 %v268
  %2412 = vmatpush.msra.mxu0 %v267
  %2413 = vmatpush.msra.mxu0 %v266
  %2414 = vmatpush.msra.mxu0 %v265
  %2415 = vmatmul.f32.gmra.mxu0 %v2391
  %v2416 = vpop.f32.mrf.mxu0
  %v2417 = vadd.f32 %v278, %v2416
  %2418 = vmatmul.f32.gmra.mxu0 %v2394
  %v2419 = vpop.f32.mrf.mxu0
  %v2420 = vadd.f32 %v278, %v2419
  %2421 = vmatmul.f32.gmra.mxu0 %v2397
  %v2422 = vpop.f32.mrf.mxu0
  %v2423 = vadd.f32 %v278, %v2422
  %2424 = vdwg.mxu0
  %v2425 = vmax.f32 %v2417, 0.0
  %v2426 = vmax.f32 %v2420, 0.0
  %v2427 = vmax.f32 %v2423, 0.0
  %v2428 = vrot.slane %v2425, 6
  %v2429 = vrot.slane %v2426, 6
  %v2430 = vrot.slane %v2427, 6
  %v2431 = vsel %vm231, %v2429, %v2430
  %v2432 = vsel %vm231, %v2428, %v2429
  %v2433 = vsel %vm231, %v2430, %v2428
  %v2434 = vmul.f32 %v2433, %v237
  %v2435 = vmul.f32 %v2432, %v241
  %v2436 = vmul.f32 %v2431, %v245
  %2440 = vrot.lane.b32.xlu0 %v2425, 40
  %v2441 = vpop.permute.xlu0 %2440
  %2442 = vrot.lane.b32.xlu0 %v2426, 40
  %v2443 = vpop.permute.xlu0 %2442
  %2444 = vrot.lane.b32.xlu0 %v2427, 40
  %v2445 = vpop.permute.xlu0 %2444
  %v2449 = vsel %vm77, %v2434, %v2441
  %v2450 = vsel %vm77, %v2435, %v2443
  %v2451 = vsel %vm77, %v2436, %v2445
  %v2453 = vsel %vm93, %v2449, 0
  %v2456 = vsel %vm93, %v2450, 0
  %v2459 = vsel %vm93, %v2451, 0
  %2461 = vmatpush.msra.mxu0 0.0
  %2462 = vmatpush.msra.mxu0 0.0
  %2463 = vmatpush.msra.mxu0 0.0
  %2464 = vmatpush.msra.mxu0 0.0
  %2465 = vmatpush.msra.mxu0 0.0
  %2466 = vmatpush.msra.mxu0 0.0
  %2467 = vmatpush.msra.mxu0 %v350
  %2468 = vmatpush.msra.mxu0 %v349
  %2469 = vmatpush.msra.mxu0 %v348
  %2470 = vmatpush.msra.mxu0 %v347
  %2471 = vmatpush.msra.mxu0 %v346
  %2472 = vmatpush.msra.mxu0 %v345
  %2473 = vmatpush.msra.mxu0 %v344
  %2474 = vmatpush.msra.mxu0 %v343
  %2475 = vmatpush.msra.mxu0 %v342
  %2476 = vmatpush.msra.mxu0 %v341
  %2477 = vmatmul.f32.gmra.mxu0 %v2453
  %v2478 = vpop.f32.mrf.mxu0
  %v2479 = vadd.f32 %v352, %v2478
  %2480 = vmatmul.f32.gmra.mxu0 %v2456
  %v2481 = vpop.f32.mrf.mxu0
  %v2482 = vadd.f32 %v352, %v2481
  %2483 = vmatmul.f32.gmra.mxu0 %v2459
  %v2484 = vpop.f32.mrf.mxu0
  %v2485 = vadd.f32 %v352, %v2484
  %2486 = vdwg.mxu0
  %v2487 = vmax.f32 %v2479, 0.0
  %v2488 = vmax.f32 %v2482, 0.0
  %v2489 = vmax.f32 %v2485, 0.0
  %2493 = vrot.lane.b32.xlu0 %v2417, 88
  %v2494 = vpop.permute.xlu0 %2493
  %2495 = vrot.lane.b32.xlu0 %v2420, 88
  %v2496 = vpop.permute.xlu0 %2495
  %2497 = vrot.lane.b32.xlu0 %v2423, 88
  %v2498 = vpop.permute.xlu0 %2497
  %v2502 = vadd.f32 %v2487, %v2494
  %v2503 = vadd.f32 %v2488, %v2496
  %v2504 = vadd.f32 %v2489, %v2498
  %v2505 = vmax.f32 %v2502, 0.0
  %v2506 = vmax.f32 %v2503, 0.0
  %v2507 = vmax.f32 %v2504, 0.0
  %v2508 = vmul.f32 %v2505, %v32
  %v2509 = vmul.f32 %v2506, %v33
  %v2510 = vmul.f32 %v2507, %v34
  %v2511 = vadd.f32 %v29, %v2508
  %v2512 = vadd.f32 %v30, %v2509
  %v2513 = vadd.f32 %v31, %v2510
  %s2514 = scalar_lea.vmem %s5, 168
  %v2515 = vld [vmem:[%s2514] sm:$0xff]
  %v2516 = vld [vmem:[%s2514 + $0x8] sm:$0xff]
  %v2517 = vld [vmem:[%s2514 + $0x10] sm:$0xff]
  %vm2518 = vcmp.gt.f32.partialorder %v2515, 0.5
  %vm2519 = vcmp.gt.f32.partialorder %v2516, 0.5
  %vm2520 = vcmp.gt.f32.partialorder %v2517, 0.5
  %v2521 = vsel %vm2518, %v2511, %v2221
  %v2522 = vsel %vm2519, %v2512, %v2222
  %v2523 = vsel %vm2520, %v2513, %v2223
  %v2524 = vrot.slane %v2521, 7
  %v2525 = vrot.slane %v2522, 7
  %v2526 = vrot.slane %v2523, 7
  %v2527 = vsel %vm43, %v2525, %v2526
  %v2528 = vsel %vm43, %v2524, %v2525
  %v2529 = vsel %vm43, %v2526, %v2524
  %v2530 = vmul.f32 %v2529, %v50
  %v2531 = vmul.f32 %v2528, %v55
  %v2532 = vmul.f32 %v2527, %v60
  %2536 = vrot.lane.b32.xlu0 %v2521, 40
  %v2537 = vpop.permute.xlu0 %2536
  %2538 = vrot.lane.b32.xlu0 %v2522, 40
  %v2539 = vpop.permute.xlu0 %2538
  %2540 = vrot.lane.b32.xlu0 %v2523, 40
  %v2541 = vpop.permute.xlu0 %2540
  %v2545 = vsel %vm77, %v2530, %v2537
  %v2546 = vsel %vm77, %v2531, %v2539
  %v2547 = vsel %vm77, %v2532, %v2541
  %v2549 = vsel %vm93, %v2545, 0
  %v2552 = vsel %vm93, %v2546, 0
  %v2555 = vsel %vm93, %v2547, 0
  %2557 = vmatpush.msra.mxu0 0.0
  %2558 = vmatpush.msra.mxu0 0.0
  %2559 = vmatpush.msra.mxu0 0.0
  %2560 = vmatpush.msra.mxu0 0.0
  %2561 = vmatpush.msra.mxu0 0.0
  %2562 = vmatpush.msra.mxu0 0.0
  %2563 = vmatpush.msra.mxu0 %v90
  %2564 = vmatpush.msra.mxu0 %v89
  %2565 = vmatpush.msra.mxu0 %v88
  %2566 = vmatpush.msra.mxu0 %v87
  %2567 = vmatpush.msra.mxu0 %v86
  %2568 = vmatpush.msra.mxu0 %v85
  %2569 = vmatpush.msra.mxu0 %v84
  %2570 = vmatpush.msra.mxu0 %v83
  %2571 = vmatpush.msra.mxu0 %v82
  %2572 = vmatpush.msra.mxu0 %v81
  %2573 = vmatmul.f32.gmra.mxu0 %v2549
  %v2574 = vpop.f32.mrf.mxu0
  %v2575 = vadd.f32 %v92, %v2574
  %2576 = vmatmul.f32.gmra.mxu0 %v2552
  %v2577 = vpop.f32.mrf.mxu0
  %v2578 = vadd.f32 %v92, %v2577
  %2579 = vmatmul.f32.gmra.mxu0 %v2555
  %v2580 = vpop.f32.mrf.mxu0
  %v2581 = vadd.f32 %v92, %v2580
  %2582 = vdwg.mxu0
  %v2583 = vmax.f32 %v2575, 0.0
  %v2584 = vmax.f32 %v2578, 0.0
  %v2585 = vmax.f32 %v2581, 0.0
  %v2586 = vrot.slane %v2583, 7
  %v2587 = vrot.slane %v2584, 7
  %v2588 = vrot.slane %v2585, 7
  %v2589 = vsel %vm43, %v2587, %v2588
  %v2590 = vsel %vm43, %v2586, %v2587
  %v2591 = vsel %vm43, %v2588, %v2586
  %v2592 = vmul.f32 %v2591, %v50
  %v2593 = vmul.f32 %v2590, %v55
  %v2594 = vmul.f32 %v2589, %v60
  %2598 = vrot.lane.b32.xlu0 %v2583, 48
  %v2599 = vpop.permute.xlu0 %2598
  %2600 = vrot.lane.b32.xlu0 %v2584, 48
  %v2601 = vpop.permute.xlu0 %2600
  %2602 = vrot.lane.b32.xlu0 %v2585, 48
  %v2603 = vpop.permute.xlu0 %2602
  %v2607 = vsel %vm153, %v2592, %v2599
  %v2608 = vsel %vm153, %v2593, %v2601
  %v2609 = vsel %vm153, %v2594, %v2603
  %v2611 = vsel %vm171, %v2607, 0
  %v2614 = vsel %vm171, %v2608, 0
  %v2617 = vsel %vm171, %v2609, 0
  %2619 = vmatpush.msra.mxu0 0.0
  %2620 = vmatpush.msra.mxu0 0.0
  %2621 = vmatpush.msra.mxu0 0.0
  %2622 = vmatpush.msra.mxu0 0.0
  %2623 = vmatpush.msra.mxu0 %v168
  %2624 = vmatpush.msra.mxu0 %v167
  %2625 = vmatpush.msra.mxu0 %v166
  %2626 = vmatpush.msra.mxu0 %v165
  %2627 = vmatpush.msra.mxu0 %v164
  %2628 = vmatpush.msra.mxu0 %v163
  %2629 = vmatpush.msra.mxu0 %v162
  %2630 = vmatpush.msra.mxu0 %v161
  %2631 = vmatpush.msra.mxu0 %v160
  %2632 = vmatpush.msra.mxu0 %v159
  %2633 = vmatpush.msra.mxu0 %v158
  %2634 = vmatpush.msra.mxu0 %v157
  %2635 = vmatmul.f32.gmra.mxu0 %v2611
  %v2636 = vpop.f32.mrf.mxu0
  %v2637 = vadd.f32 %v170, %v2636
  %2638 = vmatmul.f32.gmra.mxu0 %v2614
  %v2639 = vpop.f32.mrf.mxu0
  %v2640 = vadd.f32 %v170, %v2639
  %2641 = vmatmul.f32.gmra.mxu0 %v2617
  %v2642 = vpop.f32.mrf.mxu0
  %v2643 = vadd.f32 %v170, %v2642
  %2644 = vdwg.mxu0
  %v2645 = vmax.f32 %v2637, 0.0
  %v2646 = vmax.f32 %v2640, 0.0
  %v2647 = vmax.f32 %v2643, 0.0
  %2651 = vrot.lane.b32.xlu0 %v2575, 80
  %v2652 = vpop.permute.xlu0 %2651
  %2653 = vrot.lane.b32.xlu0 %v2578, 80
  %v2654 = vpop.permute.xlu0 %2653
  %2655 = vrot.lane.b32.xlu0 %v2581, 80
  %v2656 = vpop.permute.xlu0 %2655
  %v2660 = vadd.f32 %v2645, %v2652
  %v2661 = vadd.f32 %v2646, %v2654
  %v2662 = vadd.f32 %v2647, %v2656
  %v2663 = vmax.f32 %v2660, 0.0
  %v2664 = vmax.f32 %v2661, 0.0
  %v2665 = vmax.f32 %v2662, 0.0
  %v2666 = vrot.slane %v2663, 6
  %v2667 = vrot.slane %v2664, 6
  %v2668 = vrot.slane %v2665, 6
  %v2669 = vsel %vm231, %v2667, %v2668
  %v2670 = vsel %vm231, %v2666, %v2667
  %v2671 = vsel %vm231, %v2668, %v2666
  %v2672 = vmul.f32 %v2671, %v237
  %v2673 = vmul.f32 %v2670, %v241
  %v2674 = vmul.f32 %v2669, %v245
  %2678 = vrot.lane.b32.xlu0 %v2663, 48
  %v2679 = vpop.permute.xlu0 %2678
  %2680 = vrot.lane.b32.xlu0 %v2664, 48
  %v2681 = vpop.permute.xlu0 %2680
  %2682 = vrot.lane.b32.xlu0 %v2665, 48
  %v2683 = vpop.permute.xlu0 %2682
  %v2687 = vsel %vm153, %v2672, %v2679
  %v2688 = vsel %vm153, %v2673, %v2681
  %v2689 = vsel %vm153, %v2674, %v2683
  %v2691 = vsel %vm171, %v2687, 0
  %v2694 = vsel %vm171, %v2688, 0
  %v2697 = vsel %vm171, %v2689, 0
  %2699 = vmatpush.msra.mxu0 0.0
  %2700 = vmatpush.msra.mxu0 0.0
  %2701 = vmatpush.msra.mxu0 0.0
  %2702 = vmatpush.msra.mxu0 0.0
  %2703 = vmatpush.msra.mxu0 %v276
  %2704 = vmatpush.msra.mxu0 %v275
  %2705 = vmatpush.msra.mxu0 %v274
  %2706 = vmatpush.msra.mxu0 %v273
  %2707 = vmatpush.msra.mxu0 %v272
  %2708 = vmatpush.msra.mxu0 %v271
  %2709 = vmatpush.msra.mxu0 %v270
  %2710 = vmatpush.msra.mxu0 %v269
  %2711 = vmatpush.msra.mxu0 %v268
  %2712 = vmatpush.msra.mxu0 %v267
  %2713 = vmatpush.msra.mxu0 %v266
  %2714 = vmatpush.msra.mxu0 %v265
  %2715 = vmatmul.f32.gmra.mxu0 %v2691
  %v2716 = vpop.f32.mrf.mxu0
  %v2717 = vadd.f32 %v278, %v2716
  %2718 = vmatmul.f32.gmra.mxu0 %v2694
  %v2719 = vpop.f32.mrf.mxu0
  %v2720 = vadd.f32 %v278, %v2719
  %2721 = vmatmul.f32.gmra.mxu0 %v2697
  %v2722 = vpop.f32.mrf.mxu0
  %v2723 = vadd.f32 %v278, %v2722
  %2724 = vdwg.mxu0
  %v2725 = vmax.f32 %v2717, 0.0
  %v2726 = vmax.f32 %v2720, 0.0
  %v2727 = vmax.f32 %v2723, 0.0
  %v2728 = vrot.slane %v2725, 6
  %v2729 = vrot.slane %v2726, 6
  %v2730 = vrot.slane %v2727, 6
  %v2731 = vsel %vm231, %v2729, %v2730
  %v2732 = vsel %vm231, %v2728, %v2729
  %v2733 = vsel %vm231, %v2730, %v2728
  %v2734 = vmul.f32 %v2733, %v237
  %v2735 = vmul.f32 %v2732, %v241
  %v2736 = vmul.f32 %v2731, %v245
  %2740 = vrot.lane.b32.xlu0 %v2725, 40
  %v2741 = vpop.permute.xlu0 %2740
  %2742 = vrot.lane.b32.xlu0 %v2726, 40
  %v2743 = vpop.permute.xlu0 %2742
  %2744 = vrot.lane.b32.xlu0 %v2727, 40
  %v2745 = vpop.permute.xlu0 %2744
  %v2749 = vsel %vm77, %v2734, %v2741
  %v2750 = vsel %vm77, %v2735, %v2743
  %v2751 = vsel %vm77, %v2736, %v2745
  %v2753 = vsel %vm93, %v2749, 0
  %v2756 = vsel %vm93, %v2750, 0
  %v2759 = vsel %vm93, %v2751, 0
  %2761 = vmatpush.msra.mxu0 0.0
  %2762 = vmatpush.msra.mxu0 0.0
  %2763 = vmatpush.msra.mxu0 0.0
  %2764 = vmatpush.msra.mxu0 0.0
  %2765 = vmatpush.msra.mxu0 0.0
  %2766 = vmatpush.msra.mxu0 0.0
  %2767 = vmatpush.msra.mxu0 %v350
  %2768 = vmatpush.msra.mxu0 %v349
  %2769 = vmatpush.msra.mxu0 %v348
  %2770 = vmatpush.msra.mxu0 %v347
  %2771 = vmatpush.msra.mxu0 %v346
  %2772 = vmatpush.msra.mxu0 %v345
  %2773 = vmatpush.msra.mxu0 %v344
  %2774 = vmatpush.msra.mxu0 %v343
  %2775 = vmatpush.msra.mxu0 %v342
  %2776 = vmatpush.msra.mxu0 %v341
  %2777 = vmatmul.f32.gmra.mxu0 %v2753
  %v2778 = vpop.f32.mrf.mxu0
  %v2779 = vadd.f32 %v352, %v2778
  %2780 = vmatmul.f32.gmra.mxu0 %v2756
  %v2781 = vpop.f32.mrf.mxu0
  %v2782 = vadd.f32 %v352, %v2781
  %2783 = vmatmul.f32.gmra.mxu0 %v2759
  %v2784 = vpop.f32.mrf.mxu0
  %v2785 = vadd.f32 %v352, %v2784
  %2786 = vdwg.mxu0
  %v2787 = vmax.f32 %v2779, 0.0
  %v2788 = vmax.f32 %v2782, 0.0
  %v2789 = vmax.f32 %v2785, 0.0
  %2793 = vrot.lane.b32.xlu0 %v2717, 88
  %v2794 = vpop.permute.xlu0 %2793
  %2795 = vrot.lane.b32.xlu0 %v2720, 88
  %v2796 = vpop.permute.xlu0 %2795
  %2797 = vrot.lane.b32.xlu0 %v2723, 88
  %v2798 = vpop.permute.xlu0 %2797
  %v2802 = vadd.f32 %v2787, %v2794
  %v2803 = vadd.f32 %v2788, %v2796
  %v2804 = vadd.f32 %v2789, %v2798
  %v2805 = vmax.f32 %v2802, 0.0
  %v2806 = vmax.f32 %v2803, 0.0
  %v2807 = vmax.f32 %v2804, 0.0
  %v2808 = vmul.f32 %v2805, %v32
  %v2809 = vmul.f32 %v2806, %v33
  %v2810 = vmul.f32 %v2807, %v34
  %v2811 = vadd.f32 %v29, %v2808
  %v2812 = vadd.f32 %v30, %v2809
  %v2813 = vadd.f32 %v31, %v2810
  %s2814 = scalar_lea.vmem %s5, 192
  %v2815 = vld [vmem:[%s2814] sm:$0xff]
  %v2816 = vld [vmem:[%s2814 + $0x8] sm:$0xff]
  %v2817 = vld [vmem:[%s2814 + $0x10] sm:$0xff]
  %vm2818 = vcmp.gt.f32.partialorder %v2815, 0.5
  %vm2819 = vcmp.gt.f32.partialorder %v2816, 0.5
  %vm2820 = vcmp.gt.f32.partialorder %v2817, 0.5
  %v2821 = vsel %vm2818, %v2811, %v2521
  %v2822 = vsel %vm2819, %v2812, %v2522
  %v2823 = vsel %vm2820, %v2813, %v2523
  %v2824 = vrot.slane %v2821, 7
  %v2825 = vrot.slane %v2822, 7
  %v2826 = vrot.slane %v2823, 7
  %v2827 = vsel %vm43, %v2825, %v2826
  %v2828 = vsel %vm43, %v2824, %v2825
  %v2829 = vsel %vm43, %v2826, %v2824
  %v2830 = vmul.f32 %v2829, %v50
  %v2831 = vmul.f32 %v2828, %v55
  %v2832 = vmul.f32 %v2827, %v60
  %2836 = vrot.lane.b32.xlu0 %v2821, 40
  %v2837 = vpop.permute.xlu0 %2836
  %2838 = vrot.lane.b32.xlu0 %v2822, 40
  %v2839 = vpop.permute.xlu0 %2838
  %2840 = vrot.lane.b32.xlu0 %v2823, 40
  %v2841 = vpop.permute.xlu0 %2840
  %v2845 = vsel %vm77, %v2830, %v2837
  %v2846 = vsel %vm77, %v2831, %v2839
  %v2847 = vsel %vm77, %v2832, %v2841
  %v2849 = vsel %vm93, %v2845, 0
  %v2852 = vsel %vm93, %v2846, 0
  %v2855 = vsel %vm93, %v2847, 0
  %2857 = vmatpush.msra.mxu0 0.0
  %2858 = vmatpush.msra.mxu0 0.0
  %2859 = vmatpush.msra.mxu0 0.0
  %2860 = vmatpush.msra.mxu0 0.0
  %2861 = vmatpush.msra.mxu0 0.0
  %2862 = vmatpush.msra.mxu0 0.0
  %2863 = vmatpush.msra.mxu0 %v90
  %2864 = vmatpush.msra.mxu0 %v89
  %2865 = vmatpush.msra.mxu0 %v88
  %2866 = vmatpush.msra.mxu0 %v87
  %2867 = vmatpush.msra.mxu0 %v86
  %2868 = vmatpush.msra.mxu0 %v85
  %2869 = vmatpush.msra.mxu0 %v84
  %2870 = vmatpush.msra.mxu0 %v83
  %2871 = vmatpush.msra.mxu0 %v82
  %2872 = vmatpush.msra.mxu0 %v81
  %2873 = vmatmul.f32.gmra.mxu0 %v2849
  %v2874 = vpop.f32.mrf.mxu0
  %v2875 = vadd.f32 %v92, %v2874
  %2876 = vmatmul.f32.gmra.mxu0 %v2852
  %v2877 = vpop.f32.mrf.mxu0
  %v2878 = vadd.f32 %v92, %v2877
  %2879 = vmatmul.f32.gmra.mxu0 %v2855
  %v2880 = vpop.f32.mrf.mxu0
  %v2881 = vadd.f32 %v92, %v2880
  %2882 = vdwg.mxu0
  %v2883 = vmax.f32 %v2875, 0.0
  %v2884 = vmax.f32 %v2878, 0.0
  %v2885 = vmax.f32 %v2881, 0.0
  %v2886 = vrot.slane %v2883, 7
  %v2887 = vrot.slane %v2884, 7
  %v2888 = vrot.slane %v2885, 7
  %v2889 = vsel %vm43, %v2887, %v2888
  %v2890 = vsel %vm43, %v2886, %v2887
  %v2891 = vsel %vm43, %v2888, %v2886
  %v2892 = vmul.f32 %v2891, %v50
  %v2893 = vmul.f32 %v2890, %v55
  %v2894 = vmul.f32 %v2889, %v60
  %2898 = vrot.lane.b32.xlu0 %v2883, 48
  %v2899 = vpop.permute.xlu0 %2898
  %2900 = vrot.lane.b32.xlu0 %v2884, 48
  %v2901 = vpop.permute.xlu0 %2900
  %2902 = vrot.lane.b32.xlu0 %v2885, 48
  %v2903 = vpop.permute.xlu0 %2902
  %v2907 = vsel %vm153, %v2892, %v2899
  %v2908 = vsel %vm153, %v2893, %v2901
  %v2909 = vsel %vm153, %v2894, %v2903
  %v2911 = vsel %vm171, %v2907, 0
  %v2914 = vsel %vm171, %v2908, 0
  %v2917 = vsel %vm171, %v2909, 0
  %2919 = vmatpush.msra.mxu0 0.0
  %2920 = vmatpush.msra.mxu0 0.0
  %2921 = vmatpush.msra.mxu0 0.0
  %2922 = vmatpush.msra.mxu0 0.0
  %2923 = vmatpush.msra.mxu0 %v168
  %2924 = vmatpush.msra.mxu0 %v167
  %2925 = vmatpush.msra.mxu0 %v166
  %2926 = vmatpush.msra.mxu0 %v165
  %2927 = vmatpush.msra.mxu0 %v164
  %2928 = vmatpush.msra.mxu0 %v163
  %2929 = vmatpush.msra.mxu0 %v162
  %2930 = vmatpush.msra.mxu0 %v161
  %2931 = vmatpush.msra.mxu0 %v160
  %2932 = vmatpush.msra.mxu0 %v159
  %2933 = vmatpush.msra.mxu0 %v158
  %2934 = vmatpush.msra.mxu0 %v157
  %2935 = vmatmul.f32.gmra.mxu0 %v2911
  %v2936 = vpop.f32.mrf.mxu0
  %v2937 = vadd.f32 %v170, %v2936
  %2938 = vmatmul.f32.gmra.mxu0 %v2914
  %v2939 = vpop.f32.mrf.mxu0
  %v2940 = vadd.f32 %v170, %v2939
  %2941 = vmatmul.f32.gmra.mxu0 %v2917
  %v2942 = vpop.f32.mrf.mxu0
  %v2943 = vadd.f32 %v170, %v2942
  %2944 = vdwg.mxu0
  %v2945 = vmax.f32 %v2937, 0.0
  %v2946 = vmax.f32 %v2940, 0.0
  %v2947 = vmax.f32 %v2943, 0.0
  %2951 = vrot.lane.b32.xlu0 %v2875, 80
  %v2952 = vpop.permute.xlu0 %2951
  %2953 = vrot.lane.b32.xlu0 %v2878, 80
  %v2954 = vpop.permute.xlu0 %2953
  %2955 = vrot.lane.b32.xlu0 %v2881, 80
  %v2956 = vpop.permute.xlu0 %2955
  %v2960 = vadd.f32 %v2945, %v2952
  %v2961 = vadd.f32 %v2946, %v2954
  %v2962 = vadd.f32 %v2947, %v2956
  %v2963 = vmax.f32 %v2960, 0.0
  %v2964 = vmax.f32 %v2961, 0.0
  %v2965 = vmax.f32 %v2962, 0.0
  %v2966 = vrot.slane %v2963, 6
  %v2967 = vrot.slane %v2964, 6
  %v2968 = vrot.slane %v2965, 6
  %v2969 = vsel %vm231, %v2967, %v2968
  %v2970 = vsel %vm231, %v2966, %v2967
  %v2971 = vsel %vm231, %v2968, %v2966
  %v2972 = vmul.f32 %v2971, %v237
  %v2973 = vmul.f32 %v2970, %v241
  %v2974 = vmul.f32 %v2969, %v245
  %2978 = vrot.lane.b32.xlu0 %v2963, 48
  %v2979 = vpop.permute.xlu0 %2978
  %2980 = vrot.lane.b32.xlu0 %v2964, 48
  %v2981 = vpop.permute.xlu0 %2980
  %2982 = vrot.lane.b32.xlu0 %v2965, 48
  %v2983 = vpop.permute.xlu0 %2982
  %v2987 = vsel %vm153, %v2972, %v2979
  %v2988 = vsel %vm153, %v2973, %v2981
  %v2989 = vsel %vm153, %v2974, %v2983
  %v2991 = vsel %vm171, %v2987, 0
  %v2994 = vsel %vm171, %v2988, 0
  %v2997 = vsel %vm171, %v2989, 0
  %2999 = vmatpush.msra.mxu0 0.0
  %3000 = vmatpush.msra.mxu0 0.0
  %3001 = vmatpush.msra.mxu0 0.0
  %3002 = vmatpush.msra.mxu0 0.0
  %3003 = vmatpush.msra.mxu0 %v276
  %3004 = vmatpush.msra.mxu0 %v275
  %3005 = vmatpush.msra.mxu0 %v274
  %3006 = vmatpush.msra.mxu0 %v273
  %3007 = vmatpush.msra.mxu0 %v272
  %3008 = vmatpush.msra.mxu0 %v271
  %3009 = vmatpush.msra.mxu0 %v270
  %3010 = vmatpush.msra.mxu0 %v269
  %3011 = vmatpush.msra.mxu0 %v268
  %3012 = vmatpush.msra.mxu0 %v267
  %3013 = vmatpush.msra.mxu0 %v266
  %3014 = vmatpush.msra.mxu0 %v265
  %3015 = vmatmul.f32.gmra.mxu0 %v2991
  %v3016 = vpop.f32.mrf.mxu0
  %v3017 = vadd.f32 %v278, %v3016
  %3018 = vmatmul.f32.gmra.mxu0 %v2994
  %v3019 = vpop.f32.mrf.mxu0
  %v3020 = vadd.f32 %v278, %v3019
  %3021 = vmatmul.f32.gmra.mxu0 %v2997
  %v3022 = vpop.f32.mrf.mxu0
  %v3023 = vadd.f32 %v278, %v3022
  %3024 = vdwg.mxu0
  %v3025 = vmax.f32 %v3017, 0.0
  %v3026 = vmax.f32 %v3020, 0.0
  %v3027 = vmax.f32 %v3023, 0.0
  %v3028 = vrot.slane %v3025, 6
  %v3029 = vrot.slane %v3026, 6
  %v3030 = vrot.slane %v3027, 6
  %v3031 = vsel %vm231, %v3029, %v3030
  %v3032 = vsel %vm231, %v3028, %v3029
  %v3033 = vsel %vm231, %v3030, %v3028
  %v3034 = vmul.f32 %v3033, %v237
  %v3035 = vmul.f32 %v3032, %v241
  %v3036 = vmul.f32 %v3031, %v245
  %3040 = vrot.lane.b32.xlu0 %v3025, 40
  %v3041 = vpop.permute.xlu0 %3040
  %3042 = vrot.lane.b32.xlu0 %v3026, 40
  %v3043 = vpop.permute.xlu0 %3042
  %3044 = vrot.lane.b32.xlu0 %v3027, 40
  %v3045 = vpop.permute.xlu0 %3044
  %v3049 = vsel %vm77, %v3034, %v3041
  %v3050 = vsel %vm77, %v3035, %v3043
  %v3051 = vsel %vm77, %v3036, %v3045
  %v3053 = vsel %vm93, %v3049, 0
  %v3056 = vsel %vm93, %v3050, 0
  %v3059 = vsel %vm93, %v3051, 0
  %3061 = vmatpush.msra.mxu0 0.0
  %3062 = vmatpush.msra.mxu0 0.0
  %3063 = vmatpush.msra.mxu0 0.0
  %3064 = vmatpush.msra.mxu0 0.0
  %3065 = vmatpush.msra.mxu0 0.0
  %3066 = vmatpush.msra.mxu0 0.0
  %3067 = vmatpush.msra.mxu0 %v350
  %3068 = vmatpush.msra.mxu0 %v349
  %3069 = vmatpush.msra.mxu0 %v348
  %3070 = vmatpush.msra.mxu0 %v347
  %3071 = vmatpush.msra.mxu0 %v346
  %3072 = vmatpush.msra.mxu0 %v345
  %3073 = vmatpush.msra.mxu0 %v344
  %3074 = vmatpush.msra.mxu0 %v343
  %3075 = vmatpush.msra.mxu0 %v342
  %3076 = vmatpush.msra.mxu0 %v341
  %3077 = vmatmul.f32.gmra.mxu0 %v3053
  %v3078 = vpop.f32.mrf.mxu0
  %v3079 = vadd.f32 %v352, %v3078
  %3080 = vmatmul.f32.gmra.mxu0 %v3056
  %v3081 = vpop.f32.mrf.mxu0
  %v3082 = vadd.f32 %v352, %v3081
  %3083 = vmatmul.f32.gmra.mxu0 %v3059
  %v3084 = vpop.f32.mrf.mxu0
  %v3085 = vadd.f32 %v352, %v3084
  %3086 = vdwg.mxu0
  %v3087 = vmax.f32 %v3079, 0.0
  %v3088 = vmax.f32 %v3082, 0.0
  %v3089 = vmax.f32 %v3085, 0.0
  %3093 = vrot.lane.b32.xlu0 %v3017, 88
  %v3094 = vpop.permute.xlu0 %3093
  %3095 = vrot.lane.b32.xlu0 %v3020, 88
  %v3096 = vpop.permute.xlu0 %3095
  %3097 = vrot.lane.b32.xlu0 %v3023, 88
  %v3098 = vpop.permute.xlu0 %3097
  %v3102 = vadd.f32 %v3087, %v3094
  %v3103 = vadd.f32 %v3088, %v3096
  %v3104 = vadd.f32 %v3089, %v3098
  %v3105 = vmax.f32 %v3102, 0.0
  %v3106 = vmax.f32 %v3103, 0.0
  %v3107 = vmax.f32 %v3104, 0.0
  %v3108 = vmul.f32 %v3105, %v32
  %v3109 = vmul.f32 %v3106, %v33
  %v3110 = vmul.f32 %v3107, %v34
  %v3111 = vadd.f32 %v29, %v3108
  %v3112 = vadd.f32 %v30, %v3109
  %v3113 = vadd.f32 %v31, %v3110
  %s3114 = scalar_lea.vmem %s5, 216
  %v3115 = vld [vmem:[%s3114] sm:$0xff]
  %v3116 = vld [vmem:[%s3114 + $0x8] sm:$0xff]
  %v3117 = vld [vmem:[%s3114 + $0x10] sm:$0xff]
  %vm3118 = vcmp.gt.f32.partialorder %v3115, 0.5
  %vm3119 = vcmp.gt.f32.partialorder %v3116, 0.5
  %vm3120 = vcmp.gt.f32.partialorder %v3117, 0.5
  %v3121 = vsel %vm3118, %v3111, %v2821
  %v3122 = vsel %vm3119, %v3112, %v2822
  %v3123 = vsel %vm3120, %v3113, %v2823
  %v3124 = vrot.slane %v3121, 7
  %v3125 = vrot.slane %v3122, 7
  %v3126 = vrot.slane %v3123, 7
  %v3127 = vsel %vm43, %v3125, %v3126
  %v3128 = vsel %vm43, %v3124, %v3125
  %v3129 = vsel %vm43, %v3126, %v3124
  %v3130 = vmul.f32 %v3129, %v50
  %v3131 = vmul.f32 %v3128, %v55
  %v3132 = vmul.f32 %v3127, %v60
  %3136 = vrot.lane.b32.xlu0 %v3121, 40
  %v3137 = vpop.permute.xlu0 %3136
  %3138 = vrot.lane.b32.xlu0 %v3122, 40
  %v3139 = vpop.permute.xlu0 %3138
  %3140 = vrot.lane.b32.xlu0 %v3123, 40
  %v3141 = vpop.permute.xlu0 %3140
  %v3145 = vsel %vm77, %v3130, %v3137
  %v3146 = vsel %vm77, %v3131, %v3139
  %v3147 = vsel %vm77, %v3132, %v3141
  %v3149 = vsel %vm93, %v3145, 0
  %v3152 = vsel %vm93, %v3146, 0
  %v3155 = vsel %vm93, %v3147, 0
  %3157 = vmatpush.msra.mxu0 0.0
  %3158 = vmatpush.msra.mxu0 0.0
  %3159 = vmatpush.msra.mxu0 0.0
  %3160 = vmatpush.msra.mxu0 0.0
  %3161 = vmatpush.msra.mxu0 0.0
  %3162 = vmatpush.msra.mxu0 0.0
  %3163 = vmatpush.msra.mxu0 %v90
  %3164 = vmatpush.msra.mxu0 %v89
  %3165 = vmatpush.msra.mxu0 %v88
  %3166 = vmatpush.msra.mxu0 %v87
  %3167 = vmatpush.msra.mxu0 %v86
  %3168 = vmatpush.msra.mxu0 %v85
  %3169 = vmatpush.msra.mxu0 %v84
  %3170 = vmatpush.msra.mxu0 %v83
  %3171 = vmatpush.msra.mxu0 %v82
  %3172 = vmatpush.msra.mxu0 %v81
  %3173 = vmatmul.f32.gmra.mxu0 %v3149
  %v3174 = vpop.f32.mrf.mxu0
  %v3175 = vadd.f32 %v92, %v3174
  %3176 = vmatmul.f32.gmra.mxu0 %v3152
  %v3177 = vpop.f32.mrf.mxu0
  %v3178 = vadd.f32 %v92, %v3177
  %3179 = vmatmul.f32.gmra.mxu0 %v3155
  %v3180 = vpop.f32.mrf.mxu0
  %v3181 = vadd.f32 %v92, %v3180
  %3182 = vdwg.mxu0
  %v3183 = vmax.f32 %v3175, 0.0
  %v3184 = vmax.f32 %v3178, 0.0
  %v3185 = vmax.f32 %v3181, 0.0
  %v3186 = vrot.slane %v3183, 7
  %v3187 = vrot.slane %v3184, 7
  %v3188 = vrot.slane %v3185, 7
  %v3189 = vsel %vm43, %v3187, %v3188
  %v3190 = vsel %vm43, %v3186, %v3187
  %v3191 = vsel %vm43, %v3188, %v3186
  %v3192 = vmul.f32 %v3191, %v50
  %v3193 = vmul.f32 %v3190, %v55
  %v3194 = vmul.f32 %v3189, %v60
  %3198 = vrot.lane.b32.xlu0 %v3183, 48
  %v3199 = vpop.permute.xlu0 %3198
  %3200 = vrot.lane.b32.xlu0 %v3184, 48
  %v3201 = vpop.permute.xlu0 %3200
  %3202 = vrot.lane.b32.xlu0 %v3185, 48
  %v3203 = vpop.permute.xlu0 %3202
  %v3207 = vsel %vm153, %v3192, %v3199
  %v3208 = vsel %vm153, %v3193, %v3201
  %v3209 = vsel %vm153, %v3194, %v3203
  %v3211 = vsel %vm171, %v3207, 0
  %v3214 = vsel %vm171, %v3208, 0
  %v3217 = vsel %vm171, %v3209, 0
  %3219 = vmatpush.msra.mxu0 0.0
  %3220 = vmatpush.msra.mxu0 0.0
  %3221 = vmatpush.msra.mxu0 0.0
  %3222 = vmatpush.msra.mxu0 0.0
  %3223 = vmatpush.msra.mxu0 %v168
  %3224 = vmatpush.msra.mxu0 %v167
  %3225 = vmatpush.msra.mxu0 %v166
  %3226 = vmatpush.msra.mxu0 %v165
  %3227 = vmatpush.msra.mxu0 %v164
  %3228 = vmatpush.msra.mxu0 %v163
  %3229 = vmatpush.msra.mxu0 %v162
  %3230 = vmatpush.msra.mxu0 %v161
  %3231 = vmatpush.msra.mxu0 %v160
  %3232 = vmatpush.msra.mxu0 %v159
  %3233 = vmatpush.msra.mxu0 %v158
  %3234 = vmatpush.msra.mxu0 %v157
  %3235 = vmatmul.f32.gmra.mxu0 %v3211
  %v3236 = vpop.f32.mrf.mxu0
  %v3237 = vadd.f32 %v170, %v3236
  %3238 = vmatmul.f32.gmra.mxu0 %v3214
  %v3239 = vpop.f32.mrf.mxu0
  %v3240 = vadd.f32 %v170, %v3239
  %3241 = vmatmul.f32.gmra.mxu0 %v3217
  %v3242 = vpop.f32.mrf.mxu0
  %v3243 = vadd.f32 %v170, %v3242
  %3244 = vdwg.mxu0
  %v3245 = vmax.f32 %v3237, 0.0
  %v3246 = vmax.f32 %v3240, 0.0
  %v3247 = vmax.f32 %v3243, 0.0
  %3251 = vrot.lane.b32.xlu0 %v3175, 80
  %v3252 = vpop.permute.xlu0 %3251
  %3253 = vrot.lane.b32.xlu0 %v3178, 80
  %v3254 = vpop.permute.xlu0 %3253
  %3255 = vrot.lane.b32.xlu0 %v3181, 80
  %v3256 = vpop.permute.xlu0 %3255
  %v3260 = vadd.f32 %v3245, %v3252
  %v3261 = vadd.f32 %v3246, %v3254
  %v3262 = vadd.f32 %v3247, %v3256
  %v3263 = vmax.f32 %v3260, 0.0
  %v3264 = vmax.f32 %v3261, 0.0
  %v3265 = vmax.f32 %v3262, 0.0
  %v3266 = vrot.slane %v3263, 6
  %v3267 = vrot.slane %v3264, 6
  %v3268 = vrot.slane %v3265, 6
  %v3269 = vsel %vm231, %v3267, %v3268
  %v3270 = vsel %vm231, %v3266, %v3267
  %v3271 = vsel %vm231, %v3268, %v3266
  %v3272 = vmul.f32 %v3271, %v237
  %v3273 = vmul.f32 %v3270, %v241
  %v3274 = vmul.f32 %v3269, %v245
  %3278 = vrot.lane.b32.xlu0 %v3263, 48
  %v3279 = vpop.permute.xlu0 %3278
  %3280 = vrot.lane.b32.xlu0 %v3264, 48
  %v3281 = vpop.permute.xlu0 %3280
  %3282 = vrot.lane.b32.xlu0 %v3265, 48
  %v3283 = vpop.permute.xlu0 %3282
  %v3287 = vsel %vm153, %v3272, %v3279
  %v3288 = vsel %vm153, %v3273, %v3281
  %v3289 = vsel %vm153, %v3274, %v3283
  %v3291 = vsel %vm171, %v3287, 0
  %v3294 = vsel %vm171, %v3288, 0
  %v3297 = vsel %vm171, %v3289, 0
  %3299 = vmatpush.msra.mxu0 0.0
  %3300 = vmatpush.msra.mxu0 0.0
  %3301 = vmatpush.msra.mxu0 0.0
  %3302 = vmatpush.msra.mxu0 0.0
  %3303 = vmatpush.msra.mxu0 %v276
  %3304 = vmatpush.msra.mxu0 %v275
  %3305 = vmatpush.msra.mxu0 %v274
  %3306 = vmatpush.msra.mxu0 %v273
  %3307 = vmatpush.msra.mxu0 %v272
  %3308 = vmatpush.msra.mxu0 %v271
  %3309 = vmatpush.msra.mxu0 %v270
  %3310 = vmatpush.msra.mxu0 %v269
  %3311 = vmatpush.msra.mxu0 %v268
  %3312 = vmatpush.msra.mxu0 %v267
  %3313 = vmatpush.msra.mxu0 %v266
  %3314 = vmatpush.msra.mxu0 %v265
  %3315 = vmatmul.f32.gmra.mxu0 %v3291
  %v3316 = vpop.f32.mrf.mxu0
  %v3317 = vadd.f32 %v278, %v3316
  %3318 = vmatmul.f32.gmra.mxu0 %v3294
  %v3319 = vpop.f32.mrf.mxu0
  %v3320 = vadd.f32 %v278, %v3319
  %3321 = vmatmul.f32.gmra.mxu0 %v3297
  %v3322 = vpop.f32.mrf.mxu0
  %v3323 = vadd.f32 %v278, %v3322
  %3324 = vdwg.mxu0
  %v3325 = vmax.f32 %v3317, 0.0
  %v3326 = vmax.f32 %v3320, 0.0
  %v3327 = vmax.f32 %v3323, 0.0
  %v3328 = vrot.slane %v3325, 6
  %v3329 = vrot.slane %v3326, 6
  %v3330 = vrot.slane %v3327, 6
  %v3331 = vsel %vm231, %v3329, %v3330
  %v3332 = vsel %vm231, %v3328, %v3329
  %v3333 = vsel %vm231, %v3330, %v3328
  %v3334 = vmul.f32 %v3333, %v237
  %v3335 = vmul.f32 %v3332, %v241
  %v3336 = vmul.f32 %v3331, %v245
  %3340 = vrot.lane.b32.xlu0 %v3325, 40
  %v3341 = vpop.permute.xlu0 %3340
  %3342 = vrot.lane.b32.xlu0 %v3326, 40
  %v3343 = vpop.permute.xlu0 %3342
  %3344 = vrot.lane.b32.xlu0 %v3327, 40
  %v3345 = vpop.permute.xlu0 %3344
  %v3349 = vsel %vm77, %v3334, %v3341
  %v3350 = vsel %vm77, %v3335, %v3343
  %v3351 = vsel %vm77, %v3336, %v3345
  %v3353 = vsel %vm93, %v3349, 0
  %v3356 = vsel %vm93, %v3350, 0
  %v3359 = vsel %vm93, %v3351, 0
  %3361 = vmatpush.msra.mxu0 0.0
  %3362 = vmatpush.msra.mxu0 0.0
  %3363 = vmatpush.msra.mxu0 0.0
  %3364 = vmatpush.msra.mxu0 0.0
  %3365 = vmatpush.msra.mxu0 0.0
  %3366 = vmatpush.msra.mxu0 0.0
  %3367 = vmatpush.msra.mxu0 %v350
  %3368 = vmatpush.msra.mxu0 %v349
  %3369 = vmatpush.msra.mxu0 %v348
  %3370 = vmatpush.msra.mxu0 %v347
  %3371 = vmatpush.msra.mxu0 %v346
  %3372 = vmatpush.msra.mxu0 %v345
  %3373 = vmatpush.msra.mxu0 %v344
  %3374 = vmatpush.msra.mxu0 %v343
  %3375 = vmatpush.msra.mxu0 %v342
  %3376 = vmatpush.msra.mxu0 %v341
  %3377 = vmatmul.f32.gmra.mxu0 %v3353
  %v3378 = vpop.f32.mrf.mxu0
  %v3379 = vadd.f32 %v352, %v3378
  %3380 = vmatmul.f32.gmra.mxu0 %v3356
  %v3381 = vpop.f32.mrf.mxu0
  %v3382 = vadd.f32 %v352, %v3381
  %3383 = vmatmul.f32.gmra.mxu0 %v3359
  %v3384 = vpop.f32.mrf.mxu0
  %v3385 = vadd.f32 %v352, %v3384
  %3386 = vdwg.mxu0
  %v3387 = vmax.f32 %v3379, 0.0
  %v3388 = vmax.f32 %v3382, 0.0
  %v3389 = vmax.f32 %v3385, 0.0
  %3393 = vrot.lane.b32.xlu0 %v3317, 88
  %v3394 = vpop.permute.xlu0 %3393
  %3395 = vrot.lane.b32.xlu0 %v3320, 88
  %v3396 = vpop.permute.xlu0 %3395
  %3397 = vrot.lane.b32.xlu0 %v3323, 88
  %v3398 = vpop.permute.xlu0 %3397
  %v3402 = vadd.f32 %v3387, %v3394
  %v3403 = vadd.f32 %v3388, %v3396
  %v3404 = vadd.f32 %v3389, %v3398
  %v3405 = vmax.f32 %v3402, 0.0
  %v3406 = vmax.f32 %v3403, 0.0
  %v3407 = vmax.f32 %v3404, 0.0
  %v3408 = vmul.f32 %v3405, %v32
  %v3409 = vmul.f32 %v3406, %v33
  %v3410 = vmul.f32 %v3407, %v34
  %v3411 = vadd.f32 %v29, %v3408
  %v3412 = vadd.f32 %v30, %v3409
  %v3413 = vadd.f32 %v31, %v3410
  %s3414 = scalar_lea.vmem %s5, 240
  %v3415 = vld [vmem:[%s3414] sm:$0xff]
  %v3416 = vld [vmem:[%s3414 + $0x8] sm:$0xff]
  %v3417 = vld [vmem:[%s3414 + $0x10] sm:$0xff]
  %vm3418 = vcmp.gt.f32.partialorder %v3415, 0.5
  %vm3419 = vcmp.gt.f32.partialorder %v3416, 0.5
  %vm3420 = vcmp.gt.f32.partialorder %v3417, 0.5
  %v3421 = vsel %vm3418, %v3411, %v3121
  %v3422 = vsel %vm3419, %v3412, %v3122
  %v3423 = vsel %vm3420, %v3413, %v3123
  %v3424 = vrot.slane %v3421, 7
  %v3425 = vrot.slane %v3422, 7
  %v3426 = vrot.slane %v3423, 7
  %v3427 = vsel %vm43, %v3425, %v3426
  %v3428 = vsel %vm43, %v3424, %v3425
  %v3429 = vsel %vm43, %v3426, %v3424
  %v3430 = vmul.f32 %v3429, %v50
  %v3431 = vmul.f32 %v3428, %v55
  %v3432 = vmul.f32 %v3427, %v60
  %3436 = vrot.lane.b32.xlu0 %v3421, 40
  %v3437 = vpop.permute.xlu0 %3436
  %3438 = vrot.lane.b32.xlu0 %v3422, 40
  %v3439 = vpop.permute.xlu0 %3438
  %3440 = vrot.lane.b32.xlu0 %v3423, 40
  %v3441 = vpop.permute.xlu0 %3440
  %v3445 = vsel %vm77, %v3430, %v3437
  %v3446 = vsel %vm77, %v3431, %v3439
  %v3447 = vsel %vm77, %v3432, %v3441
  %v3449 = vsel %vm93, %v3445, 0
  %v3452 = vsel %vm93, %v3446, 0
  %v3455 = vsel %vm93, %v3447, 0
  %3457 = vmatpush.msra.mxu0 0.0
  %3458 = vmatpush.msra.mxu0 0.0
  %3459 = vmatpush.msra.mxu0 0.0
  %3460 = vmatpush.msra.mxu0 0.0
  %3461 = vmatpush.msra.mxu0 0.0
  %3462 = vmatpush.msra.mxu0 0.0
  %3463 = vmatpush.msra.mxu0 %v90
  %3464 = vmatpush.msra.mxu0 %v89
  %3465 = vmatpush.msra.mxu0 %v88
  %3466 = vmatpush.msra.mxu0 %v87
  %3467 = vmatpush.msra.mxu0 %v86
  %3468 = vmatpush.msra.mxu0 %v85
  %3469 = vmatpush.msra.mxu0 %v84
  %3470 = vmatpush.msra.mxu0 %v83
  %3471 = vmatpush.msra.mxu0 %v82
  %3472 = vmatpush.msra.mxu0 %v81
  %3473 = vmatmul.f32.gmra.mxu0 %v3449
  %v3474 = vpop.f32.mrf.mxu0
  %v3475 = vadd.f32 %v92, %v3474
  %3476 = vmatmul.f32.gmra.mxu0 %v3452
  %v3477 = vpop.f32.mrf.mxu0
  %v3478 = vadd.f32 %v92, %v3477
  %3479 = vmatmul.f32.gmra.mxu0 %v3455
  %v3480 = vpop.f32.mrf.mxu0
  %v3481 = vadd.f32 %v92, %v3480
  %3482 = vdwg.mxu0
  %v3483 = vmax.f32 %v3475, 0.0
  %v3484 = vmax.f32 %v3478, 0.0
  %v3485 = vmax.f32 %v3481, 0.0
  %v3486 = vrot.slane %v3483, 7
  %v3487 = vrot.slane %v3484, 7
  %v3488 = vrot.slane %v3485, 7
  %v3489 = vsel %vm43, %v3487, %v3488
  %v3490 = vsel %vm43, %v3486, %v3487
  %v3491 = vsel %vm43, %v3488, %v3486
  %v3492 = vmul.f32 %v3491, %v50
  %v3493 = vmul.f32 %v3490, %v55
  %v3494 = vmul.f32 %v3489, %v60
  %3498 = vrot.lane.b32.xlu0 %v3483, 48
  %v3499 = vpop.permute.xlu0 %3498
  %3500 = vrot.lane.b32.xlu0 %v3484, 48
  %v3501 = vpop.permute.xlu0 %3500
  %3502 = vrot.lane.b32.xlu0 %v3485, 48
  %v3503 = vpop.permute.xlu0 %3502
  %v3507 = vsel %vm153, %v3492, %v3499
  %v3508 = vsel %vm153, %v3493, %v3501
  %v3509 = vsel %vm153, %v3494, %v3503
  %v3511 = vsel %vm171, %v3507, 0
  %v3514 = vsel %vm171, %v3508, 0
  %v3517 = vsel %vm171, %v3509, 0
  %3519 = vmatpush.msra.mxu0 0.0
  %3520 = vmatpush.msra.mxu0 0.0
  %3521 = vmatpush.msra.mxu0 0.0
  %3522 = vmatpush.msra.mxu0 0.0
  %3523 = vmatpush.msra.mxu0 %v168
  %3524 = vmatpush.msra.mxu0 %v167
  %3525 = vmatpush.msra.mxu0 %v166
  %3526 = vmatpush.msra.mxu0 %v165
  %3527 = vmatpush.msra.mxu0 %v164
  %3528 = vmatpush.msra.mxu0 %v163
  %3529 = vmatpush.msra.mxu0 %v162
  %3530 = vmatpush.msra.mxu0 %v161
  %3531 = vmatpush.msra.mxu0 %v160
  %3532 = vmatpush.msra.mxu0 %v159
  %3533 = vmatpush.msra.mxu0 %v158
  %3534 = vmatpush.msra.mxu0 %v157
  %3535 = vmatmul.f32.gmra.mxu0 %v3511
  %v3536 = vpop.f32.mrf.mxu0
  %v3537 = vadd.f32 %v170, %v3536
  %3538 = vmatmul.f32.gmra.mxu0 %v3514
  %v3539 = vpop.f32.mrf.mxu0
  %v3540 = vadd.f32 %v170, %v3539
  %3541 = vmatmul.f32.gmra.mxu0 %v3517
  %v3542 = vpop.f32.mrf.mxu0
  %v3543 = vadd.f32 %v170, %v3542
  %3544 = vdwg.mxu0
  %v3545 = vmax.f32 %v3537, 0.0
  %v3546 = vmax.f32 %v3540, 0.0
  %v3547 = vmax.f32 %v3543, 0.0
  %3551 = vrot.lane.b32.xlu0 %v3475, 80
  %v3552 = vpop.permute.xlu0 %3551
  %3553 = vrot.lane.b32.xlu0 %v3478, 80
  %v3554 = vpop.permute.xlu0 %3553
  %3555 = vrot.lane.b32.xlu0 %v3481, 80
  %v3556 = vpop.permute.xlu0 %3555
  %v3560 = vadd.f32 %v3545, %v3552
  %v3561 = vadd.f32 %v3546, %v3554
  %v3562 = vadd.f32 %v3547, %v3556
  %v3563 = vmax.f32 %v3560, 0.0
  %v3564 = vmax.f32 %v3561, 0.0
  %v3565 = vmax.f32 %v3562, 0.0
  %v3566 = vrot.slane %v3563, 6
  %v3567 = vrot.slane %v3564, 6
  %v3568 = vrot.slane %v3565, 6
  %v3569 = vsel %vm231, %v3567, %v3568
  %v3570 = vsel %vm231, %v3566, %v3567
  %v3571 = vsel %vm231, %v3568, %v3566
  %v3572 = vmul.f32 %v3571, %v237
  %v3573 = vmul.f32 %v3570, %v241
  %v3574 = vmul.f32 %v3569, %v245
  %3578 = vrot.lane.b32.xlu0 %v3563, 48
  %v3579 = vpop.permute.xlu0 %3578
  %3580 = vrot.lane.b32.xlu0 %v3564, 48
  %v3581 = vpop.permute.xlu0 %3580
  %3582 = vrot.lane.b32.xlu0 %v3565, 48
  %v3583 = vpop.permute.xlu0 %3582
  %v3587 = vsel %vm153, %v3572, %v3579
  %v3588 = vsel %vm153, %v3573, %v3581
  %v3589 = vsel %vm153, %v3574, %v3583
  %v3591 = vsel %vm171, %v3587, 0
  %v3594 = vsel %vm171, %v3588, 0
  %v3597 = vsel %vm171, %v3589, 0
  %3599 = vmatpush.msra.mxu0 0.0
  %3600 = vmatpush.msra.mxu0 0.0
  %3601 = vmatpush.msra.mxu0 0.0
  %3602 = vmatpush.msra.mxu0 0.0
  %3603 = vmatpush.msra.mxu0 %v276
  %3604 = vmatpush.msra.mxu0 %v275
  %3605 = vmatpush.msra.mxu0 %v274
  %3606 = vmatpush.msra.mxu0 %v273
  %3607 = vmatpush.msra.mxu0 %v272
  %3608 = vmatpush.msra.mxu0 %v271
  %3609 = vmatpush.msra.mxu0 %v270
  %3610 = vmatpush.msra.mxu0 %v269
  %3611 = vmatpush.msra.mxu0 %v268
  %3612 = vmatpush.msra.mxu0 %v267
  %3613 = vmatpush.msra.mxu0 %v266
  %3614 = vmatpush.msra.mxu0 %v265
  %3615 = vmatmul.f32.gmra.mxu0 %v3591
  %v3616 = vpop.f32.mrf.mxu0
  %v3617 = vadd.f32 %v278, %v3616
  %3618 = vmatmul.f32.gmra.mxu0 %v3594
  %v3619 = vpop.f32.mrf.mxu0
  %v3620 = vadd.f32 %v278, %v3619
  %3621 = vmatmul.f32.gmra.mxu0 %v3597
  %v3622 = vpop.f32.mrf.mxu0
  %v3623 = vadd.f32 %v278, %v3622
  %3624 = vdwg.mxu0
  %v3625 = vmax.f32 %v3617, 0.0
  %v3626 = vmax.f32 %v3620, 0.0
  %v3627 = vmax.f32 %v3623, 0.0
  %v3628 = vrot.slane %v3625, 6
  %v3629 = vrot.slane %v3626, 6
  %v3630 = vrot.slane %v3627, 6
  %v3631 = vsel %vm231, %v3629, %v3630
  %v3632 = vsel %vm231, %v3628, %v3629
  %v3633 = vsel %vm231, %v3630, %v3628
  %v3634 = vmul.f32 %v3633, %v237
  %v3635 = vmul.f32 %v3632, %v241
  %v3636 = vmul.f32 %v3631, %v245
  %3640 = vrot.lane.b32.xlu0 %v3625, 40
  %v3641 = vpop.permute.xlu0 %3640
  %3642 = vrot.lane.b32.xlu0 %v3626, 40
  %v3643 = vpop.permute.xlu0 %3642
  %3644 = vrot.lane.b32.xlu0 %v3627, 40
  %v3645 = vpop.permute.xlu0 %3644
  %v3649 = vsel %vm77, %v3634, %v3641
  %v3650 = vsel %vm77, %v3635, %v3643
  %v3651 = vsel %vm77, %v3636, %v3645
  %v3653 = vsel %vm93, %v3649, 0
  %v3656 = vsel %vm93, %v3650, 0
  %v3659 = vsel %vm93, %v3651, 0
  %3661 = vmatpush.msra.mxu0 0.0
  %3662 = vmatpush.msra.mxu0 0.0
  %3663 = vmatpush.msra.mxu0 0.0
  %3664 = vmatpush.msra.mxu0 0.0
  %3665 = vmatpush.msra.mxu0 0.0
  %3666 = vmatpush.msra.mxu0 0.0
  %3667 = vmatpush.msra.mxu0 %v350
  %3668 = vmatpush.msra.mxu0 %v349
  %3669 = vmatpush.msra.mxu0 %v348
  %3670 = vmatpush.msra.mxu0 %v347
  %3671 = vmatpush.msra.mxu0 %v346
  %3672 = vmatpush.msra.mxu0 %v345
  %3673 = vmatpush.msra.mxu0 %v344
  %3674 = vmatpush.msra.mxu0 %v343
  %3675 = vmatpush.msra.mxu0 %v342
  %3676 = vmatpush.msra.mxu0 %v341
  %3677 = vmatmul.f32.gmra.mxu0 %v3653
  %v3678 = vpop.f32.mrf.mxu0
  %v3679 = vadd.f32 %v352, %v3678
  %3680 = vmatmul.f32.gmra.mxu0 %v3656
  %v3681 = vpop.f32.mrf.mxu0
  %v3682 = vadd.f32 %v352, %v3681
  %3683 = vmatmul.f32.gmra.mxu0 %v3659
  %v3684 = vpop.f32.mrf.mxu0
  %v3685 = vadd.f32 %v352, %v3684
  %3686 = vdwg.mxu0
  %v3687 = vmax.f32 %v3679, 0.0
  %v3688 = vmax.f32 %v3682, 0.0
  %v3689 = vmax.f32 %v3685, 0.0
  %3693 = vrot.lane.b32.xlu0 %v3617, 88
  %v3694 = vpop.permute.xlu0 %3693
  %3695 = vrot.lane.b32.xlu0 %v3620, 88
  %v3696 = vpop.permute.xlu0 %3695
  %3697 = vrot.lane.b32.xlu0 %v3623, 88
  %v3698 = vpop.permute.xlu0 %3697
  %v3702 = vadd.f32 %v3687, %v3694
  %v3703 = vadd.f32 %v3688, %v3696
  %v3704 = vadd.f32 %v3689, %v3698
  %v3705 = vmax.f32 %v3702, 0.0
  %v3706 = vmax.f32 %v3703, 0.0
  %v3707 = vmax.f32 %v3704, 0.0
  %v3708 = vmul.f32 %v3705, %v32
  %v3709 = vmul.f32 %v3706, %v33
  %v3710 = vmul.f32 %v3707, %v34
  %v3711 = vadd.f32 %v29, %v3708
  %v3712 = vadd.f32 %v30, %v3709
  %v3713 = vadd.f32 %v31, %v3710
  %s3714 = scalar_lea.vmem %s5, 264
  %v3715 = vld [vmem:[%s3714] sm:$0xff]
  %v3716 = vld [vmem:[%s3714 + $0x8] sm:$0xff]
  %v3717 = vld [vmem:[%s3714 + $0x10] sm:$0xff]
  %vm3718 = vcmp.gt.f32.partialorder %v3715, 0.5
  %vm3719 = vcmp.gt.f32.partialorder %v3716, 0.5
  %vm3720 = vcmp.gt.f32.partialorder %v3717, 0.5
  %v3721 = vsel %vm3718, %v3711, %v3421
  %v3722 = vsel %vm3719, %v3712, %v3422
  %v3723 = vsel %vm3720, %v3713, %v3423
  %3724 = vst.msk [vmem:[%s6] sm:$0xff] %vm77, %v3721
  %3725 = vst.msk [vmem:[%s6 + $0x8] sm:$0xff] %vm77, %v3722
  %3726 = vst.msk [vmem:[%s6 + $0x10] sm:$0xff] %vm77, %v3723
  // Predicated region
  $region26: #{forward.2} parent=0 // pred_check
    _
  $region27: #{forward.2} parent=0 // pred_check_branch
    %3728 = sbr.rel (0) target = $region29
  $region28: #{forward.2} parent=0 // pred_region
    _
  $region29: #{forward.2} parent=0 // pred_fallthru
    _
  // Predicated region
  $region30: #{forward.2} parent=0 // pred_check
    _
  $region31: #{forward.2} parent=0 // pred_check_branch
    %3730 = sbr.rel (0) target = $region33
  $region32: #{forward.2} parent=0 // pred_region
    _
  $region33: #{forward.2} parent=0 // pred_fallthru
    _

</llo_original>
